<compile_context>
chip_gen: v7x
topology: tpu7x:2x2x1
jax: 0.10.0
libtpu: 0.0.40
codegen_flags: <defaults>
</compile_context>

<pallas_src>
import functools

import jax
import jax.numpy as jnp
import numpy as np
from jax.experimental import pallas as pl
from jax.experimental.pallas import tpu as pltpu


def _attention_kernel(xq_ref, xk_ref, xv_ref, wq_ref, wk_ref, wv_ref,
                      wp_ref, bp_ref, out_ref, attn_ref, *, num_heads, scale):
    B, Nq, C = xq_ref.shape          # block == full array
    Nk = xk_ref.shape[1]
    H = num_heads
    hd = C // H

    # ---- Projections: batch-flattened so each MXU call sees M = B*N. -------------
    # Weights arrive pre-transposed (C_in, C_out) and already bf16.
    xq = xq_ref[...].reshape(B * Nq, C).astype(jnp.bfloat16)
    xk = xk_ref[...].reshape(B * Nk, C).astype(jnp.bfloat16)
    xv = xv_ref[...].reshape(B * Nk, C).astype(jnp.bfloat16)

    # Fold the softmax scale into q (f32) right after the projection: identical to
    # (q @ k^T) * scale, so attn_save semantics are unchanged.
    q = jnp.dot(xq, wq_ref[...], preferred_element_type=jnp.float32) * scale
    k = jnp.dot(xk, wk_ref[...], preferred_element_type=jnp.float32)
    v = jnp.dot(xv, wv_ref[...], preferred_element_type=jnp.float32)

    # ---- Attention per batch element (B is tiny & static -> unrolled). -----------
    xo_rows = []
    for b in range(B):
        qb = q[b * Nq:(b + 1) * Nq]          # (Nq, C) f32
        kb = k[b * Nk:(b + 1) * Nk]          # (Nk, C) f32
        vb = v[b * Nk:(b + 1) * Nk]          # (Nk, C) f32

        # Head split: (N, C) -> (H, N, hd), leading-batch layout for batched dots.
        qh = qb.reshape(Nq, H, hd).transpose(1, 0, 2)
        kh = kb.reshape(Nk, H, hd).transpose(1, 0, 2)
        vh = vb.reshape(Nk, H, hd).transpose(1, 0, 2)

        # Scaled dot-product scores (scale already in q): (H, Nq, Nk), f32 accum.
        scores = jnp.einsum('hqd,hkd->hqk',
                            qh.astype(jnp.bfloat16), kh.astype(jnp.bfloat16),
                            preferred_element_type=jnp.float32)

        # attn_save.sum(dim=1) / num_heads  (pre-softmax scores, head-averaged).
        attn_ref[b] = (jnp.sum(scores, axis=0) * (1.0 / H)).astype(attn_ref.dtype)

        # Numerically stable softmax over keys (all f32 elementwise); reciprocal on
        # the EUP slot, normalize with a VPU multiply.
        scores = scores - jnp.max(scores, axis=-1, keepdims=True)
        p = jnp.exp(scores)
        p = p * pl.reciprocal(jnp.sum(p, axis=-1, keepdims=True), approx=True)

        # Attention-weighted values: (H, Nq, hd) -> merge heads -> (Nq, C).
        xo_b = jnp.einsum('hqk,hkd->hqd',
                          p.astype(jnp.bfloat16), vh.astype(jnp.bfloat16),
                          preferred_element_type=jnp.float32)
        xo_rows.append(xo_b.transpose(1, 0, 2).reshape(Nq, C))

    # ---- Output projection on the flattened batch (M = B*Nq) + bias. -------------
    xo = jnp.concatenate(xo_rows, axis=0)                       # (B*Nq, C) f32
    out = jnp.dot(xo.astype(jnp.bfloat16), wp_ref[...],
                  preferred_element_type=jnp.float32) + bp_ref[0]
    out_ref[...] = out.reshape(B, Nq, C).astype(out_ref.dtype)


def attention_pallas(xq, xk, xv, params, num_heads):
    B, Nq, C = xq.shape
    Nk = xk.shape[1]
    Nv = xv.shape[1]
    assert Nv == Nk, "kernel assumes Nv == Nk (attn @ v requires matching key/value length)"
    assert C % num_heads == 0
    scale = float((C // num_heads) ** (-0.5))

    # Pre-transpose weights once at trace time: torch (C_out, C_in) -> (C_in, C_out),
    # and store them bf16 (MXU operands); bias stays f32 (added post-accumulation).
    wq_t = params["wq"].T.astype(jnp.bfloat16)
    wk_t = params["wk"].T.astype(jnp.bfloat16)
    wv_t = params["wv"].T.astype(jnp.bfloat16)
    wp_t = params["wp"].T.astype(jnp.bfloat16)

    kernel = functools.partial(_attention_kernel, num_heads=num_heads, scale=scale)

    out, attn_avg = pl.pallas_call(
        kernel,
        out_shape=(jax.ShapeDtypeStruct((B, Nq, C), xq.dtype),
                   jax.ShapeDtypeStruct((B, Nq, Nk), jnp.float32)),
        grid_spec=pltpu.PrefetchScalarGridSpec(
            num_scalar_prefetch=0,
            grid=(1,),                                    # whole batch in one step
            in_specs=[
                pl.BlockSpec((B, Nq, C), lambda i: (0, 0, 0)),
                pl.BlockSpec((B, Nk, C), lambda i: (0, 0, 0)),
                pl.BlockSpec((B, Nk, C), lambda i: (0, 0, 0)),
                pl.BlockSpec((C, C), lambda i: (0, 0)),   # Wq^T (bf16)
                pl.BlockSpec((C, C), lambda i: (0, 0)),   # Wk^T (bf16)
                pl.BlockSpec((C, C), lambda i: (0, 0)),   # Wv^T (bf16)
                pl.BlockSpec((C, C), lambda i: (0, 0)),   # Wproj^T (bf16)
                pl.BlockSpec((1, C), lambda i: (0, 0)),   # bproj (f32)
            ],
            out_specs=[
                pl.BlockSpec((B, Nq, C), lambda i: (0, 0, 0)),
                pl.BlockSpec((B, Nq, Nk), lambda i: (0, 0, 0)),
            ],
        ),
        compiler_params=pltpu.CompilerParams(
            dimension_semantics=("arbitrary",)),
    )(xq, xk, xv, wq_t, wk_t, wv_t, wp_t, params["bp"])

    # torch: x.transpose(0, 1) -> (Nq, B, C). Tiny layout op kept wrapper-side so the
    # kernel's output block stays blocked / lane-aligned.
    return jnp.transpose(out, (1, 0, 2)), attn_avg


def attention_reference(xq, xk, xv, params, num_heads):
    """Pure-JAX f32 reference mirroring the torch forward exactly."""
    B, Nq, C = xq.shape
    Nk = xk.shape[1]
    hd = C // num_heads
    scale = hd ** (-0.5)

    def proj(x, w):
        return jnp.einsum('bnc,oc->bno', x, w)

    q = proj(xq, params["wq"]).reshape(B, Nq, num_heads, hd).transpose(0, 2, 1, 3)
    k = proj(xk, params["wk"]).reshape(B, Nk, num_heads, hd).transpose(0, 2, 1, 3)
    v = proj(xv, params["wv"]).reshape(B, Nk, num_heads, hd).transpose(0, 2, 1, 3)

    attn = jnp.einsum('bhqd,bhkd->bhqk', q, k) * scale
    attn_save = attn
    attn = jax.nn.softmax(attn, axis=-1)
    x = jnp.einsum('bhqk,bhkd->bhqd', attn, v).transpose(0, 2, 1, 3).reshape(B, Nq, C)
    x = jnp.einsum('bnc,oc->bno', x, params["wp"]) + params["bp"][0]
    return jnp.transpose(x, (1, 0, 2)), attn_save.sum(axis=1) / num_heads


def init_params(key, dim):
    """Deterministic synthetic parameters (shapes from Attention.__init__)."""
    ks = jax.random.split(key, 5)
    s = 0.02
    return {
        "wq": (jax.random.normal(ks[0], (dim, dim), jnp.float32) * s),
        "wk": (jax.random.normal(ks[1], (dim, dim), jnp.float32) * s),
        "wv": (jax.random.normal(ks[2], (dim, dim), jnp.float32) * s),
        "wp": (jax.random.normal(ks[3], (dim, dim), jnp.float32) * s),
        "bp": (jax.random.normal(ks[4], (1, dim), jnp.float32) * s),
    }


if __name__ == "__main__":
    B, Nq, Nk, C, H = 2, 8, 16, 64, 8   # head_dim = 8

    key = jax.random.PRNGKey(0)
    kq, kk, kv, kp = jax.random.split(key, 4)
    xq = jax.random.normal(kq, (B, Nq, C), jnp.float32)
    xk = jax.random.normal(kk, (B, Nk, C), jnp.float32)
    xv = jax.random.normal(kv, (B, Nk, C), jnp.float32)
    params = init_params(kp, C)

    out, attn_avg = attention_pallas(xq, xk, xv, params, num_heads=H)
    jax.block_until_ready((out, attn_avg))

    ref_out, ref_attn = attention_reference(xq, xk, xv, params, num_heads=H)
    # Tolerances loosened vs. the f32 reference: MXU operands are bf16 and the softmax
    # denominator uses the approximate EUP reciprocal.
    np.testing.assert_allclose(np.asarray(out), np.asarray(ref_out), rtol=2e-2, atol=2e-2)
    np.testing.assert_allclose(np.asarray(attn_avg), np.asarray(ref_attn), rtol=2e-2, atol=2e-2)

    assert out.shape == (Nq, B, C) and attn_avg.shape == (B, Nq, Nk)
    print("KERNEL_OK")
</pallas_src>

<mosaic_0001>
module attributes {stable_mosaic.version = 11 : i64} {
  func.func @_attention_kernel(%arg0: i32, %arg1: memref<2x8x64xf32, #tpu.memory_space<vmem>>, %arg2: memref<2x16x64xf32, #tpu.memory_space<vmem>>, %arg3: memref<2x16x64xf32, #tpu.memory_space<vmem>>, %arg4: memref<64x64xbf16, #tpu.memory_space<vmem>>, %arg5: memref<64x64xbf16, #tpu.memory_space<vmem>>, %arg6: memref<64x64xbf16, #tpu.memory_space<vmem>>, %arg7: memref<64x64xbf16, #tpu.memory_space<vmem>>, %arg8: memref<1x64xf32, #tpu.memory_space<vmem>>, %arg9: memref<2x8x64xf32, #tpu.memory_space<vmem>>, %arg10: memref<2x8x16xf32, #tpu.memory_space<vmem>>) attributes {dimension_semantics = [#tpu.dimension_semantics<arbitrary>], iteration_bounds = array<i64: 1>, scalar_prefetch = 0 : i64, scratch_operands = 0 : i64, tpu.core_type = #tpu.core_type<tc>, window_params = [{pipeline_mode = #tpu.pipeline_mode<synchronous>, transform_indices = @transform_0, window_bounds = array<i64: 2, 8, 64>}, {pipeline_mode = #tpu.pipeline_mode<synchronous>, transform_indices = @transform_1, window_bounds = array<i64: 2, 16, 64>}, {pipeline_mode = #tpu.pipeline_mode<synchronous>, transform_indices = @transform_2, window_bounds = array<i64: 2, 16, 64>}, {pipeline_mode = #tpu.pipeline_mode<synchronous>, transform_indices = @transform_3, window_bounds = array<i64: 64, 64>}, {pipeline_mode = #tpu.pipeline_mode<synchronous>, transform_indices = @transform_4, window_bounds = array<i64: 64, 64>}, {pipeline_mode = #tpu.pipeline_mode<synchronous>, transform_indices = @transform_5, window_bounds = array<i64: 64, 64>}, {pipeline_mode = #tpu.pipeline_mode<synchronous>, transform_indices = @transform_6, window_bounds = array<i64: 64, 64>}, {pipeline_mode = #tpu.pipeline_mode<synchronous>, transform_indices = @transform_7, window_bounds = array<i64: 1, 64>}, {pipeline_mode = #tpu.pipeline_mode<synchronous>, transform_indices = @transform_8, window_bounds = array<i64: 2, 8, 64>}, {pipeline_mode = #tpu.pipeline_mode<synchronous>, transform_indices = @transform_9, window_bounds = array<i64: 2, 8, 16>}]} {
    %c0 = arith.constant 0 : index
    %c0_0 = arith.constant 0 : index
    %c0_1 = arith.constant 0 : index
    %0 = vector.load %arg1[%c0, %c0_0, %c0_1] : memref<2x8x64xf32, #tpu.memory_space<vmem>>, vector<2x8x64xf32>
    %1 = vector.shape_cast %0 : vector<2x8x64xf32> to vector<16x64xf32>
    %2 = arith.truncf %1 : vector<16x64xf32> to vector<16x64xbf16>
    %c0_2 = arith.constant 0 : index
    %c0_3 = arith.constant 0 : index
    %c0_4 = arith.constant 0 : index
    %3 = vector.load %arg2[%c0_2, %c0_3, %c0_4] : memref<2x16x64xf32, #tpu.memory_space<vmem>>, vector<2x16x64xf32>
    %4 = vector.shape_cast %3 : vector<2x16x64xf32> to vector<32x64xf32>
    %5 = arith.truncf %4 : vector<32x64xf32> to vector<32x64xbf16>
    %c0_5 = arith.constant 0 : index
    %c0_6 = arith.constant 0 : index
    %c0_7 = arith.constant 0 : index
    %6 = vector.load %arg3[%c0_5, %c0_6, %c0_7] : memref<2x16x64xf32, #tpu.memory_space<vmem>>, vector<2x16x64xf32>
    %7 = vector.shape_cast %6 : vector<2x16x64xf32> to vector<32x64xf32>
    %8 = arith.truncf %7 : vector<32x64xf32> to vector<32x64xbf16>
    %c0_8 = arith.constant 0 : index
    %c0_9 = arith.constant 0 : index
    %9 = vector.load %arg4[%c0_8, %c0_9] : memref<64x64xbf16, #tpu.memory_space<vmem>>, vector<64x64xbf16>
    %cst = arith.constant dense<0.000000e+00> : vector<16x64xf32>
    %10 = tpu.matmul %2, %9, %cst {dimension_numbers = #tpu.dot_dimension_numbers<[1], [0], [0], [1], [0, 0, 1, 1], [], []>} : vector<16x64xbf16>, vector<64x64xbf16>, vector<16x64xf32> -> vector<16x64xf32>
    %cst_10 = arith.constant 0.353553385 : f32
    %11 = vector.broadcast %cst_10 : f32 to vector<16x64xf32>
    %12 = arith.mulf %10, %11 : vector<16x64xf32>
    %c0_11 = arith.constant 0 : index
    %c0_12 = arith.constant 0 : index
    %13 = vector.load %arg5[%c0_11, %c0_12] : memref<64x64xbf16, #tpu.memory_space<vmem>>, vector<64x64xbf16>
    %cst_13 = arith.constant dense<0.000000e+00> : vector<32x64xf32>
    %14 = tpu.matmul %5, %13, %cst_13 {dimension_numbers = #tpu.dot_dimension_numbers<[1], [0], [0], [1], [0, 0, 1, 1], [], []>} : vector<32x64xbf16>, vector<64x64xbf16>, vector<32x64xf32> -> vector<32x64xf32>
    %c0_14 = arith.constant 0 : index
    %c0_15 = arith.constant 0 : index
    %15 = vector.load %arg6[%c0_14, %c0_15] : memref<64x64xbf16, #tpu.memory_space<vmem>>, vector<64x64xbf16>
    %cst_16 = arith.constant dense<0.000000e+00> : vector<32x64xf32>
    %16 = tpu.matmul %8, %15, %cst_16 {dimension_numbers = #tpu.dot_dimension_numbers<[1], [0], [0], [1], [0, 0, 1, 1], [], []>} : vector<32x64xbf16>, vector<64x64xbf16>, vector<32x64xf32> -> vector<32x64xf32>
    %17 = vector.extract_strided_slice %12 {offsets = [0, 0], sizes = [8, 64], strides = [1, 1]} : vector<16x64xf32> to vector<8x64xf32>
    %18 = vector.extract_strided_slice %14 {offsets = [0, 0], sizes = [16, 64], strides = [1, 1]} : vector<32x64xf32> to vector<16x64xf32>
    %19 = vector.extract_strided_slice %16 {offsets = [0, 0], sizes = [16, 64], strides = [1, 1]} : vector<32x64xf32> to vector<16x64xf32>
    %20 = vector.shape_cast %17 : vector<8x64xf32> to vector<8x8x8xf32>
    %21 = tpu.transpose %20, [1, 0, 2] : vector<8x8x8xf32> -> vector<8x8x8xf32>
    %22 = vector.shape_cast %18 : vector<16x64xf32> to vector<16x8x8xf32>
    %23 = tpu.transpose %22, [1, 0, 2] : vector<16x8x8xf32> -> vector<8x16x8xf32>
    %24 = vector.shape_cast %19 : vector<16x64xf32> to vector<16x8x8xf32>
    %25 = tpu.transpose %24, [1, 0, 2] : vector<16x8x8xf32> -> vector<8x16x8xf32>
    %26 = arith.truncf %21 : vector<8x8x8xf32> to vector<8x8x8xbf16>
    %27 = arith.truncf %23 : vector<8x16x8xf32> to vector<8x16x8xbf16>
    "tpu.trace_start"() <{level = 10 : i32, message = "hqd,hkd->hqk"}> : () -> ()
    %cst_17 = arith.constant dense<0.000000e+00> : vector<8x8x16xf32>
    %28 = tpu.matmul %26, %27, %cst_17 {dimension_numbers = #tpu.dot_dimension_numbers<[2], [2], [1], [1], [0, 0, 0, 1, 1, 1], [0], [0]>} : vector<8x8x8xbf16>, vector<8x16x8xbf16>, vector<8x8x16xf32> -> vector<8x8x16xf32>
    "tpu.trace_stop"() : () -> ()
    %cst_18 = arith.constant dense<0.000000e+00> : vector<8x16xf32>
    %29 = vector.multi_reduction <add>, %28, %cst_18 [0] : vector<8x8x16xf32> to vector<8x16xf32>
    %cst_19 = arith.constant 1.250000e-01 : f32
    %30 = vector.broadcast %cst_19 : f32 to vector<8x16xf32>
    %31 = arith.mulf %29, %30 : vector<8x16xf32>
    %c0_20 = arith.constant 0 : index
    %c0_21 = arith.constant 0 : index
    %c0_22 = arith.constant 0 : index
    %32 = vector.load %arg10[%c0_20, %c0_21, %c0_22] : memref<2x8x16xf32, #tpu.memory_space<vmem>>, vector<1x8x16xf32>
    %33 = vector.shape_cast %32 : vector<1x8x16xf32> to vector<8x16xf32>
    %34 = vector.shape_cast %31 : vector<8x16xf32> to vector<1x8x16xf32>
    tpu.vector_store %arg10[%c0_20, %c0_21, %c0_22], %34 {strides = array<i32>} : memref<2x8x16xf32, #tpu.memory_space<vmem>>, vector<1x8x16xf32>,
    %cst_23 = arith.constant dense<0xFF800000> : vector<8x8xf32>
    %35 = vector.multi_reduction <maximumf>, %28, %cst_23 [2] : vector<8x8x16xf32> to vector<8x8xf32>
    %36 = vector.shape_cast %35 : vector<8x8xf32> to vector<8x8x1xf32>
    %37 = vector.broadcast %36 : vector<8x8x1xf32> to vector<8x8x16xf32>
    %38 = arith.subf %28, %37 : vector<8x8x16xf32>
    %39 = math.exp %38 : vector<8x8x16xf32>
    %cst_24 = arith.constant dense<0.000000e+00> : vector<8x8xf32>
    %40 = vector.multi_reduction <add>, %39, %cst_24 [2] : vector<8x8x16xf32> to vector<8x8xf32>
    %41 = vector.shape_cast %40 : vector<8x8xf32> to vector<8x8x1xf32>
    %42 = tpu.reciprocal %41 {approx = true} : vector<8x8x1xf32> -> vector<8x8x1xf32>
    %43 = vector.broadcast %42 : vector<8x8x1xf32> to vector<8x8x16xf32>
    %44 = arith.mulf %39, %43 : vector<8x8x16xf32>
    %45 = arith.truncf %44 : vector<8x8x16xf32> to vector<8x8x16xbf16>
    %46 = arith.truncf %25 : vector<8x16x8xf32> to vector<8x16x8xbf16>
    "tpu.trace_start"() <{level = 10 : i32, message = "hqk,hkd->hqd"}> : () -> ()
    %cst_25 = arith.constant dense<0.000000e+00> : vector<8x8x8xf32>
    %47 = tpu.matmul %45, %46, %cst_25 {dimension_numbers = #tpu.dot_dimension_numbers<[2], [1], [1], [2], [0, 0, 0, 1, 1, 2], [0], [0]>} : vector<8x8x16xbf16>, vector<8x16x8xbf16>, vector<8x8x8xf32> -> vector<8x8x8xf32>
    "tpu.trace_stop"() : () -> ()
    %48 = tpu.transpose %47, [1, 0, 2] : vector<8x8x8xf32> -> vector<8x8x8xf32>
    %49 = vector.shape_cast %48 : vector<8x8x8xf32> to vector<8x64xf32>
    %50 = vector.extract_strided_slice %12 {offsets = [8, 0], sizes = [8, 64], strides = [1, 1]} : vector<16x64xf32> to vector<8x64xf32>
    %51 = vector.extract_strided_slice %14 {offsets = [16, 0], sizes = [16, 64], strides = [1, 1]} : vector<32x64xf32> to vector<16x64xf32>
    %52 = vector.extract_strided_slice %16 {offsets = [16, 0], sizes = [16, 64], strides = [1, 1]} : vector<32x64xf32> to vector<16x64xf32>
    %53 = vector.shape_cast %50 : vector<8x64xf32> to vector<8x8x8xf32>
    %54 = tpu.transpose %53, [1, 0, 2] : vector<8x8x8xf32> -> vector<8x8x8xf32>
    %55 = vector.shape_cast %51 : vector<16x64xf32> to vector<16x8x8xf32>
    %56 = tpu.transpose %55, [1, 0, 2] : vector<16x8x8xf32> -> vector<8x16x8xf32>
    %57 = vector.shape_cast %52 : vector<16x64xf32> to vector<16x8x8xf32>
    %58 = tpu.transpose %57, [1, 0, 2] : vector<16x8x8xf32> -> vector<8x16x8xf32>
    %59 = arith.truncf %54 : vector<8x8x8xf32> to vector<8x8x8xbf16>
    %60 = arith.truncf %56 : vector<8x16x8xf32> to vector<8x16x8xbf16>
    "tpu.trace_start"() <{level = 10 : i32, message = "hqd,hkd->hqk"}> : () -> ()
    %cst_26 = arith.constant dense<0.000000e+00> : vector<8x8x16xf32>
    %61 = tpu.matmul %59, %60, %cst_26 {dimension_numbers = #tpu.dot_dimension_numbers<[2], [2], [1], [1], [0, 0, 0, 1, 1, 1], [0], [0]>} : vector<8x8x8xbf16>, vector<8x16x8xbf16>, vector<8x8x16xf32> -> vector<8x8x16xf32>
    "tpu.trace_stop"() : () -> ()
    %cst_27 = arith.constant dense<0.000000e+00> : vector<8x16xf32>
    %62 = vector.multi_reduction <add>, %61, %cst_27 [0] : vector<8x8x16xf32> to vector<8x16xf32>
    %cst_28 = arith.constant 1.250000e-01 : f32
    %63 = vector.broadcast %cst_28 : f32 to vector<8x16xf32>
    %64 = arith.mulf %62, %63 : vector<8x16xf32>
    %c1 = arith.constant 1 : index
    %c0_29 = arith.constant 0 : index
    %c0_30 = arith.constant 0 : index
    %65 = vector.load %arg10[%c1, %c0_29, %c0_30] : memref<2x8x16xf32, #tpu.memory_space<vmem>>, vector<1x8x16xf32>
    %66 = vector.shape_cast %65 : vector<1x8x16xf32> to vector<8x16xf32>
    %67 = vector.shape_cast %64 : vector<8x16xf32> to vector<1x8x16xf32>
    tpu.vector_store %arg10[%c1, %c0_29, %c0_30], %67 {strides = array<i32>} : memref<2x8x16xf32, #tpu.memory_space<vmem>>, vector<1x8x16xf32>,
    %cst_31 = arith.constant dense<0xFF800000> : vector<8x8xf32>
    %68 = vector.multi_reduction <maximumf>, %61, %cst_31 [2] : vector<8x8x16xf32> to vector<8x8xf32>
    %69 = vector.shape_cast %68 : vector<8x8xf32> to vector<8x8x1xf32>
    %70 = vector.broadcast %69 : vector<8x8x1xf32> to vector<8x8x16xf32>
    %71 = arith.subf %61, %70 : vector<8x8x16xf32>
    %72 = math.exp %71 : vector<8x8x16xf32>
    %cst_32 = arith.constant dense<0.000000e+00> : vector<8x8xf32>
    %73 = vector.multi_reduction <add>, %72, %cst_32 [2] : vector<8x8x16xf32> to vector<8x8xf32>
    %74 = vector.shape_cast %73 : vector<8x8xf32> to vector<8x8x1xf32>
    %75 = tpu.reciprocal %74 {approx = true} : vector<8x8x1xf32> -> vector<8x8x1xf32>
    %76 = vector.broadcast %75 : vector<8x8x1xf32> to vector<8x8x16xf32>
    %77 = arith.mulf %72, %76 : vector<8x8x16xf32>
    %78 = arith.truncf %77 : vector<8x8x16xf32> to vector<8x8x16xbf16>
    %79 = arith.truncf %58 : vector<8x16x8xf32> to vector<8x16x8xbf16>
    "tpu.trace_start"() <{level = 10 : i32, message = "hqk,hkd->hqd"}> : () -> ()
    %cst_33 = arith.constant dense<0.000000e+00> : vector<8x8x8xf32>
    %80 = tpu.matmul %78, %79, %cst_33 {dimension_numbers = #tpu.dot_dimension_numbers<[2], [1], [1], [2], [0, 0, 0, 1, 1, 2], [0], [0]>} : vector<8x8x16xbf16>, vector<8x16x8xbf16>, vector<8x8x8xf32> -> vector<8x8x8xf32>
    "tpu.trace_stop"() : () -> ()
    %81 = tpu.transpose %80, [1, 0, 2] : vector<8x8x8xf32> -> vector<8x8x8xf32>
    %82 = vector.shape_cast %81 : vector<8x8x8xf32> to vector<8x64xf32>
    %83 = tpu.concatenate %49, %82 in 0 : vector<8x64xf32>, vector<8x64xf32> -> vector<16x64xf32>
    %84 = arith.truncf %83 : vector<16x64xf32> to vector<16x64xbf16>
    %c0_34 = arith.constant 0 : index
    %c0_35 = arith.constant 0 : index
    %85 = vector.load %arg7[%c0_34, %c0_35] : memref<64x64xbf16, #tpu.memory_space<vmem>>, vector<64x64xbf16>
    %cst_36 = arith.constant dense<0.000000e+00> : vector<16x64xf32>
    %86 = tpu.matmul %84, %85, %cst_36 {dimension_numbers = #tpu.dot_dimension_numbers<[1], [0], [0], [1], [0, 0, 1, 1], [], []>} : vector<16x64xbf16>, vector<64x64xbf16>, vector<16x64xf32> -> vector<16x64xf32>
    %c0_37 = arith.constant 0 : index
    %c0_38 = arith.constant 0 : index
    %87 = vector.load %arg8[%c0_37, %c0_38] : memref<1x64xf32, #tpu.memory_space<vmem>>, vector<1x64xf32>
    %88 = vector.shape_cast %87 : vector<1x64xf32> to vector<64xf32>
    %89 = vector.shape_cast %88 : vector<64xf32> to vector<1x64xf32>
    %90 = vector.broadcast %89 : vector<1x64xf32> to vector<16x64xf32>
    %91 = arith.addf %86, %90 : vector<16x64xf32>
    %92 = vector.shape_cast %91 : vector<16x64xf32> to vector<2x8x64xf32>
    %c0_39 = arith.constant 0 : index
    %c0_40 = arith.constant 0 : index
    %c0_41 = arith.constant 0 : index
    %93 = vector.load %arg9[%c0_39, %c0_40, %c0_41] : memref<2x8x64xf32, #tpu.memory_space<vmem>>, vector<2x8x64xf32>
    tpu.vector_store %arg9[%c0_39, %c0_40, %c0_41], %92 {strides = array<i32>} : memref<2x8x64xf32, #tpu.memory_space<vmem>>, vector<2x8x64xf32>,
    return
  }
  func.func @transform_0(%arg0: i32) -> (i32, i32, i32) {
    %c0_i32 = arith.constant 0 : i32
    %c0_i32_0 = arith.constant 0 : i32
    %c0_i32_1 = arith.constant 0 : i32
    %c0_i32_2 = arith.constant 0 : i32
    return %c0_i32, %c0_i32_0, %c0_i32_1 : i32, i32, i32
  }
  func.func @transform_1(%arg0: i32) -> (i32, i32, i32) {
    %c0_i32 = arith.constant 0 : i32
    %c0_i32_0 = arith.constant 0 : i32
    %c0_i32_1 = arith.constant 0 : i32
    %c0_i32_2 = arith.constant 0 : i32
    return %c0_i32, %c0_i32_0, %c0_i32_1 : i32, i32, i32
  }
  func.func @transform_2(%arg0: i32) -> (i32, i32, i32) {
    %c0_i32 = arith.constant 0 : i32
    %c0_i32_0 = arith.constant 0 : i32
    %c0_i32_1 = arith.constant 0 : i32
    %c0_i32_2 = arith.constant 0 : i32
    return %c0_i32, %c0_i32_0, %c0_i32_1 : i32, i32, i32
  }
  func.func @transform_3(%arg0: i32) -> (i32, i32) {
    %c0_i32 = arith.constant 0 : i32
    %c0_i32_0 = arith.constant 0 : i32
    %c0_i32_1 = arith.constant 0 : i32
    return %c0_i32, %c0_i32_0 : i32, i32
  }
  func.func @transform_4(%arg0: i32) -> (i32, i32) {
    %c0_i32 = arith.constant 0 : i32
    %c0_i32_0 = arith.constant 0 : i32
    %c0_i32_1 = arith.constant 0 : i32
    return %c0_i32, %c0_i32_0 : i32, i32
  }
  func.func @transform_5(%arg0: i32) -> (i32, i32) {
    %c0_i32 = arith.constant 0 : i32
    %c0_i32_0 = arith.constant 0 : i32
    %c0_i32_1 = arith.constant 0 : i32
    return %c0_i32, %c0_i32_0 : i32, i32
  }
  func.func @transform_6(%arg0: i32) -> (i32, i32) {
    %c0_i32 = arith.constant 0 : i32
    %c0_i32_0 = arith.constant 0 : i32
    %c0_i32_1 = arith.constant 0 : i32
    return %c0_i32, %c0_i32_0 : i32, i32
  }
  func.func @transform_7(%arg0: i32) -> (i32, i32) {
    %c0_i32 = arith.constant 0 : i32
    %c0_i32_0 = arith.constant 0 : i32
    %c0_i32_1 = arith.constant 0 : i32
    return %c0_i32, %c0_i32_0 : i32, i32
  }
  func.func @transform_8(%arg0: i32) -> (i32, i32, i32) {
    %c0_i32 = arith.constant 0 : i32
    %c0_i32_0 = arith.constant 0 : i32
    %c0_i32_1 = arith.constant 0 : i32
    %c0_i32_2 = arith.constant 0 : i32
    return %c0_i32, %c0_i32_0, %c0_i32_1 : i32, i32, i32
  }
  func.func @transform_9(%arg0: i32) -> (i32, i32, i32) {
    %c0_i32 = arith.constant 0 : i32
    %c0_i32_0 = arith.constant 0 : i32
    %c0_i32_1 = arith.constant 0 : i32
    %c0_i32_2 = arith.constant 0 : i32
    return %c0_i32, %c0_i32_0, %c0_i32_1 : i32, i32, i32
  }
}

</mosaic_0001>

<llo_original>
// kernel: tpu_custom_call.1
$region0: #{tpu_custom_call.1}
  #allocation0 [shape = 'u32[]', space=smem, size = 0x4, offset = 0x4, fixed_abs, tag = 'smem constant byte address 0x4 - core index']
  #allocation1 [shape = 'u32[144,128]{1,0:T(1,128)}', space=vmem, size = 0x12000, scoped, tag = 'internal scratch']
  %s0 = inlined_call_operand.hbm [shape: f32[2,8,64], index: 0, kind: input, shape index: {}]
  %s1 = inlined_call_operand.hbm [shape: f32[2,16,64], index: 1, kind: input, shape index: {}]
  %s2 = inlined_call_operand.hbm [shape: f32[2,16,64], index: 2, kind: input, shape index: {}]
  %s3 = inlined_call_operand.hbm [shape: bf16[64,64], index: 3, kind: input, shape index: {}]
  %s4 = inlined_call_operand.hbm [shape: bf16[64,64], index: 4, kind: input, shape index: {}]
  %s5 = inlined_call_operand.hbm [shape: bf16[64,64], index: 5, kind: input, shape index: {}]
  %s6 = inlined_call_operand.hbm [shape: bf16[64,64], index: 6, kind: input, shape index: {}]
  %s7 = inlined_call_operand.vmem [shape: f32[1,64], index: 7, kind: input, shape index: {}]
  %s8 = inlined_call_operand.hbm [shape: f32[2,8,64], index: 8, kind: output, shape index: {0}]
  %s9 = inlined_call_operand.hbm [shape: f32[2,8,16], index: 9, kind: output, shape index: {1}]
  %10 = xla_tuple %s8, %s9
  %s11 = sld [smem:[#allocation0]]
  $region78: #{tpu_custom_call.1} parent=0
    _
  %s13 = ssub.s32 1, %s11
  %s14 = scalar_select 0, %s13, %s11
  $region1: #{tpu_custom_call.1} parent=0
    #allocation2 [shape = 'u8[8192]{0}', space=vmem, size = 0x2000, scoped, tag = 'input window, operand 0, single buffered']
    #allocation3 [shape = 's32[1]{0}', space=sflag, size = 0x4, scoped, tag = 'scoped memory for tpu_custom_call.1']
    #allocation4 [shape = 's32[1]{0}', space=sflag, size = 0x4, scoped, tag = 'scoped memory for tpu_custom_call.1']
    #allocation5 [shape = 'u8[16384]{0}', space=vmem, size = 0x4000, scoped, tag = 'input window, operand 1, single buffered']
    #allocation6 [shape = 's32[1]{0}', space=sflag, size = 0x4, scoped, tag = 'scoped memory for tpu_custom_call.1']
    #allocation7 [shape = 'u8[16384]{0}', space=vmem, size = 0x4000, scoped, tag = 'input window, operand 2, single buffered']
    #allocation8 [shape = 'u8[16384]{0}', space=vmem, size = 0x4000, scoped, tag = 'input window, operand 3, single buffered']
    #allocation9 [shape = 's32[1]{0}', space=sflag, size = 0x4, scoped, tag = 'scoped memory for tpu_custom_call.1']
    #allocation10 [shape = 'u8[16384]{0}', space=vmem, size = 0x4000, scoped, tag = 'input window, operand 4, single buffered']
    #allocation11 [shape = 'u8[16384]{0}', space=vmem, size = 0x4000, scoped, tag = 'input window, operand 5, single buffered']
    #allocation12 [shape = 's32[1]{0}', space=sflag, size = 0x4, scoped, tag = 'scoped memory for tpu_custom_call.1']
    #allocation13 [shape = 'u8[16384]{0}', space=vmem, size = 0x4000, scoped, tag = 'input window, operand 6, single buffered']
    #allocation14 [shape = 'u8[8192]{0}', space=vmem, size = 0x2000, scoped, tag = 'output window, operand 0, single buffered']
    #allocation15 [shape = 'u8[8192]{0}', space=vmem, size = 0x2000, scoped, tag = 'output window, operand 1, single buffered']
    #allocation16 [shape = 's32[1]{0}', space=sflag, size = 0x4, scoped, tag = 'scoped memory for tpu_custom_call.1']
    %15 = vsyncpa [#allocation3], 0
    %16 = vsyncpa [#allocation6], 0
    %17 = vsyncpa [#allocation9], 0
    %18 = vsyncpa [#allocation12], 0
    %19 = vsyncpa [#allocation4], 0
    %20 = vsyncpa [#allocation16], 0
    // Predicated region
    $region2: #{tpu_custom_call.1} parent=1 // pred_check
      _
    $region3: #{tpu_custom_call.1} parent=1 // pred_check_branch
      %22 = sbr.rel (0) target = $region5
    $region4: #{tpu_custom_call.1} parent=1 // pred_region
      %s24 = ssub.s32 256, 256
      %25 = vsyncadd [#allocation3], %s24
      %s26 = sshll.u32 [#allocation2], 4
      %s27 = int_to_ptr.vmem [resolvable:$true] %s26
      %32 = dma.hbm_to_vmem [thread:$0]  %s0, 256, %s27, [#allocation3], 128, 128, 8
    $region5: #{tpu_custom_call.1} parent=1 // pred_fallthru
      _
    // Predicated region
    $region6: #{tpu_custom_call.1} parent=1 // pred_check
      _
    $region7: #{tpu_custom_call.1} parent=1 // pred_check_branch
      %34 = sbr.rel (0) target = $region9
    $region8: #{tpu_custom_call.1} parent=1 // pred_region
      %s36 = ssub.s32 512, 512
      %37 = vsyncadd [#allocation6], %s36
      %s38 = sshll.u32 [#allocation5], 4
      %s39 = int_to_ptr.vmem [resolvable:$true] %s38
      %44 = dma.hbm_to_vmem [thread:$0]  %s1, 512, %s39, [#allocation6], 128, 128, 8
    $region9: #{tpu_custom_call.1} parent=1 // pred_fallthru
      _
    // Predicated region
    $region10: #{tpu_custom_call.1} parent=1 // pred_check
      _
    $region11: #{tpu_custom_call.1} parent=1 // pred_check_branch
      %46 = sbr.rel (0) target = $region13
    $region12: #{tpu_custom_call.1} parent=1 // pred_region
      %s48 = ssub.s32 512, 512
      %49 = vsyncadd [#allocation6], %s48
      %s50 = sshll.u32 [#allocation7], 4
      %s51 = int_to_ptr.vmem [resolvable:$true] %s50
      %56 = dma.hbm_to_vmem [thread:$0]  %s2, 512, %s51, [#allocation6], 128, 128, 8
    $region13: #{tpu_custom_call.1} parent=1 // pred_fallthru
      _
    // Predicated region
    $region14: #{tpu_custom_call.1} parent=1 // pred_check
      _
    $region15: #{tpu_custom_call.1} parent=1 // pred_check_branch
      %58 = sbr.rel (0) target = $region17
    $region16: #{tpu_custom_call.1} parent=1 // pred_region
      %s60 = ssub.s32 512, 512
      %61 = vsyncadd [#allocation9], %s60
      %s62 = sshll.u32 [#allocation8], 4
      %s63 = int_to_ptr.vmem [resolvable:$true] %s62
      %68 = dma.hbm_to_vmem [thread:$0]  %s3, 512, %s63, [#allocation9], 64, 64, 4
    $region17: #{tpu_custom_call.1} parent=1 // pred_fallthru
      _
    // Predicated region
    $region18: #{tpu_custom_call.1} parent=1 // pred_check
      _
    $region19: #{tpu_custom_call.1} parent=1 // pred_check_branch
      %70 = sbr.rel (0) target = $region21
    $region20: #{tpu_custom_call.1} parent=1 // pred_region
      %s72 = ssub.s32 512, 512
      %73 = vsyncadd [#allocation9], %s72
      %s74 = sshll.u32 [#allocation10], 4
      %s75 = int_to_ptr.vmem [resolvable:$true] %s74
      %80 = dma.hbm_to_vmem [thread:$0]  %s4, 512, %s75, [#allocation9], 64, 64, 4
    $region21: #{tpu_custom_call.1} parent=1 // pred_fallthru
      _
    // Predicated region
    $region22: #{tpu_custom_call.1} parent=1 // pred_check
      _
    $region23: #{tpu_custom_call.1} parent=1 // pred_check_branch
      %82 = sbr.rel (0) target = $region25
    $region24: #{tpu_custom_call.1} parent=1 // pred_region
      %s84 = ssub.s32 512, 512
      %85 = vsyncadd [#allocation12], %s84
      %s86 = sshll.u32 [#allocation11], 4
      %s87 = int_to_ptr.vmem [resolvable:$true] %s86
      %92 = dma.hbm_to_vmem [thread:$0]  %s5, 512, %s87, [#allocation12], 64, 64, 4
    $region25: #{tpu_custom_call.1} parent=1 // pred_fallthru
      _
    // Predicated region
    $region26: #{tpu_custom_call.1} parent=1 // pred_check
      _
    $region27: #{tpu_custom_call.1} parent=1 // pred_check_branch
      %94 = sbr.rel (0) target = $region29
    $region28: #{tpu_custom_call.1} parent=1 // pred_region
      %s96 = ssub.s32 512, 512
      %97 = vsyncadd [#allocation12], %s96
      %s98 = sshll.u32 [#allocation13], 4
      %s99 = int_to_ptr.vmem [resolvable:$true] %s98
      %104 = dma.hbm_to_vmem [thread:$0]  %s6, 512, %s99, [#allocation12], 64, 64, 4
    $region29: #{tpu_custom_call.1} parent=1 // pred_fallthru
      _
    // Predicated region
    $region30: #{tpu_custom_call.1} parent=1 // pred_check
      _
    $region31: #{tpu_custom_call.1} parent=1 // pred_check_branch
      %106 = sbr.rel (0) target = $region33
    $region32: #{tpu_custom_call.1} parent=1 // pred_region
      _
    $region33: #{tpu_custom_call.1} parent=1 // pred_fallthru
      _
    // Predicated region
    $region34: #{tpu_custom_call.1} parent=1 // pred_check
      _
    $region35: #{tpu_custom_call.1} parent=1 // pred_check_branch
      %108 = sbr.rel (0) target = $region37
    $region36: #{tpu_custom_call.1} parent=1 // pred_region
      %109 = dma.done [#allocation3], 256
    $region37: #{tpu_custom_call.1} parent=1 // pred_fallthru
      _
    // Predicated region
    $region38: #{tpu_custom_call.1} parent=1 // pred_check
      _
    $region39: #{tpu_custom_call.1} parent=1 // pred_check_branch
      %111 = sbr.rel (0) target = $region41
    $region40: #{tpu_custom_call.1} parent=1 // pred_region
      %112 = dma.done [#allocation6], 512
    $region41: #{tpu_custom_call.1} parent=1 // pred_fallthru
      _
    // Predicated region
    $region42: #{tpu_custom_call.1} parent=1 // pred_check
      _
    $region43: #{tpu_custom_call.1} parent=1 // pred_check_branch
      %114 = sbr.rel (0) target = $region45
    $region44: #{tpu_custom_call.1} parent=1 // pred_region
      %115 = dma.done [#allocation6], 512
    $region45: #{tpu_custom_call.1} parent=1 // pred_fallthru
      _
    // Predicated region
    $region46: #{tpu_custom_call.1} parent=1 // pred_check
      _
    $region47: #{tpu_custom_call.1} parent=1 // pred_check_branch
      %117 = sbr.rel (0) target = $region49
    $region48: #{tpu_custom_call.1} parent=1 // pred_region
      %118 = dma.done [#allocation9], 512
    $region49: #{tpu_custom_call.1} parent=1 // pred_fallthru
      _
    // Predicated region
    $region50: #{tpu_custom_call.1} parent=1 // pred_check
      _
    $region51: #{tpu_custom_call.1} parent=1 // pred_check_branch
      %120 = sbr.rel (0) target = $region53
    $region52: #{tpu_custom_call.1} parent=1 // pred_region
      %121 = dma.done [#allocation9], 512
    $region53: #{tpu_custom_call.1} parent=1 // pred_fallthru
      _
    // Predicated region
    $region54: #{tpu_custom_call.1} parent=1 // pred_check
      _
    $region55: #{tpu_custom_call.1} parent=1 // pred_check_branch
      %123 = sbr.rel (0) target = $region57
    $region56: #{tpu_custom_call.1} parent=1 // pred_region
      %124 = dma.done [#allocation12], 512
    $region57: #{tpu_custom_call.1} parent=1 // pred_fallthru
      _
    // Predicated region
    $region58: #{tpu_custom_call.1} parent=1 // pred_check
      _
    $region59: #{tpu_custom_call.1} parent=1 // pred_check_branch
      %126 = sbr.rel (0) target = $region61
    $region60: #{tpu_custom_call.1} parent=1 // pred_region
      %127 = dma.done [#allocation12], 512
    $region61: #{tpu_custom_call.1} parent=1 // pred_fallthru
      _
    %v129 = vld [vmem:[#allocation2] sm:$0xff]
    %v130 = vld [vmem:[#allocation2 + $0x8] sm:$0xff]
    %v131 = vpack.c.bf16 %v130, %v129
    %v132 = vld [vmem:[#allocation5] sm:$0xff]
    %v133 = vld [vmem:[#allocation5 + $0x8] sm:$0xff]
    %v134 = vld [vmem:[#allocation5 + $0x10] sm:$0xff]
    %v135 = vld [vmem:[#allocation5 + $0x18] sm:$0xff]
    %v136 = vpack.c.bf16 %v133, %v132
    %v137 = vpack.c.bf16 %v135, %v134
    %v138 = vld [vmem:[#allocation7] sm:$0xff]
    %v139 = vld [vmem:[#allocation7 + $0x8] sm:$0xff]
    %v140 = vld [vmem:[#allocation7 + $0x10] sm:$0xff]
    %v141 = vld [vmem:[#allocation7 + $0x18] sm:$0xff]
    %v142 = vpack.c.bf16 %v139, %v138
    %v143 = vpack.c.bf16 %v141, %v140
    %v144 = vld [vmem:[#allocation8] sm:$0xf]
    %v145 = vld [vmem:[#allocation8 + $0x4] sm:$0xf]
    %v146 = vld [vmem:[#allocation8 + $0x8] sm:$0xf]
    %v147 = vld [vmem:[#allocation8 + $0xc] sm:$0xf]
    %v148 = vld [vmem:[#allocation8 + $0x10] sm:$0xf]
    %v149 = vld [vmem:[#allocation8 + $0x14] sm:$0xf]
    %v150 = vld [vmem:[#allocation8 + $0x18] sm:$0xf]
    %v151 = vld [vmem:[#allocation8 + $0x1c] sm:$0xf]
    %v160 = vunpack.c.l.b16 %v144
    %v161 = vunpack.c.l.b16 %v145
    %v162 = vunpack.c.l.b16 %v146
    %v163 = vunpack.c.l.b16 %v147
    %v164 = vunpack.c.l.b16 %v148
    %v165 = vunpack.c.l.b16 %v149
    %v166 = vunpack.c.l.b16 %v150
    %v167 = vunpack.c.l.b16 %v151
    %v168 = vpack.c.b16 %v161, %v160
    %v169 = vpack.c.b16 %v163, %v162
    %v170 = vpack.c.b16 %v165, %v164
    %v171 = vpack.c.b16 %v167, %v166
    %vm176 = vcmask 523264
    %v178 = vsel %vm176, %v131, 0
    %180 = vmatprep.subr.bf16.mxu0 0
    %181 = vmatpush1.bf16.msra.mxu0 %v168
    %182 = vmatprep.subr.bf16.mxu0 0
    %183 = vmatpush1.bf16.msra.mxu0 %v169
    %184 = vmatprep.subr.bf16.mxu0 0
    %185 = vmatpush1.bf16.msra.mxu0 %v170
    %186 = vmatprep.subr.bf16.mxu0 0
    %187 = vmatpush1.bf16.msra.mxu0 %v171
    %188 = vmatprep.subr.bf16.mxu0 0
    %189 = vmatpush1.bf16.msra.mxu0 0
    %190 = vmatprep.subr.bf16.mxu0 0
    %191 = vmatpush1.bf16.msra.mxu0 0
    %192 = vmatprep.subr.bf16.mxu0 0
    %193 = vmatpush1.bf16.msra.mxu0 0
    %194 = vmatprep.subr.bf16.mxu0 0
    %195 = vmatpush1.bf16.msra.mxu0 0
    %196 = vmatprep.subr.bf16.mxu0 0
    %197 = vmatpush1.bf16.msra.mxu0 0
    %198 = vmatprep.subr.bf16.mxu0 0
    %199 = vmatpush1.bf16.msra.mxu0 0
    %200 = vmatprep.subr.bf16.mxu0 0
    %201 = vmatpush1.bf16.msra.mxu0 0
    %202 = vmatprep.subr.bf16.mxu0 0
    %203 = vmatpush1.bf16.msra.mxu0 0
    %204 = vmatprep.subr.bf16.mxu0 0
    %205 = vmatpush1.bf16.msra.mxu0 0
    %206 = vmatprep.subr.bf16.mxu0 0
    %207 = vmatpush1.bf16.msra.mxu0 0
    %208 = vmatprep.subr.bf16.mxu0 0
    %209 = vmatpush1.bf16.msra.mxu0 0
    %210 = vmatprep.subr.bf16.mxu0 0
    %211 = vmatpush1.bf16.msra.mxu0 0
    %212 = vmatprep.mubr.bf16.mxu0 0
    %213 = vmatmul.mubr.bf16.gmra.mrb[0].mxu0 %v178
    %v214 = vpop.f32.mrb[0].mxu0
    %v215 = vadd.f32 0.0, %v214
    %v216 = vpop.f32.mrb[0].mxu0
    %v217 = vpop.f32.mrb[0].mxu0
    %v218 = vadd.f32 0.0, %v217
    %v219 = vpop.f32.mrb[0].mxu0
    %220 = vdwg.mxu0
    %v221 = vmul.f32 %v215, 0.35355338
    %v222 = vmul.f32 %v218, 0.35355338
    %v223 = vld [vmem:[#allocation10] sm:$0xf]
    %v224 = vld [vmem:[#allocation10 + $0x4] sm:$0xf]
    %v225 = vld [vmem:[#allocation10 + $0x8] sm:$0xf]
    %v226 = vld [vmem:[#allocation10 + $0xc] sm:$0xf]
    %v227 = vld [vmem:[#allocation10 + $0x10] sm:$0xf]
    %v228 = vld [vmem:[#allocation10 + $0x14] sm:$0xf]
    %v229 = vld [vmem:[#allocation10 + $0x18] sm:$0xf]
    %v230 = vld [vmem:[#allocation10 + $0x1c] sm:$0xf]
    %v239 = vunpack.c.l.b16 %v223
    %v240 = vunpack.c.l.b16 %v224
    %v241 = vunpack.c.l.b16 %v225
    %v242 = vunpack.c.l.b16 %v226
    %v243 = vunpack.c.l.b16 %v227
    %v244 = vunpack.c.l.b16 %v228
    %v245 = vunpack.c.l.b16 %v229
    %v246 = vunpack.c.l.b16 %v230
    %v247 = vpack.c.b16 %v240, %v239
    %v248 = vpack.c.b16 %v242, %v241
    %v249 = vpack.c.b16 %v244, %v243
    %v250 = vpack.c.b16 %v246, %v245
    %v256 = vsel %vm176, %v136, 0
    %v259 = vsel %vm176, %v137, 0
    %261 = vmatprep.subr.bf16.mxu0 0
    %262 = vmatpush1.bf16.msra.mxu0 %v247
    %263 = vmatprep.subr.bf16.mxu0 0
    %264 = vmatpush1.bf16.msra.mxu0 %v248
    %265 = vmatprep.subr.bf16.mxu0 0
    %266 = vmatpush1.bf16.msra.mxu0 %v249
    %267 = vmatprep.subr.bf16.mxu0 0
    %268 = vmatpush1.bf16.msra.mxu0 %v250
    %269 = vmatprep.subr.bf16.mxu0 0
    %270 = vmatpush1.bf16.msra.mxu0 0
    %271 = vmatprep.subr.bf16.mxu0 0
    %272 = vmatpush1.bf16.msra.mxu0 0
    %273 = vmatprep.subr.bf16.mxu0 0
    %274 = vmatpush1.bf16.msra.mxu0 0
    %275 = vmatprep.subr.bf16.mxu0 0
    %276 = vmatpush1.bf16.msra.mxu0 0
    %277 = vmatprep.subr.bf16.mxu0 0
    %278 = vmatpush1.bf16.msra.mxu0 0
    %279 = vmatprep.subr.bf16.mxu0 0
    %280 = vmatpush1.bf16.msra.mxu0 0
    %281 = vmatprep.subr.bf16.mxu0 0
    %282 = vmatpush1.bf16.msra.mxu0 0
    %283 = vmatprep.subr.bf16.mxu0 0
    %284 = vmatpush1.bf16.msra.mxu0 0
    %285 = vmatprep.subr.bf16.mxu0 0
    %286 = vmatpush1.bf16.msra.mxu0 0
    %287 = vmatprep.subr.bf16.mxu0 0
    %288 = vmatpush1.bf16.msra.mxu0 0
    %289 = vmatprep.subr.bf16.mxu0 0
    %290 = vmatpush1.bf16.msra.mxu0 0
    %291 = vmatprep.subr.bf16.mxu0 0
    %292 = vmatpush1.bf16.msra.mxu0 0
    %293 = vmatprep.mubr.bf16.mxu0 0
    %294 = vmatmul.mubr.bf16.gmra.mrb[0].mxu0 %v256
    %v295 = vpop.f32.mrb[0].mxu0
    %v296 = vadd.f32 0.0, %v295
    %v297 = vpop.f32.mrb[0].mxu0
    %v298 = vpop.f32.mrb[0].mxu0
    %v299 = vadd.f32 0.0, %v298
    %v300 = vpop.f32.mrb[0].mxu0
    %301 = vmatprep.mubr.bf16.mxu0 0
    %302 = vmatmul.mubr.bf16.gmra.mrb[0].mxu0 %v259
    %v303 = vpop.f32.mrb[0].mxu0
    %v304 = vadd.f32 0.0, %v303
    %v305 = vpop.f32.mrb[0].mxu0
    %v306 = vpop.f32.mrb[0].mxu0
    %v307 = vadd.f32 0.0, %v306
    %v308 = vpop.f32.mrb[0].mxu0
    %309 = vdwg.mxu0
    %v310 = vld [vmem:[#allocation11] sm:$0xf]
    %v311 = vld [vmem:[#allocation11 + $0x4] sm:$0xf]
    %v312 = vld [vmem:[#allocation11 + $0x8] sm:$0xf]
    %v313 = vld [vmem:[#allocation11 + $0xc] sm:$0xf]
    %v314 = vld [vmem:[#allocation11 + $0x10] sm:$0xf]
    %v315 = vld [vmem:[#allocation11 + $0x14] sm:$0xf]
    %v316 = vld [vmem:[#allocation11 + $0x18] sm:$0xf]
    %v317 = vld [vmem:[#allocation11 + $0x1c] sm:$0xf]
    %v326 = vunpack.c.l.b16 %v310
    %v327 = vunpack.c.l.b16 %v311
    %v328 = vunpack.c.l.b16 %v312
    %v329 = vunpack.c.l.b16 %v313
    %v330 = vunpack.c.l.b16 %v314
    %v331 = vunpack.c.l.b16 %v315
    %v332 = vunpack.c.l.b16 %v316
    %v333 = vunpack.c.l.b16 %v317
    %v334 = vpack.c.b16 %v327, %v326
    %v335 = vpack.c.b16 %v329, %v328
    %v336 = vpack.c.b16 %v331, %v330
    %v337 = vpack.c.b16 %v333, %v332
    %v343 = vsel %vm176, %v142, 0
    %v346 = vsel %vm176, %v143, 0
    %348 = vmatprep.subr.bf16.mxu0 0
    %349 = vmatpush1.bf16.msra.mxu0 %v334
    %350 = vmatprep.subr.bf16.mxu0 0
    %351 = vmatpush1.bf16.msra.mxu0 %v335
    %352 = vmatprep.subr.bf16.mxu0 0
    %353 = vmatpush1.bf16.msra.mxu0 %v336
    %354 = vmatprep.subr.bf16.mxu0 0
    %355 = vmatpush1.bf16.msra.mxu0 %v337
    %356 = vmatprep.subr.bf16.mxu0 0
    %357 = vmatpush1.bf16.msra.mxu0 0
    %358 = vmatprep.subr.bf16.mxu0 0
    %359 = vmatpush1.bf16.msra.mxu0 0
    %360 = vmatprep.subr.bf16.mxu0 0
    %361 = vmatpush1.bf16.msra.mxu0 0
    %362 = vmatprep.subr.bf16.mxu0 0
    %363 = vmatpush1.bf16.msra.mxu0 0
    %364 = vmatprep.subr.bf16.mxu0 0
    %365 = vmatpush1.bf16.msra.mxu0 0
    %366 = vmatprep.subr.bf16.mxu0 0
    %367 = vmatpush1.bf16.msra.mxu0 0
    %368 = vmatprep.subr.bf16.mxu0 0
    %369 = vmatpush1.bf16.msra.mxu0 0
    %370 = vmatprep.subr.bf16.mxu0 0
    %371 = vmatpush1.bf16.msra.mxu0 0
    %372 = vmatprep.subr.bf16.mxu0 0
    %373 = vmatpush1.bf16.msra.mxu0 0
    %374 = vmatprep.subr.bf16.mxu0 0
    %375 = vmatpush1.bf16.msra.mxu0 0
    %376 = vmatprep.subr.bf16.mxu0 0
    %377 = vmatpush1.bf16.msra.mxu0 0
    %378 = vmatprep.subr.bf16.mxu0 0
    %379 = vmatpush1.bf16.msra.mxu0 0
    %380 = vmatprep.mubr.bf16.mxu0 0
    %381 = vmatmul.mubr.bf16.gmra.mrb[0].mxu0 %v343
    %v382 = vpop.f32.mrb[0].mxu0
    %v383 = vadd.f32 0.0, %v382
    %v384 = vpop.f32.mrb[0].mxu0
    %v385 = vpop.f32.mrb[0].mxu0
    %v386 = vadd.f32 0.0, %v385
    %v387 = vpop.f32.mrb[0].mxu0
    %388 = vmatprep.mubr.bf16.mxu0 0
    %389 = vmatmul.mubr.bf16.gmra.mrb[0].mxu0 %v346
    %v390 = vpop.f32.mrb[0].mxu0
    %v391 = vadd.f32 0.0, %v390
    %v392 = vpop.f32.mrb[0].mxu0
    %v393 = vpop.f32.mrb[0].mxu0
    %v394 = vadd.f32 0.0, %v393
    %v395 = vpop.f32.mrb[0].mxu0
    %396 = vdwg.mxu0
    %398 = vrot.lane.b32.xlu0 %v221, 120
    %v399 = vpop.permute.xlu0 %398
    %401 = vrot.lane.b32.xlu0 %v221, 112
    %v402 = vpop.permute.xlu0 %401
    %404 = vrot.lane.b32.xlu0 %v221, 104
    %v405 = vpop.permute.xlu0 %404
    %407 = vrot.lane.b32.xlu0 %v221, 96
    %v408 = vpop.permute.xlu0 %407
    %410 = vrot.lane.b32.xlu0 %v221, 88
    %v411 = vpop.permute.xlu0 %410
    %413 = vrot.lane.b32.xlu0 %v221, 80
    %v414 = vpop.permute.xlu0 %413
    %416 = vrot.lane.b32.xlu0 %v221, 72
    %v417 = vpop.permute.xlu0 %416
    %v419 = vcombine.low %v221, %v402
    %v420 = vcombine.high %v221, %v402
    %v422 = vunpack.c.l.s4 1983009808
    %v423 = vunpack.c.0.s8 %v422
    %v424 = vlaneseq
    %v425 = vshrl.u32 %v424, 7
    %v426 = vsub.s32 %v423, %v425
    %v427 = vrot.slane %v419, %v426
    %v429 = vunpack.c.l.s4 1983009808
    %v430 = vunpack.c.0.s8 %v429
    %v431 = vlaneseq
    %v432 = vshrl.u32 %v431, 7
    %v433 = vsub.s32 %v430, %v432
    %v434 = vrot.slane %v420, %v433
    %v435 = vcombine.low %v399, %v405
    %v436 = vcombine.high %v399, %v405
    %v438 = vunpack.c.l.s4 1983009808
    %v439 = vunpack.c.0.s8 %v438
    %v440 = vlaneseq
    %v441 = vshrl.u32 %v440, 7
    %v442 = vsub.s32 %v439, %v441
    %v443 = vrot.slane %v435, %v442
    %v445 = vunpack.c.l.s4 1983009808
    %v446 = vunpack.c.0.s8 %v445
    %v447 = vlaneseq
    %v448 = vshrl.u32 %v447, 7
    %v449 = vsub.s32 %v446, %v448
    %v450 = vrot.slane %v436, %v449
    %v451 = vcombine.low %v408, %v414
    %v452 = vcombine.high %v408, %v414
    %v454 = vunpack.c.l.s4 1983009808
    %v455 = vunpack.c.0.s8 %v454
    %v456 = vlaneseq
    %v457 = vshrl.u32 %v456, 7
    %v458 = vsub.s32 %v455, %v457
    %v459 = vrot.slane %v451, %v458
    %v461 = vunpack.c.l.s4 1983009808
    %v462 = vunpack.c.0.s8 %v461
    %v463 = vlaneseq
    %v464 = vshrl.u32 %v463, 7
    %v465 = vsub.s32 %v462, %v464
    %v466 = vrot.slane %v452, %v465
    %v467 = vcombine.low %v411, %v417
    %v468 = vcombine.high %v411, %v417
    %v470 = vunpack.c.l.s4 1983009808
    %v471 = vunpack.c.0.s8 %v470
    %v472 = vlaneseq
    %v473 = vshrl.u32 %v472, 7
    %v474 = vsub.s32 %v471, %v473
    %v475 = vrot.slane %v467, %v474
    %v477 = vunpack.c.l.s4 1983009808
    %v478 = vunpack.c.0.s8 %v477
    %v479 = vlaneseq
    %v480 = vshrl.u32 %v479, 7
    %v481 = vsub.s32 %v478, %v480
    %v482 = vrot.slane %v468, %v481
    %v483 = vcombine.low %v427, %v443
    %v484 = vcombine.high %v427, %v443
    %v486 = vunpack.c.l.s4 1934713408
    %v487 = vunpack.c.0.s8 %v486
    %v488 = vlaneseq
    %v489 = vshrl.u32 %v488, 7
    %v490 = vsub.s32 %v487, %v489
    %v491 = vrot.slane %v483, %v490
    %v493 = vunpack.c.l.s4 1934713408
    %v494 = vunpack.c.0.s8 %v493
    %v495 = vlaneseq
    %v496 = vshrl.u32 %v495, 7
    %v497 = vsub.s32 %v494, %v496
    %v498 = vrot.slane %v484, %v497
    %v499 = vcombine.low %v434, %v450
    %v500 = vcombine.high %v434, %v450
    %v502 = vunpack.c.l.s4 1934713408
    %v503 = vunpack.c.0.s8 %v502
    %v504 = vlaneseq
    %v505 = vshrl.u32 %v504, 7
    %v506 = vsub.s32 %v503, %v505
    %v507 = vrot.slane %v499, %v506
    %v509 = vunpack.c.l.s4 1934713408
    %v510 = vunpack.c.0.s8 %v509
    %v511 = vlaneseq
    %v512 = vshrl.u32 %v511, 7
    %v513 = vsub.s32 %v510, %v512
    %v514 = vrot.slane %v500, %v513
    %v515 = vcombine.low %v459, %v475
    %v516 = vcombine.high %v459, %v475
    %v518 = vunpack.c.l.s4 1934713408
    %v519 = vunpack.c.0.s8 %v518
    %v520 = vlaneseq
    %v521 = vshrl.u32 %v520, 7
    %v522 = vsub.s32 %v519, %v521
    %v523 = vrot.slane %v515, %v522
    %v525 = vunpack.c.l.s4 1934713408
    %v526 = vunpack.c.0.s8 %v525
    %v527 = vlaneseq
    %v528 = vshrl.u32 %v527, 7
    %v529 = vsub.s32 %v526, %v528
    %v530 = vrot.slane %v516, %v529
    %v531 = vcombine.low %v466, %v482
    %v532 = vcombine.high %v466, %v482
    %v534 = vunpack.c.l.s4 1934713408
    %v535 = vunpack.c.0.s8 %v534
    %v536 = vlaneseq
    %v537 = vshrl.u32 %v536, 7
    %v538 = vsub.s32 %v535, %v537
    %v539 = vrot.slane %v531, %v538
    %v541 = vunpack.c.l.s4 1934713408
    %v542 = vunpack.c.0.s8 %v541
    %v543 = vlaneseq
    %v544 = vshrl.u32 %v543, 7
    %v545 = vsub.s32 %v542, %v544
    %v546 = vrot.slane %v532, %v545
    %v547 = vcombine.low %v491, %v523
    %v548 = vcombine.high %v491, %v523
    %v549 = vcombine.low %v498, %v530
    %v550 = vcombine.high %v498, %v530
    %v551 = vcombine.low %v507, %v539
    %v552 = vcombine.high %v507, %v539
    %v553 = vcombine.low %v514, %v546
    %v554 = vcombine.high %v514, %v546
    %v555 = vcombine.low %v547, %v549
    %v556 = vcombine.high %v547, %v549
    %v558 = vunpack.c.l.s4 1983009808
    %v559 = vunpack.c.0.s8 %v558
    %v560 = vlaneseq
    %v561 = vshrl.u32 %v560, 7
    %v562 = vsub.s32 %v559, %v561
    %v563 = vrot.slane %v555, %v562
    %v565 = vunpack.c.l.s4 1983009808
    %v566 = vunpack.c.0.s8 %v565
    %v567 = vlaneseq
    %v568 = vshrl.u32 %v567, 7
    %v569 = vsub.s32 %v566, %v568
    %v570 = vrot.slane %v556, %v569
    %v571 = vcombine.low %v548, %v550
    %v572 = vcombine.high %v548, %v550
    %v574 = vunpack.c.l.s4 1983009808
    %v575 = vunpack.c.0.s8 %v574
    %v576 = vlaneseq
    %v577 = vshrl.u32 %v576, 7
    %v578 = vsub.s32 %v575, %v577
    %v579 = vrot.slane %v571, %v578
    %v581 = vunpack.c.l.s4 1983009808
    %v582 = vunpack.c.0.s8 %v581
    %v583 = vlaneseq
    %v584 = vshrl.u32 %v583, 7
    %v585 = vsub.s32 %v582, %v584
    %v586 = vrot.slane %v572, %v585
    %v587 = vcombine.low %v551, %v553
    %v588 = vcombine.high %v551, %v553
    %v590 = vunpack.c.l.s4 1983009808
    %v591 = vunpack.c.0.s8 %v590
    %v592 = vlaneseq
    %v593 = vshrl.u32 %v592, 7
    %v594 = vsub.s32 %v591, %v593
    %v595 = vrot.slane %v587, %v594
    %v597 = vunpack.c.l.s4 1983009808
    %v598 = vunpack.c.0.s8 %v597
    %v599 = vlaneseq
    %v600 = vshrl.u32 %v599, 7
    %v601 = vsub.s32 %v598, %v600
    %v602 = vrot.slane %v588, %v601
    %v603 = vcombine.low %v552, %v554
    %v604 = vcombine.high %v552, %v554
    %v606 = vunpack.c.l.s4 1983009808
    %v607 = vunpack.c.0.s8 %v606
    %v608 = vlaneseq
    %v609 = vshrl.u32 %v608, 7
    %v610 = vsub.s32 %v607, %v609
    %v611 = vrot.slane %v603, %v610
    %v613 = vunpack.c.l.s4 1983009808
    %v614 = vunpack.c.0.s8 %v613
    %v615 = vlaneseq
    %v616 = vshrl.u32 %v615, 7
    %v617 = vsub.s32 %v614, %v616
    %v618 = vrot.slane %v604, %v617
    %v619 = vcombine.low %v563, %v579
    %v620 = vcombine.high %v563, %v579
    %v622 = vunpack.c.l.s4 1934713408
    %v623 = vunpack.c.0.s8 %v622
    %v624 = vlaneseq
    %v625 = vshrl.u32 %v624, 7
    %v626 = vsub.s32 %v623, %v625
    %v627 = vrot.slane %v619, %v626
    %v629 = vunpack.c.l.s4 1934713408
    %v630 = vunpack.c.0.s8 %v629
    %v631 = vlaneseq
    %v632 = vshrl.u32 %v631, 7
    %v633 = vsub.s32 %v630, %v632
    %v634 = vrot.slane %v620, %v633
    %v635 = vcombine.low %v570, %v586
    %v636 = vcombine.high %v570, %v586
    %v638 = vunpack.c.l.s4 1934713408
    %v639 = vunpack.c.0.s8 %v638
    %v640 = vlaneseq
    %v641 = vshrl.u32 %v640, 7
    %v642 = vsub.s32 %v639, %v641
    %v643 = vrot.slane %v635, %v642
    %v645 = vunpack.c.l.s4 1934713408
    %v646 = vunpack.c.0.s8 %v645
    %v647 = vlaneseq
    %v648 = vshrl.u32 %v647, 7
    %v649 = vsub.s32 %v646, %v648
    %v650 = vrot.slane %v636, %v649
    %v651 = vcombine.low %v595, %v611
    %v652 = vcombine.high %v595, %v611
    %v654 = vunpack.c.l.s4 1934713408
    %v655 = vunpack.c.0.s8 %v654
    %v656 = vlaneseq
    %v657 = vshrl.u32 %v656, 7
    %v658 = vsub.s32 %v655, %v657
    %v659 = vrot.slane %v651, %v658
    %v661 = vunpack.c.l.s4 1934713408
    %v662 = vunpack.c.0.s8 %v661
    %v663 = vlaneseq
    %v664 = vshrl.u32 %v663, 7
    %v665 = vsub.s32 %v662, %v664
    %v666 = vrot.slane %v652, %v665
    %v667 = vcombine.low %v602, %v618
    %v668 = vcombine.high %v602, %v618
    %v670 = vunpack.c.l.s4 1934713408
    %v671 = vunpack.c.0.s8 %v670
    %v672 = vlaneseq
    %v673 = vshrl.u32 %v672, 7
    %v674 = vsub.s32 %v671, %v673
    %v675 = vrot.slane %v667, %v674
    %v677 = vunpack.c.l.s4 1934713408
    %v678 = vunpack.c.0.s8 %v677
    %v679 = vlaneseq
    %v680 = vshrl.u32 %v679, 7
    %v681 = vsub.s32 %v678, %v680
    %v682 = vrot.slane %v668, %v681
    %v683 = vcombine.low %v627, %v659
    %v684 = vcombine.high %v627, %v659
    %v685 = vcombine.low %v634, %v666
    %v686 = vcombine.high %v634, %v666
    %v687 = vcombine.low %v643, %v675
    %v688 = vcombine.high %v643, %v675
    %v689 = vcombine.low %v650, %v682
    %v690 = vcombine.high %v650, %v682
    %693 = vrot.lane.b32.xlu0 %v296, 120
    %v694 = vpop.permute.xlu0 %693
    %695 = vrot.lane.b32.xlu0 %v299, 120
    %v696 = vpop.permute.xlu0 %695
    %699 = vrot.lane.b32.xlu0 %v296, 112
    %v700 = vpop.permute.xlu0 %699
    %701 = vrot.lane.b32.xlu0 %v299, 112
    %v702 = vpop.permute.xlu0 %701
    %705 = vrot.lane.b32.xlu0 %v296, 104
    %v706 = vpop.permute.xlu0 %705
    %707 = vrot.lane.b32.xlu0 %v299, 104
    %v708 = vpop.permute.xlu0 %707
    %711 = vrot.lane.b32.xlu0 %v296, 96
    %v712 = vpop.permute.xlu0 %711
    %713 = vrot.lane.b32.xlu0 %v299, 96
    %v714 = vpop.permute.xlu0 %713
    %717 = vrot.lane.b32.xlu0 %v296, 88
    %v718 = vpop.permute.xlu0 %717
    %719 = vrot.lane.b32.xlu0 %v299, 88
    %v720 = vpop.permute.xlu0 %719
    %723 = vrot.lane.b32.xlu0 %v296, 80
    %v724 = vpop.permute.xlu0 %723
    %725 = vrot.lane.b32.xlu0 %v299, 80
    %v726 = vpop.permute.xlu0 %725
    %729 = vrot.lane.b32.xlu0 %v296, 72
    %v730 = vpop.permute.xlu0 %729
    %731 = vrot.lane.b32.xlu0 %v299, 72
    %v732 = vpop.permute.xlu0 %731
    %v735 = vcombine.low %v296, %v700
    %v736 = vcombine.high %v296, %v700
    %v738 = vunpack.c.l.s4 1983009808
    %v739 = vunpack.c.0.s8 %v738
    %v740 = vlaneseq
    %v741 = vshrl.u32 %v740, 7
    %v742 = vsub.s32 %v739, %v741
    %v743 = vrot.slane %v735, %v742
    %v745 = vunpack.c.l.s4 1983009808
    %v746 = vunpack.c.0.s8 %v745
    %v747 = vlaneseq
    %v748 = vshrl.u32 %v747, 7
    %v749 = vsub.s32 %v746, %v748
    %v750 = vrot.slane %v736, %v749
    %v751 = vcombine.low %v694, %v706
    %v752 = vcombine.high %v694, %v706
    %v754 = vunpack.c.l.s4 1983009808
    %v755 = vunpack.c.0.s8 %v754
    %v756 = vlaneseq
    %v757 = vshrl.u32 %v756, 7
    %v758 = vsub.s32 %v755, %v757
    %v759 = vrot.slane %v751, %v758
    %v761 = vunpack.c.l.s4 1983009808
    %v762 = vunpack.c.0.s8 %v761
    %v763 = vlaneseq
    %v764 = vshrl.u32 %v763, 7
    %v765 = vsub.s32 %v762, %v764
    %v766 = vrot.slane %v752, %v765
    %v767 = vcombine.low %v712, %v724
    %v768 = vcombine.high %v712, %v724
    %v770 = vunpack.c.l.s4 1983009808
    %v771 = vunpack.c.0.s8 %v770
    %v772 = vlaneseq
    %v773 = vshrl.u32 %v772, 7
    %v774 = vsub.s32 %v771, %v773
    %v775 = vrot.slane %v767, %v774
    %v777 = vunpack.c.l.s4 1983009808
    %v778 = vunpack.c.0.s8 %v777
    %v779 = vlaneseq
    %v780 = vshrl.u32 %v779, 7
    %v781 = vsub.s32 %v778, %v780
    %v782 = vrot.slane %v768, %v781
    %v783 = vcombine.low %v718, %v730
    %v784 = vcombine.high %v718, %v730
    %v786 = vunpack.c.l.s4 1983009808
    %v787 = vunpack.c.0.s8 %v786
    %v788 = vlaneseq
    %v789 = vshrl.u32 %v788, 7
    %v790 = vsub.s32 %v787, %v789
    %v791 = vrot.slane %v783, %v790
    %v793 = vunpack.c.l.s4 1983009808
    %v794 = vunpack.c.0.s8 %v793
    %v795 = vlaneseq
    %v796 = vshrl.u32 %v795, 7
    %v797 = vsub.s32 %v794, %v796
    %v798 = vrot.slane %v784, %v797
    %v799 = vcombine.low %v743, %v759
    %v800 = vcombine.high %v743, %v759
    %v802 = vunpack.c.l.s4 1934713408
    %v803 = vunpack.c.0.s8 %v802
    %v804 = vlaneseq
    %v805 = vshrl.u32 %v804, 7
    %v806 = vsub.s32 %v803, %v805
    %v807 = vrot.slane %v799, %v806
    %v809 = vunpack.c.l.s4 1934713408
    %v810 = vunpack.c.0.s8 %v809
    %v811 = vlaneseq
    %v812 = vshrl.u32 %v811, 7
    %v813 = vsub.s32 %v810, %v812
    %v814 = vrot.slane %v800, %v813
    %v815 = vcombine.low %v750, %v766
    %v816 = vcombine.high %v750, %v766
    %v818 = vunpack.c.l.s4 1934713408
    %v819 = vunpack.c.0.s8 %v818
    %v820 = vlaneseq
    %v821 = vshrl.u32 %v820, 7
    %v822 = vsub.s32 %v819, %v821
    %v823 = vrot.slane %v815, %v822
    %v825 = vunpack.c.l.s4 1934713408
    %v826 = vunpack.c.0.s8 %v825
    %v827 = vlaneseq
    %v828 = vshrl.u32 %v827, 7
    %v829 = vsub.s32 %v826, %v828
    %v830 = vrot.slane %v816, %v829
    %v831 = vcombine.low %v775, %v791
    %v832 = vcombine.high %v775, %v791
    %v834 = vunpack.c.l.s4 1934713408
    %v835 = vunpack.c.0.s8 %v834
    %v836 = vlaneseq
    %v837 = vshrl.u32 %v836, 7
    %v838 = vsub.s32 %v835, %v837
    %v839 = vrot.slane %v831, %v838
    %v841 = vunpack.c.l.s4 1934713408
    %v842 = vunpack.c.0.s8 %v841
    %v843 = vlaneseq
    %v844 = vshrl.u32 %v843, 7
    %v845 = vsub.s32 %v842, %v844
    %v846 = vrot.slane %v832, %v845
    %v847 = vcombine.low %v782, %v798
    %v848 = vcombine.high %v782, %v798
    %v850 = vunpack.c.l.s4 1934713408
    %v851 = vunpack.c.0.s8 %v850
    %v852 = vlaneseq
    %v853 = vshrl.u32 %v852, 7
    %v854 = vsub.s32 %v851, %v853
    %v855 = vrot.slane %v847, %v854
    %v857 = vunpack.c.l.s4 1934713408
    %v858 = vunpack.c.0.s8 %v857
    %v859 = vlaneseq
    %v860 = vshrl.u32 %v859, 7
    %v861 = vsub.s32 %v858, %v860
    %v862 = vrot.slane %v848, %v861
    %v863 = vcombine.low %v807, %v839
    %v864 = vcombine.high %v807, %v839
    %v865 = vcombine.low %v814, %v846
    %v866 = vcombine.high %v814, %v846
    %v867 = vcombine.low %v823, %v855
    %v868 = vcombine.high %v823, %v855
    %v869 = vcombine.low %v830, %v862
    %v870 = vcombine.high %v830, %v862
    %v871 = vcombine.low %v299, %v702
    %v872 = vcombine.high %v299, %v702
    %v874 = vunpack.c.l.s4 1983009808
    %v875 = vunpack.c.0.s8 %v874
    %v876 = vlaneseq
    %v877 = vshrl.u32 %v876, 7
    %v878 = vsub.s32 %v875, %v877
    %v879 = vrot.slane %v871, %v878
    %v881 = vunpack.c.l.s4 1983009808
    %v882 = vunpack.c.0.s8 %v881
    %v883 = vlaneseq
    %v884 = vshrl.u32 %v883, 7
    %v885 = vsub.s32 %v882, %v884
    %v886 = vrot.slane %v872, %v885
    %v887 = vcombine.low %v696, %v708
    %v888 = vcombine.high %v696, %v708
    %v890 = vunpack.c.l.s4 1983009808
    %v891 = vunpack.c.0.s8 %v890
    %v892 = vlaneseq
    %v893 = vshrl.u32 %v892, 7
    %v894 = vsub.s32 %v891, %v893
    %v895 = vrot.slane %v887, %v894
    %v897 = vunpack.c.l.s4 1983009808
    %v898 = vunpack.c.0.s8 %v897
    %v899 = vlaneseq
    %v900 = vshrl.u32 %v899, 7
    %v901 = vsub.s32 %v898, %v900
    %v902 = vrot.slane %v888, %v901
    %v903 = vcombine.low %v714, %v726
    %v904 = vcombine.high %v714, %v726
    %v906 = vunpack.c.l.s4 1983009808
    %v907 = vunpack.c.0.s8 %v906
    %v908 = vlaneseq
    %v909 = vshrl.u32 %v908, 7
    %v910 = vsub.s32 %v907, %v909
    %v911 = vrot.slane %v903, %v910
    %v913 = vunpack.c.l.s4 1983009808
    %v914 = vunpack.c.0.s8 %v913
    %v915 = vlaneseq
    %v916 = vshrl.u32 %v915, 7
    %v917 = vsub.s32 %v914, %v916
    %v918 = vrot.slane %v904, %v917
    %v919 = vcombine.low %v720, %v732
    %v920 = vcombine.high %v720, %v732
    %v922 = vunpack.c.l.s4 1983009808
    %v923 = vunpack.c.0.s8 %v922
    %v924 = vlaneseq
    %v925 = vshrl.u32 %v924, 7
    %v926 = vsub.s32 %v923, %v925
    %v927 = vrot.slane %v919, %v926
    %v929 = vunpack.c.l.s4 1983009808
    %v930 = vunpack.c.0.s8 %v929
    %v931 = vlaneseq
    %v932 = vshrl.u32 %v931, 7
    %v933 = vsub.s32 %v930, %v932
    %v934 = vrot.slane %v920, %v933
    %v935 = vcombine.low %v879, %v895
    %v936 = vcombine.high %v879, %v895
    %v938 = vunpack.c.l.s4 1934713408
    %v939 = vunpack.c.0.s8 %v938
    %v940 = vlaneseq
    %v941 = vshrl.u32 %v940, 7
    %v942 = vsub.s32 %v939, %v941
    %v943 = vrot.slane %v935, %v942
    %v945 = vunpack.c.l.s4 1934713408
    %v946 = vunpack.c.0.s8 %v945
    %v947 = vlaneseq
    %v948 = vshrl.u32 %v947, 7
    %v949 = vsub.s32 %v946, %v948
    %v950 = vrot.slane %v936, %v949
    %v951 = vcombine.low %v886, %v902
    %v952 = vcombine.high %v886, %v902
    %v954 = vunpack.c.l.s4 1934713408
    %v955 = vunpack.c.0.s8 %v954
    %v956 = vlaneseq
    %v957 = vshrl.u32 %v956, 7
    %v958 = vsub.s32 %v955, %v957
    %v959 = vrot.slane %v951, %v958
    %v961 = vunpack.c.l.s4 1934713408
    %v962 = vunpack.c.0.s8 %v961
    %v963 = vlaneseq
    %v964 = vshrl.u32 %v963, 7
    %v965 = vsub.s32 %v962, %v964
    %v966 = vrot.slane %v952, %v965
    %v967 = vcombine.low %v911, %v927
    %v968 = vcombine.high %v911, %v927
    %v970 = vunpack.c.l.s4 1934713408
    %v971 = vunpack.c.0.s8 %v970
    %v972 = vlaneseq
    %v973 = vshrl.u32 %v972, 7
    %v974 = vsub.s32 %v971, %v973
    %v975 = vrot.slane %v967, %v974
    %v977 = vunpack.c.l.s4 1934713408
    %v978 = vunpack.c.0.s8 %v977
    %v979 = vlaneseq
    %v980 = vshrl.u32 %v979, 7
    %v981 = vsub.s32 %v978, %v980
    %v982 = vrot.slane %v968, %v981
    %v983 = vcombine.low %v918, %v934
    %v984 = vcombine.high %v918, %v934
    %v986 = vunpack.c.l.s4 1934713408
    %v987 = vunpack.c.0.s8 %v986
    %v988 = vlaneseq
    %v989 = vshrl.u32 %v988, 7
    %v990 = vsub.s32 %v987, %v989
    %v991 = vrot.slane %v983, %v990
    %v993 = vunpack.c.l.s4 1934713408
    %v994 = vunpack.c.0.s8 %v993
    %v995 = vlaneseq
    %v996 = vshrl.u32 %v995, 7
    %v997 = vsub.s32 %v994, %v996
    %v998 = vrot.slane %v984, %v997
    %v999 = vcombine.low %v943, %v975
    %v1000 = vcombine.high %v943, %v975
    %v1001 = vcombine.low %v950, %v982
    %v1002 = vcombine.high %v950, %v982
    %v1003 = vcombine.low %v959, %v991
    %v1004 = vcombine.high %v959, %v991
    %v1005 = vcombine.low %v966, %v998
    %v1006 = vcombine.high %v966, %v998
    %v1007 = vcombine.low %v863, %v865
    %v1008 = vcombine.high %v863, %v865
    %v1010 = vunpack.c.l.s4 1983009808
    %v1011 = vunpack.c.0.s8 %v1010
    %v1012 = vlaneseq
    %v1013 = vshrl.u32 %v1012, 7
    %v1014 = vsub.s32 %v1011, %v1013
    %v1015 = vrot.slane %v1007, %v1014
    %v1017 = vunpack.c.l.s4 1983009808
    %v1018 = vunpack.c.0.s8 %v1017
    %v1019 = vlaneseq
    %v1020 = vshrl.u32 %v1019, 7
    %v1021 = vsub.s32 %v1018, %v1020
    %v1022 = vrot.slane %v1008, %v1021
    %v1023 = vcombine.low %v864, %v866
    %v1024 = vcombine.high %v864, %v866
    %v1026 = vunpack.c.l.s4 1983009808
    %v1027 = vunpack.c.0.s8 %v1026
    %v1028 = vlaneseq
    %v1029 = vshrl.u32 %v1028, 7
    %v1030 = vsub.s32 %v1027, %v1029
    %v1031 = vrot.slane %v1023, %v1030
    %v1033 = vunpack.c.l.s4 1983009808
    %v1034 = vunpack.c.0.s8 %v1033
    %v1035 = vlaneseq
    %v1036 = vshrl.u32 %v1035, 7
    %v1037 = vsub.s32 %v1034, %v1036
    %v1038 = vrot.slane %v1024, %v1037
    %v1039 = vcombine.low %v867, %v869
    %v1040 = vcombine.high %v867, %v869
    %v1042 = vunpack.c.l.s4 1983009808
    %v1043 = vunpack.c.0.s8 %v1042
    %v1044 = vlaneseq
    %v1045 = vshrl.u32 %v1044, 7
    %v1046 = vsub.s32 %v1043, %v1045
    %v1047 = vrot.slane %v1039, %v1046
    %v1049 = vunpack.c.l.s4 1983009808
    %v1050 = vunpack.c.0.s8 %v1049
    %v1051 = vlaneseq
    %v1052 = vshrl.u32 %v1051, 7
    %v1053 = vsub.s32 %v1050, %v1052
    %v1054 = vrot.slane %v1040, %v1053
    %v1055 = vcombine.low %v868, %v870
    %v1056 = vcombine.high %v868, %v870
    %v1058 = vunpack.c.l.s4 1983009808
    %v1059 = vunpack.c.0.s8 %v1058
    %v1060 = vlaneseq
    %v1061 = vshrl.u32 %v1060, 7
    %v1062 = vsub.s32 %v1059, %v1061
    %v1063 = vrot.slane %v1055, %v1062
    %v1065 = vunpack.c.l.s4 1983009808
    %v1066 = vunpack.c.0.s8 %v1065
    %v1067 = vlaneseq
    %v1068 = vshrl.u32 %v1067, 7
    %v1069 = vsub.s32 %v1066, %v1068
    %v1070 = vrot.slane %v1056, %v1069
    %v1071 = vcombine.low %v1015, %v1031
    %v1072 = vcombine.high %v1015, %v1031
    %v1074 = vunpack.c.l.s4 1934713408
    %v1075 = vunpack.c.0.s8 %v1074
    %v1076 = vlaneseq
    %v1077 = vshrl.u32 %v1076, 7
    %v1078 = vsub.s32 %v1075, %v1077
    %v1079 = vrot.slane %v1071, %v1078
    %v1081 = vunpack.c.l.s4 1934713408
    %v1082 = vunpack.c.0.s8 %v1081
    %v1083 = vlaneseq
    %v1084 = vshrl.u32 %v1083, 7
    %v1085 = vsub.s32 %v1082, %v1084
    %v1086 = vrot.slane %v1072, %v1085
    %v1087 = vcombine.low %v1022, %v1038
    %v1088 = vcombine.high %v1022, %v1038
    %v1090 = vunpack.c.l.s4 1934713408
    %v1091 = vunpack.c.0.s8 %v1090
    %v1092 = vlaneseq
    %v1093 = vshrl.u32 %v1092, 7
    %v1094 = vsub.s32 %v1091, %v1093
    %v1095 = vrot.slane %v1087, %v1094
    %v1097 = vunpack.c.l.s4 1934713408
    %v1098 = vunpack.c.0.s8 %v1097
    %v1099 = vlaneseq
    %v1100 = vshrl.u32 %v1099, 7
    %v1101 = vsub.s32 %v1098, %v1100
    %v1102 = vrot.slane %v1088, %v1101
    %v1103 = vcombine.low %v1047, %v1063
    %v1104 = vcombine.high %v1047, %v1063
    %v1106 = vunpack.c.l.s4 1934713408
    %v1107 = vunpack.c.0.s8 %v1106
    %v1108 = vlaneseq
    %v1109 = vshrl.u32 %v1108, 7
    %v1110 = vsub.s32 %v1107, %v1109
    %v1111 = vrot.slane %v1103, %v1110
    %v1113 = vunpack.c.l.s4 1934713408
    %v1114 = vunpack.c.0.s8 %v1113
    %v1115 = vlaneseq
    %v1116 = vshrl.u32 %v1115, 7
    %v1117 = vsub.s32 %v1114, %v1116
    %v1118 = vrot.slane %v1104, %v1117
    %v1119 = vcombine.low %v1054, %v1070
    %v1120 = vcombine.high %v1054, %v1070
    %v1122 = vunpack.c.l.s4 1934713408
    %v1123 = vunpack.c.0.s8 %v1122
    %v1124 = vlaneseq
    %v1125 = vshrl.u32 %v1124, 7
    %v1126 = vsub.s32 %v1123, %v1125
    %v1127 = vrot.slane %v1119, %v1126
    %v1129 = vunpack.c.l.s4 1934713408
    %v1130 = vunpack.c.0.s8 %v1129
    %v1131 = vlaneseq
    %v1132 = vshrl.u32 %v1131, 7
    %v1133 = vsub.s32 %v1130, %v1132
    %v1134 = vrot.slane %v1120, %v1133
    %v1135 = vcombine.low %v1079, %v1111
    %v1136 = vcombine.high %v1079, %v1111
    %v1137 = vcombine.low %v1086, %v1118
    %v1138 = vcombine.high %v1086, %v1118
    %v1139 = vcombine.low %v1095, %v1127
    %v1140 = vcombine.high %v1095, %v1127
    %v1141 = vcombine.low %v1102, %v1134
    %v1142 = vcombine.high %v1102, %v1134
    %v1143 = vcombine.low %v999, %v1001
    %v1144 = vcombine.high %v999, %v1001
    %v1146 = vunpack.c.l.s4 1983009808
    %v1147 = vunpack.c.0.s8 %v1146
    %v1148 = vlaneseq
    %v1149 = vshrl.u32 %v1148, 7
    %v1150 = vsub.s32 %v1147, %v1149
    %v1151 = vrot.slane %v1143, %v1150
    %v1153 = vunpack.c.l.s4 1983009808
    %v1154 = vunpack.c.0.s8 %v1153
    %v1155 = vlaneseq
    %v1156 = vshrl.u32 %v1155, 7
    %v1157 = vsub.s32 %v1154, %v1156
    %v1158 = vrot.slane %v1144, %v1157
    %v1159 = vcombine.low %v1000, %v1002
    %v1160 = vcombine.high %v1000, %v1002
    %v1162 = vunpack.c.l.s4 1983009808
    %v1163 = vunpack.c.0.s8 %v1162
    %v1164 = vlaneseq
    %v1165 = vshrl.u32 %v1164, 7
    %v1166 = vsub.s32 %v1163, %v1165
    %v1167 = vrot.slane %v1159, %v1166
    %v1169 = vunpack.c.l.s4 1983009808
    %v1170 = vunpack.c.0.s8 %v1169
    %v1171 = vlaneseq
    %v1172 = vshrl.u32 %v1171, 7
    %v1173 = vsub.s32 %v1170, %v1172
    %v1174 = vrot.slane %v1160, %v1173
    %v1175 = vcombine.low %v1003, %v1005
    %v1176 = vcombine.high %v1003, %v1005
    %v1178 = vunpack.c.l.s4 1983009808
    %v1179 = vunpack.c.0.s8 %v1178
    %v1180 = vlaneseq
    %v1181 = vshrl.u32 %v1180, 7
    %v1182 = vsub.s32 %v1179, %v1181
    %v1183 = vrot.slane %v1175, %v1182
    %v1185 = vunpack.c.l.s4 1983009808
    %v1186 = vunpack.c.0.s8 %v1185
    %v1187 = vlaneseq
    %v1188 = vshrl.u32 %v1187, 7
    %v1189 = vsub.s32 %v1186, %v1188
    %v1190 = vrot.slane %v1176, %v1189
    %v1191 = vcombine.low %v1004, %v1006
    %v1192 = vcombine.high %v1004, %v1006
    %v1194 = vunpack.c.l.s4 1983009808
    %v1195 = vunpack.c.0.s8 %v1194
    %v1196 = vlaneseq
    %v1197 = vshrl.u32 %v1196, 7
    %v1198 = vsub.s32 %v1195, %v1197
    %v1199 = vrot.slane %v1191, %v1198
    %v1201 = vunpack.c.l.s4 1983009808
    %v1202 = vunpack.c.0.s8 %v1201
    %v1203 = vlaneseq
    %v1204 = vshrl.u32 %v1203, 7
    %v1205 = vsub.s32 %v1202, %v1204
    %v1206 = vrot.slane %v1192, %v1205
    %v1207 = vcombine.low %v1151, %v1167
    %v1208 = vcombine.high %v1151, %v1167
    %v1210 = vunpack.c.l.s4 1934713408
    %v1211 = vunpack.c.0.s8 %v1210
    %v1212 = vlaneseq
    %v1213 = vshrl.u32 %v1212, 7
    %v1214 = vsub.s32 %v1211, %v1213
    %v1215 = vrot.slane %v1207, %v1214
    %v1217 = vunpack.c.l.s4 1934713408
    %v1218 = vunpack.c.0.s8 %v1217
    %v1219 = vlaneseq
    %v1220 = vshrl.u32 %v1219, 7
    %v1221 = vsub.s32 %v1218, %v1220
    %v1222 = vrot.slane %v1208, %v1221
    %v1223 = vcombine.low %v1158, %v1174
    %v1224 = vcombine.high %v1158, %v1174
    %v1226 = vunpack.c.l.s4 1934713408
    %v1227 = vunpack.c.0.s8 %v1226
    %v1228 = vlaneseq
    %v1229 = vshrl.u32 %v1228, 7
    %v1230 = vsub.s32 %v1227, %v1229
    %v1231 = vrot.slane %v1223, %v1230
    %v1233 = vunpack.c.l.s4 1934713408
    %v1234 = vunpack.c.0.s8 %v1233
    %v1235 = vlaneseq
    %v1236 = vshrl.u32 %v1235, 7
    %v1237 = vsub.s32 %v1234, %v1236
    %v1238 = vrot.slane %v1224, %v1237
    %v1239 = vcombine.low %v1183, %v1199
    %v1240 = vcombine.high %v1183, %v1199
    %v1242 = vunpack.c.l.s4 1934713408
    %v1243 = vunpack.c.0.s8 %v1242
    %v1244 = vlaneseq
    %v1245 = vshrl.u32 %v1244, 7
    %v1246 = vsub.s32 %v1243, %v1245
    %v1247 = vrot.slane %v1239, %v1246
    %v1249 = vunpack.c.l.s4 1934713408
    %v1250 = vunpack.c.0.s8 %v1249
    %v1251 = vlaneseq
    %v1252 = vshrl.u32 %v1251, 7
    %v1253 = vsub.s32 %v1250, %v1252
    %v1254 = vrot.slane %v1240, %v1253
    %v1255 = vcombine.low %v1190, %v1206
    %v1256 = vcombine.high %v1190, %v1206
    %v1258 = vunpack.c.l.s4 1934713408
    %v1259 = vunpack.c.0.s8 %v1258
    %v1260 = vlaneseq
    %v1261 = vshrl.u32 %v1260, 7
    %v1262 = vsub.s32 %v1259, %v1261
    %v1263 = vrot.slane %v1255, %v1262
    %v1265 = vunpack.c.l.s4 1934713408
    %v1266 = vunpack.c.0.s8 %v1265
    %v1267 = vlaneseq
    %v1268 = vshrl.u32 %v1267, 7
    %v1269 = vsub.s32 %v1266, %v1268
    %v1270 = vrot.slane %v1256, %v1269
    %v1271 = vcombine.low %v1215, %v1247
    %v1272 = vcombine.high %v1215, %v1247
    %v1273 = vcombine.low %v1222, %v1254
    %v1274 = vcombine.high %v1222, %v1254
    %v1275 = vcombine.low %v1231, %v1263
    %v1276 = vcombine.high %v1231, %v1263
    %v1277 = vcombine.low %v1238, %v1270
    %v1278 = vcombine.high %v1238, %v1270
    %1281 = vrot.lane.b32.xlu0 %v383, 120
    %v1282 = vpop.permute.xlu0 %1281
    %1283 = vrot.lane.b32.xlu0 %v386, 120
    %v1284 = vpop.permute.xlu0 %1283
    %1287 = vrot.lane.b32.xlu0 %v383, 112
    %v1288 = vpop.permute.xlu0 %1287
    %1289 = vrot.lane.b32.xlu0 %v386, 112
    %v1290 = vpop.permute.xlu0 %1289
    %1293 = vrot.lane.b32.xlu0 %v383, 104
    %v1294 = vpop.permute.xlu0 %1293
    %1295 = vrot.lane.b32.xlu0 %v386, 104
    %v1296 = vpop.permute.xlu0 %1295
    %1299 = vrot.lane.b32.xlu0 %v383, 96
    %v1300 = vpop.permute.xlu0 %1299
    %1301 = vrot.lane.b32.xlu0 %v386, 96
    %v1302 = vpop.permute.xlu0 %1301
    %1305 = vrot.lane.b32.xlu0 %v383, 88
    %v1306 = vpop.permute.xlu0 %1305
    %1307 = vrot.lane.b32.xlu0 %v386, 88
    %v1308 = vpop.permute.xlu0 %1307
    %1311 = vrot.lane.b32.xlu0 %v383, 80
    %v1312 = vpop.permute.xlu0 %1311
    %1313 = vrot.lane.b32.xlu0 %v386, 80
    %v1314 = vpop.permute.xlu0 %1313
    %1317 = vrot.lane.b32.xlu0 %v383, 72
    %v1318 = vpop.permute.xlu0 %1317
    %1319 = vrot.lane.b32.xlu0 %v386, 72
    %v1320 = vpop.permute.xlu0 %1319
    %v1323 = vcombine.low %v383, %v1288
    %v1324 = vcombine.high %v383, %v1288
    %v1326 = vunpack.c.l.s4 1983009808
    %v1327 = vunpack.c.0.s8 %v1326
    %v1328 = vlaneseq
    %v1329 = vshrl.u32 %v1328, 7
    %v1330 = vsub.s32 %v1327, %v1329
    %v1331 = vrot.slane %v1323, %v1330
    %v1333 = vunpack.c.l.s4 1983009808
    %v1334 = vunpack.c.0.s8 %v1333
    %v1335 = vlaneseq
    %v1336 = vshrl.u32 %v1335, 7
    %v1337 = vsub.s32 %v1334, %v1336
    %v1338 = vrot.slane %v1324, %v1337
    %v1339 = vcombine.low %v1282, %v1294
    %v1340 = vcombine.high %v1282, %v1294
    %v1342 = vunpack.c.l.s4 1983009808
    %v1343 = vunpack.c.0.s8 %v1342
    %v1344 = vlaneseq
    %v1345 = vshrl.u32 %v1344, 7
    %v1346 = vsub.s32 %v1343, %v1345
    %v1347 = vrot.slane %v1339, %v1346
    %v1349 = vunpack.c.l.s4 1983009808
    %v1350 = vunpack.c.0.s8 %v1349
    %v1351 = vlaneseq
    %v1352 = vshrl.u32 %v1351, 7
    %v1353 = vsub.s32 %v1350, %v1352
    %v1354 = vrot.slane %v1340, %v1353
    %v1355 = vcombine.low %v1300, %v1312
    %v1356 = vcombine.high %v1300, %v1312
    %v1358 = vunpack.c.l.s4 1983009808
    %v1359 = vunpack.c.0.s8 %v1358
    %v1360 = vlaneseq
    %v1361 = vshrl.u32 %v1360, 7
    %v1362 = vsub.s32 %v1359, %v1361
    %v1363 = vrot.slane %v1355, %v1362
    %v1365 = vunpack.c.l.s4 1983009808
    %v1366 = vunpack.c.0.s8 %v1365
    %v1367 = vlaneseq
    %v1368 = vshrl.u32 %v1367, 7
    %v1369 = vsub.s32 %v1366, %v1368
    %v1370 = vrot.slane %v1356, %v1369
    %v1371 = vcombine.low %v1306, %v1318
    %v1372 = vcombine.high %v1306, %v1318
    %v1374 = vunpack.c.l.s4 1983009808
    %v1375 = vunpack.c.0.s8 %v1374
    %v1376 = vlaneseq
    %v1377 = vshrl.u32 %v1376, 7
    %v1378 = vsub.s32 %v1375, %v1377
    %v1379 = vrot.slane %v1371, %v1378
    %v1381 = vunpack.c.l.s4 1983009808
    %v1382 = vunpack.c.0.s8 %v1381
    %v1383 = vlaneseq
    %v1384 = vshrl.u32 %v1383, 7
    %v1385 = vsub.s32 %v1382, %v1384
    %v1386 = vrot.slane %v1372, %v1385
    %v1387 = vcombine.low %v1331, %v1347
    %v1388 = vcombine.high %v1331, %v1347
    %v1390 = vunpack.c.l.s4 1934713408
    %v1391 = vunpack.c.0.s8 %v1390
    %v1392 = vlaneseq
    %v1393 = vshrl.u32 %v1392, 7
    %v1394 = vsub.s32 %v1391, %v1393
    %v1395 = vrot.slane %v1387, %v1394
    %v1397 = vunpack.c.l.s4 1934713408
    %v1398 = vunpack.c.0.s8 %v1397
    %v1399 = vlaneseq
    %v1400 = vshrl.u32 %v1399, 7
    %v1401 = vsub.s32 %v1398, %v1400
    %v1402 = vrot.slane %v1388, %v1401
    %v1403 = vcombine.low %v1338, %v1354
    %v1404 = vcombine.high %v1338, %v1354
    %v1406 = vunpack.c.l.s4 1934713408
    %v1407 = vunpack.c.0.s8 %v1406
    %v1408 = vlaneseq
    %v1409 = vshrl.u32 %v1408, 7
    %v1410 = vsub.s32 %v1407, %v1409
    %v1411 = vrot.slane %v1403, %v1410
    %v1413 = vunpack.c.l.s4 1934713408
    %v1414 = vunpack.c.0.s8 %v1413
    %v1415 = vlaneseq
    %v1416 = vshrl.u32 %v1415, 7
    %v1417 = vsub.s32 %v1414, %v1416
    %v1418 = vrot.slane %v1404, %v1417
    %v1419 = vcombine.low %v1363, %v1379
    %v1420 = vcombine.high %v1363, %v1379
    %v1422 = vunpack.c.l.s4 1934713408
    %v1423 = vunpack.c.0.s8 %v1422
    %v1424 = vlaneseq
    %v1425 = vshrl.u32 %v1424, 7
    %v1426 = vsub.s32 %v1423, %v1425
    %v1427 = vrot.slane %v1419, %v1426
    %v1429 = vunpack.c.l.s4 1934713408
    %v1430 = vunpack.c.0.s8 %v1429
    %v1431 = vlaneseq
    %v1432 = vshrl.u32 %v1431, 7
    %v1433 = vsub.s32 %v1430, %v1432
    %v1434 = vrot.slane %v1420, %v1433
    %v1435 = vcombine.low %v1370, %v1386
    %v1436 = vcombine.high %v1370, %v1386
    %v1438 = vunpack.c.l.s4 1934713408
    %v1439 = vunpack.c.0.s8 %v1438
    %v1440 = vlaneseq
    %v1441 = vshrl.u32 %v1440, 7
    %v1442 = vsub.s32 %v1439, %v1441
    %v1443 = vrot.slane %v1435, %v1442
    %v1445 = vunpack.c.l.s4 1934713408
    %v1446 = vunpack.c.0.s8 %v1445
    %v1447 = vlaneseq
    %v1448 = vshrl.u32 %v1447, 7
    %v1449 = vsub.s32 %v1446, %v1448
    %v1450 = vrot.slane %v1436, %v1449
    %v1451 = vcombine.low %v1395, %v1427
    %v1452 = vcombine.high %v1395, %v1427
    %v1453 = vcombine.low %v1402, %v1434
    %v1454 = vcombine.high %v1402, %v1434
    %v1455 = vcombine.low %v1411, %v1443
    %v1456 = vcombine.high %v1411, %v1443
    %v1457 = vcombine.low %v1418, %v1450
    %v1458 = vcombine.high %v1418, %v1450
    %v1459 = vcombine.low %v386, %v1290
    %v1460 = vcombine.high %v386, %v1290
    %v1462 = vunpack.c.l.s4 1983009808
    %v1463 = vunpack.c.0.s8 %v1462
    %v1464 = vlaneseq
    %v1465 = vshrl.u32 %v1464, 7
    %v1466 = vsub.s32 %v1463, %v1465
    %v1467 = vrot.slane %v1459, %v1466
    %v1469 = vunpack.c.l.s4 1983009808
    %v1470 = vunpack.c.0.s8 %v1469
    %v1471 = vlaneseq
    %v1472 = vshrl.u32 %v1471, 7
    %v1473 = vsub.s32 %v1470, %v1472
    %v1474 = vrot.slane %v1460, %v1473
    %v1475 = vcombine.low %v1284, %v1296
    %v1476 = vcombine.high %v1284, %v1296
    %v1478 = vunpack.c.l.s4 1983009808
    %v1479 = vunpack.c.0.s8 %v1478
    %v1480 = vlaneseq
    %v1481 = vshrl.u32 %v1480, 7
    %v1482 = vsub.s32 %v1479, %v1481
    %v1483 = vrot.slane %v1475, %v1482
    %v1485 = vunpack.c.l.s4 1983009808
    %v1486 = vunpack.c.0.s8 %v1485
    %v1487 = vlaneseq
    %v1488 = vshrl.u32 %v1487, 7
    %v1489 = vsub.s32 %v1486, %v1488
    %v1490 = vrot.slane %v1476, %v1489
    %v1491 = vcombine.low %v1302, %v1314
    %v1492 = vcombine.high %v1302, %v1314
    %v1494 = vunpack.c.l.s4 1983009808
    %v1495 = vunpack.c.0.s8 %v1494
    %v1496 = vlaneseq
    %v1497 = vshrl.u32 %v1496, 7
    %v1498 = vsub.s32 %v1495, %v1497
    %v1499 = vrot.slane %v1491, %v1498
    %v1501 = vunpack.c.l.s4 1983009808
    %v1502 = vunpack.c.0.s8 %v1501
    %v1503 = vlaneseq
    %v1504 = vshrl.u32 %v1503, 7
    %v1505 = vsub.s32 %v1502, %v1504
    %v1506 = vrot.slane %v1492, %v1505
    %v1507 = vcombine.low %v1308, %v1320
    %v1508 = vcombine.high %v1308, %v1320
    %v1510 = vunpack.c.l.s4 1983009808
    %v1511 = vunpack.c.0.s8 %v1510
    %v1512 = vlaneseq
    %v1513 = vshrl.u32 %v1512, 7
    %v1514 = vsub.s32 %v1511, %v1513
    %v1515 = vrot.slane %v1507, %v1514
    %v1517 = vunpack.c.l.s4 1983009808
    %v1518 = vunpack.c.0.s8 %v1517
    %v1519 = vlaneseq
    %v1520 = vshrl.u32 %v1519, 7
    %v1521 = vsub.s32 %v1518, %v1520
    %v1522 = vrot.slane %v1508, %v1521
    %v1523 = vcombine.low %v1467, %v1483
    %v1524 = vcombine.high %v1467, %v1483
    %v1526 = vunpack.c.l.s4 1934713408
    %v1527 = vunpack.c.0.s8 %v1526
    %v1528 = vlaneseq
    %v1529 = vshrl.u32 %v1528, 7
    %v1530 = vsub.s32 %v1527, %v1529
    %v1531 = vrot.slane %v1523, %v1530
    %v1533 = vunpack.c.l.s4 1934713408
    %v1534 = vunpack.c.0.s8 %v1533
    %v1535 = vlaneseq
    %v1536 = vshrl.u32 %v1535, 7
    %v1537 = vsub.s32 %v1534, %v1536
    %v1538 = vrot.slane %v1524, %v1537
    %v1539 = vcombine.low %v1474, %v1490
    %v1540 = vcombine.high %v1474, %v1490
    %v1542 = vunpack.c.l.s4 1934713408
    %v1543 = vunpack.c.0.s8 %v1542
    %v1544 = vlaneseq
    %v1545 = vshrl.u32 %v1544, 7
    %v1546 = vsub.s32 %v1543, %v1545
    %v1547 = vrot.slane %v1539, %v1546
    %v1549 = vunpack.c.l.s4 1934713408
    %v1550 = vunpack.c.0.s8 %v1549
    %v1551 = vlaneseq
    %v1552 = vshrl.u32 %v1551, 7
    %v1553 = vsub.s32 %v1550, %v1552
    %v1554 = vrot.slane %v1540, %v1553
    %v1555 = vcombine.low %v1499, %v1515
    %v1556 = vcombine.high %v1499, %v1515
    %v1558 = vunpack.c.l.s4 1934713408
    %v1559 = vunpack.c.0.s8 %v1558
    %v1560 = vlaneseq
    %v1561 = vshrl.u32 %v1560, 7
    %v1562 = vsub.s32 %v1559, %v1561
    %v1563 = vrot.slane %v1555, %v1562
    %v1565 = vunpack.c.l.s4 1934713408
    %v1566 = vunpack.c.0.s8 %v1565
    %v1567 = vlaneseq
    %v1568 = vshrl.u32 %v1567, 7
    %v1569 = vsub.s32 %v1566, %v1568
    %v1570 = vrot.slane %v1556, %v1569
    %v1571 = vcombine.low %v1506, %v1522
    %v1572 = vcombine.high %v1506, %v1522
    %v1574 = vunpack.c.l.s4 1934713408
    %v1575 = vunpack.c.0.s8 %v1574
    %v1576 = vlaneseq
    %v1577 = vshrl.u32 %v1576, 7
    %v1578 = vsub.s32 %v1575, %v1577
    %v1579 = vrot.slane %v1571, %v1578
    %v1581 = vunpack.c.l.s4 1934713408
    %v1582 = vunpack.c.0.s8 %v1581
    %v1583 = vlaneseq
    %v1584 = vshrl.u32 %v1583, 7
    %v1585 = vsub.s32 %v1582, %v1584
    %v1586 = vrot.slane %v1572, %v1585
    %v1587 = vcombine.low %v1531, %v1563
    %v1588 = vcombine.high %v1531, %v1563
    %v1589 = vcombine.low %v1538, %v1570
    %v1590 = vcombine.high %v1538, %v1570
    %v1591 = vcombine.low %v1547, %v1579
    %v1592 = vcombine.high %v1547, %v1579
    %v1593 = vcombine.low %v1554, %v1586
    %v1594 = vcombine.high %v1554, %v1586
    %v1595 = vcombine.low %v1451, %v1453
    %v1596 = vcombine.high %v1451, %v1453
    %v1598 = vunpack.c.l.s4 1983009808
    %v1599 = vunpack.c.0.s8 %v1598
    %v1600 = vlaneseq
    %v1601 = vshrl.u32 %v1600, 7
    %v1602 = vsub.s32 %v1599, %v1601
    %v1603 = vrot.slane %v1595, %v1602
    %v1605 = vunpack.c.l.s4 1983009808
    %v1606 = vunpack.c.0.s8 %v1605
    %v1607 = vlaneseq
    %v1608 = vshrl.u32 %v1607, 7
    %v1609 = vsub.s32 %v1606, %v1608
    %v1610 = vrot.slane %v1596, %v1609
    %v1611 = vcombine.low %v1452, %v1454
    %v1612 = vcombine.high %v1452, %v1454
    %v1614 = vunpack.c.l.s4 1983009808
    %v1615 = vunpack.c.0.s8 %v1614
    %v1616 = vlaneseq
    %v1617 = vshrl.u32 %v1616, 7
    %v1618 = vsub.s32 %v1615, %v1617
    %v1619 = vrot.slane %v1611, %v1618
    %v1621 = vunpack.c.l.s4 1983009808
    %v1622 = vunpack.c.0.s8 %v1621
    %v1623 = vlaneseq
    %v1624 = vshrl.u32 %v1623, 7
    %v1625 = vsub.s32 %v1622, %v1624
    %v1626 = vrot.slane %v1612, %v1625
    %v1627 = vcombine.low %v1455, %v1457
    %v1628 = vcombine.high %v1455, %v1457
    %v1630 = vunpack.c.l.s4 1983009808
    %v1631 = vunpack.c.0.s8 %v1630
    %v1632 = vlaneseq
    %v1633 = vshrl.u32 %v1632, 7
    %v1634 = vsub.s32 %v1631, %v1633
    %v1635 = vrot.slane %v1627, %v1634
    %v1637 = vunpack.c.l.s4 1983009808
    %v1638 = vunpack.c.0.s8 %v1637
    %v1639 = vlaneseq
    %v1640 = vshrl.u32 %v1639, 7
    %v1641 = vsub.s32 %v1638, %v1640
    %v1642 = vrot.slane %v1628, %v1641
    %v1643 = vcombine.low %v1456, %v1458
    %v1644 = vcombine.high %v1456, %v1458
    %v1646 = vunpack.c.l.s4 1983009808
    %v1647 = vunpack.c.0.s8 %v1646
    %v1648 = vlaneseq
    %v1649 = vshrl.u32 %v1648, 7
    %v1650 = vsub.s32 %v1647, %v1649
    %v1651 = vrot.slane %v1643, %v1650
    %v1653 = vunpack.c.l.s4 1983009808
    %v1654 = vunpack.c.0.s8 %v1653
    %v1655 = vlaneseq
    %v1656 = vshrl.u32 %v1655, 7
    %v1657 = vsub.s32 %v1654, %v1656
    %v1658 = vrot.slane %v1644, %v1657
    %v1659 = vcombine.low %v1603, %v1619
    %v1660 = vcombine.high %v1603, %v1619
    %v1662 = vunpack.c.l.s4 1934713408
    %v1663 = vunpack.c.0.s8 %v1662
    %v1664 = vlaneseq
    %v1665 = vshrl.u32 %v1664, 7
    %v1666 = vsub.s32 %v1663, %v1665
    %v1667 = vrot.slane %v1659, %v1666
    %v1669 = vunpack.c.l.s4 1934713408
    %v1670 = vunpack.c.0.s8 %v1669
    %v1671 = vlaneseq
    %v1672 = vshrl.u32 %v1671, 7
    %v1673 = vsub.s32 %v1670, %v1672
    %v1674 = vrot.slane %v1660, %v1673
    %v1675 = vcombine.low %v1610, %v1626
    %v1676 = vcombine.high %v1610, %v1626
    %v1678 = vunpack.c.l.s4 1934713408
    %v1679 = vunpack.c.0.s8 %v1678
    %v1680 = vlaneseq
    %v1681 = vshrl.u32 %v1680, 7
    %v1682 = vsub.s32 %v1679, %v1681
    %v1683 = vrot.slane %v1675, %v1682
    %v1685 = vunpack.c.l.s4 1934713408
    %v1686 = vunpack.c.0.s8 %v1685
    %v1687 = vlaneseq
    %v1688 = vshrl.u32 %v1687, 7
    %v1689 = vsub.s32 %v1686, %v1688
    %v1690 = vrot.slane %v1676, %v1689
    %v1691 = vcombine.low %v1635, %v1651
    %v1692 = vcombine.high %v1635, %v1651
    %v1694 = vunpack.c.l.s4 1934713408
    %v1695 = vunpack.c.0.s8 %v1694
    %v1696 = vlaneseq
    %v1697 = vshrl.u32 %v1696, 7
    %v1698 = vsub.s32 %v1695, %v1697
    %v1699 = vrot.slane %v1691, %v1698
    %v1701 = vunpack.c.l.s4 1934713408
    %v1702 = vunpack.c.0.s8 %v1701
    %v1703 = vlaneseq
    %v1704 = vshrl.u32 %v1703, 7
    %v1705 = vsub.s32 %v1702, %v1704
    %v1706 = vrot.slane %v1692, %v1705
    %v1707 = vcombine.low %v1642, %v1658
    %v1708 = vcombine.high %v1642, %v1658
    %v1710 = vunpack.c.l.s4 1934713408
    %v1711 = vunpack.c.0.s8 %v1710
    %v1712 = vlaneseq
    %v1713 = vshrl.u32 %v1712, 7
    %v1714 = vsub.s32 %v1711, %v1713
    %v1715 = vrot.slane %v1707, %v1714
    %v1717 = vunpack.c.l.s4 1934713408
    %v1718 = vunpack.c.0.s8 %v1717
    %v1719 = vlaneseq
    %v1720 = vshrl.u32 %v1719, 7
    %v1721 = vsub.s32 %v1718, %v1720
    %v1722 = vrot.slane %v1708, %v1721
    %v1723 = vcombine.low %v1667, %v1699
    %v1724 = vcombine.high %v1667, %v1699
    %v1725 = vcombine.low %v1674, %v1706
    %v1726 = vcombine.high %v1674, %v1706
    %v1727 = vcombine.low %v1683, %v1715
    %v1728 = vcombine.high %v1683, %v1715
    %v1729 = vcombine.low %v1690, %v1722
    %v1730 = vcombine.high %v1690, %v1722
    %v1731 = vcombine.low %v1587, %v1589
    %v1732 = vcombine.high %v1587, %v1589
    %v1734 = vunpack.c.l.s4 1983009808
    %v1735 = vunpack.c.0.s8 %v1734
    %v1736 = vlaneseq
    %v1737 = vshrl.u32 %v1736, 7
    %v1738 = vsub.s32 %v1735, %v1737
    %v1739 = vrot.slane %v1731, %v1738
    %v1741 = vunpack.c.l.s4 1983009808
    %v1742 = vunpack.c.0.s8 %v1741
    %v1743 = vlaneseq
    %v1744 = vshrl.u32 %v1743, 7
    %v1745 = vsub.s32 %v1742, %v1744
    %v1746 = vrot.slane %v1732, %v1745
    %v1747 = vcombine.low %v1588, %v1590
    %v1748 = vcombine.high %v1588, %v1590
    %v1750 = vunpack.c.l.s4 1983009808
    %v1751 = vunpack.c.0.s8 %v1750
    %v1752 = vlaneseq
    %v1753 = vshrl.u32 %v1752, 7
    %v1754 = vsub.s32 %v1751, %v1753
    %v1755 = vrot.slane %v1747, %v1754
    %v1757 = vunpack.c.l.s4 1983009808
    %v1758 = vunpack.c.0.s8 %v1757
    %v1759 = vlaneseq
    %v1760 = vshrl.u32 %v1759, 7
    %v1761 = vsub.s32 %v1758, %v1760
    %v1762 = vrot.slane %v1748, %v1761
    %v1763 = vcombine.low %v1591, %v1593
    %v1764 = vcombine.high %v1591, %v1593
    %v1766 = vunpack.c.l.s4 1983009808
    %v1767 = vunpack.c.0.s8 %v1766
    %v1768 = vlaneseq
    %v1769 = vshrl.u32 %v1768, 7
    %v1770 = vsub.s32 %v1767, %v1769
    %v1771 = vrot.slane %v1763, %v1770
    %v1773 = vunpack.c.l.s4 1983009808
    %v1774 = vunpack.c.0.s8 %v1773
    %v1775 = vlaneseq
    %v1776 = vshrl.u32 %v1775, 7
    %v1777 = vsub.s32 %v1774, %v1776
    %v1778 = vrot.slane %v1764, %v1777
    %v1779 = vcombine.low %v1592, %v1594
    %v1780 = vcombine.high %v1592, %v1594
    %v1782 = vunpack.c.l.s4 1983009808
    %v1783 = vunpack.c.0.s8 %v1782
    %v1784 = vlaneseq
    %v1785 = vshrl.u32 %v1784, 7
    %v1786 = vsub.s32 %v1783, %v1785
    %v1787 = vrot.slane %v1779, %v1786
    %v1789 = vunpack.c.l.s4 1983009808
    %v1790 = vunpack.c.0.s8 %v1789
    %v1791 = vlaneseq
    %v1792 = vshrl.u32 %v1791, 7
    %v1793 = vsub.s32 %v1790, %v1792
    %v1794 = vrot.slane %v1780, %v1793
    %v1795 = vcombine.low %v1739, %v1755
    %v1796 = vcombine.high %v1739, %v1755
    %v1798 = vunpack.c.l.s4 1934713408
    %v1799 = vunpack.c.0.s8 %v1798
    %v1800 = vlaneseq
    %v1801 = vshrl.u32 %v1800, 7
    %v1802 = vsub.s32 %v1799, %v1801
    %v1803 = vrot.slane %v1795, %v1802
    %v1805 = vunpack.c.l.s4 1934713408
    %v1806 = vunpack.c.0.s8 %v1805
    %v1807 = vlaneseq
    %v1808 = vshrl.u32 %v1807, 7
    %v1809 = vsub.s32 %v1806, %v1808
    %v1810 = vrot.slane %v1796, %v1809
    %v1811 = vcombine.low %v1746, %v1762
    %v1812 = vcombine.high %v1746, %v1762
    %v1814 = vunpack.c.l.s4 1934713408
    %v1815 = vunpack.c.0.s8 %v1814
    %v1816 = vlaneseq
    %v1817 = vshrl.u32 %v1816, 7
    %v1818 = vsub.s32 %v1815, %v1817
    %v1819 = vrot.slane %v1811, %v1818
    %v1821 = vunpack.c.l.s4 1934713408
    %v1822 = vunpack.c.0.s8 %v1821
    %v1823 = vlaneseq
    %v1824 = vshrl.u32 %v1823, 7
    %v1825 = vsub.s32 %v1822, %v1824
    %v1826 = vrot.slane %v1812, %v1825
    %v1827 = vcombine.low %v1771, %v1787
    %v1828 = vcombine.high %v1771, %v1787
    %v1830 = vunpack.c.l.s4 1934713408
    %v1831 = vunpack.c.0.s8 %v1830
    %v1832 = vlaneseq
    %v1833 = vshrl.u32 %v1832, 7
    %v1834 = vsub.s32 %v1831, %v1833
    %v1835 = vrot.slane %v1827, %v1834
    %v1837 = vunpack.c.l.s4 1934713408
    %v1838 = vunpack.c.0.s8 %v1837
    %v1839 = vlaneseq
    %v1840 = vshrl.u32 %v1839, 7
    %v1841 = vsub.s32 %v1838, %v1840
    %v1842 = vrot.slane %v1828, %v1841
    %v1843 = vcombine.low %v1778, %v1794
    %v1844 = vcombine.high %v1778, %v1794
    %v1846 = vunpack.c.l.s4 1934713408
    %v1847 = vunpack.c.0.s8 %v1846
    %v1848 = vlaneseq
    %v1849 = vshrl.u32 %v1848, 7
    %v1850 = vsub.s32 %v1847, %v1849
    %v1851 = vrot.slane %v1843, %v1850
    %v1853 = vunpack.c.l.s4 1934713408
    %v1854 = vunpack.c.0.s8 %v1853
    %v1855 = vlaneseq
    %v1856 = vshrl.u32 %v1855, 7
    %v1857 = vsub.s32 %v1854, %v1856
    %v1858 = vrot.slane %v1844, %v1857
    %v1859 = vcombine.low %v1803, %v1835
    %v1860 = vcombine.high %v1803, %v1835
    %v1861 = vcombine.low %v1810, %v1842
    %v1862 = vcombine.high %v1810, %v1842
    %v1863 = vcombine.low %v1819, %v1851
    %v1864 = vcombine.high %v1819, %v1851
    %v1865 = vcombine.low %v1826, %v1858
    %v1866 = vcombine.high %v1826, %v1858
    %v1867 = vpack.c.bf16 %v683, %v683
    %v1868 = vpack.c.bf16 %v684, %v684
    %v1869 = vpack.c.bf16 %v685, %v685
    %v1870 = vpack.c.bf16 %v686, %v686
    %v1871 = vpack.c.bf16 %v687, %v687
    %v1872 = vpack.c.bf16 %v688, %v688
    %v1873 = vpack.c.bf16 %v689, %v689
    %v1874 = vpack.c.bf16 %v690, %v690
    %v1875 = vpack.c.bf16 %v1271, %v1135
    %v1876 = vpack.c.bf16 %v1272, %v1136
    %v1877 = vpack.c.bf16 %v1273, %v1137
    %v1878 = vpack.c.bf16 %v1274, %v1138
    %v1879 = vpack.c.bf16 %v1275, %v1139
    %v1880 = vpack.c.bf16 %v1276, %v1140
    %v1881 = vpack.c.bf16 %v1277, %v1141
    %v1882 = vpack.c.bf16 %v1278, %v1142
    %vm1883 = vcmask 64512
    %v1885 = vsel %vm1883, %v1867, 0
    %v1888 = vsel %vm1883, %v1875, 0
    %1890 = vmatprep.subr.bf16.mxu0 0
    %1891 = vmatpush1.bf16.xpose.msra.mxu0 %v1888
    %1892 = vmatprep.subr.bf16.mxu0 0
    %1893 = vmatpush1.bf16.xpose.msra.mxu0 0
    %1894 = vmatprep.subr.bf16.mxu0 0
    %1895 = vmatpush1.bf16.xpose.msra.mxu0 0
    %1896 = vmatprep.subr.bf16.mxu0 0
    %1897 = vmatpush1.bf16.xpose.msra.mxu0 0
    %1898 = vmatprep.subr.bf16.mxu0 0
    %1899 = vmatpush1.bf16.xpose.msra.mxu0 0
    %1900 = vmatprep.subr.bf16.mxu0 0
    %1901 = vmatpush1.bf16.xpose.msra.mxu0 0
    %1902 = vmatprep.subr.bf16.mxu0 0
    %1903 = vmatpush1.bf16.xpose.msra.mxu0 0
    %1904 = vmatprep.subr.bf16.mxu0 0
    %1905 = vmatpush1.bf16.xpose.msra.mxu0 0
    %1906 = vmatprep.subr.bf16.mxu0 0
    %1907 = vmatpush1.bf16.xpose.msra.mxu0 0
    %1908 = vmatprep.subr.bf16.mxu0 0
    %1909 = vmatpush1.bf16.xpose.msra.mxu0 0
    %1910 = vmatprep.subr.bf16.mxu0 0
    %1911 = vmatpush1.bf16.xpose.msra.mxu0 0
    %1912 = vmatprep.subr.bf16.mxu0 0
    %1913 = vmatpush1.bf16.xpose.msra.mxu0 0
    %1914 = vmatprep.subr.bf16.mxu0 0
    %1915 = vmatpush1.bf16.xpose.msra.mxu0 0
    %1916 = vmatprep.subr.bf16.mxu0 0
    %1917 = vmatpush1.bf16.xpose.msra.mxu0 0
    %1918 = vmatprep.subr.bf16.mxu0 0
    %1919 = vmatpush1.bf16.xpose.msra.mxu0 0
    %1920 = vmatprep.subr.bf16.mxu0 0
    %1921 = vmatpush1.bf16.xpose.msra.mxu0 0
    %1922 = vmatprep.mubr.bf16.mxu0 0
    %1923 = vmatmul.mubr.bf16.gmra.mrb[0].mxu0 %v1885
    %v1924 = vpop.f32.mrb[0].mxu0
    %v1925 = vadd.f32 0.0, %v1924
    %v1926 = vpop.f32.mrb[0].mxu0
    %v1927 = vpop.f32.mrb[0].mxu0
    %v1928 = vpop.f32.mrb[0].mxu0
    %1929 = vdwg.mxu0
    %v1931 = vsel %vm1883, %v1868, 0
    %v1934 = vsel %vm1883, %v1876, 0
    %1936 = vmatprep.subr.bf16.mxu0 0
    %1937 = vmatpush1.bf16.xpose.msra.mxu0 %v1934
    %1938 = vmatprep.subr.bf16.mxu0 0
    %1939 = vmatpush1.bf16.xpose.msra.mxu0 0
    %1940 = vmatprep.subr.bf16.mxu0 0
    %1941 = vmatpush1.bf16.xpose.msra.mxu0 0
    %1942 = vmatprep.subr.bf16.mxu0 0
    %1943 = vmatpush1.bf16.xpose.msra.mxu0 0
    %1944 = vmatprep.subr.bf16.mxu0 0
    %1945 = vmatpush1.bf16.xpose.msra.mxu0 0
    %1946 = vmatprep.subr.bf16.mxu0 0
    %1947 = vmatpush1.bf16.xpose.msra.mxu0 0
    %1948 = vmatprep.subr.bf16.mxu0 0
    %1949 = vmatpush1.bf16.xpose.msra.mxu0 0
    %1950 = vmatprep.subr.bf16.mxu0 0
    %1951 = vmatpush1.bf16.xpose.msra.mxu0 0
    %1952 = vmatprep.subr.bf16.mxu0 0
    %1953 = vmatpush1.bf16.xpose.msra.mxu0 0
    %1954 = vmatprep.subr.bf16.mxu0 0
    %1955 = vmatpush1.bf16.xpose.msra.mxu0 0
    %1956 = vmatprep.subr.bf16.mxu0 0
    %1957 = vmatpush1.bf16.xpose.msra.mxu0 0
    %1958 = vmatprep.subr.bf16.mxu0 0
    %1959 = vmatpush1.bf16.xpose.msra.mxu0 0
    %1960 = vmatprep.subr.bf16.mxu0 0
    %1961 = vmatpush1.bf16.xpose.msra.mxu0 0
    %1962 = vmatprep.subr.bf16.mxu0 0
    %1963 = vmatpush1.bf16.xpose.msra.mxu0 0
    %1964 = vmatprep.subr.bf16.mxu0 0
    %1965 = vmatpush1.bf16.xpose.msra.mxu0 0
    %1966 = vmatprep.subr.bf16.mxu0 0
    %1967 = vmatpush1.bf16.xpose.msra.mxu0 0
    %1968 = vmatprep.mubr.bf16.mxu0 0
    %1969 = vmatmul.mubr.bf16.gmra.mrb[0].mxu0 %v1931
    %v1970 = vpop.f32.mrb[0].mxu0
    %v1971 = vadd.f32 0.0, %v1970
    %v1972 = vpop.f32.mrb[0].mxu0
    %v1973 = vpop.f32.mrb[0].mxu0
    %v1974 = vpop.f32.mrb[0].mxu0
    %1975 = vdwg.mxu0
    %v1977 = vsel %vm1883, %v1869, 0
    %v1980 = vsel %vm1883, %v1877, 0
    %1982 = vmatprep.subr.bf16.mxu0 0
    %1983 = vmatpush1.bf16.xpose.msra.mxu0 %v1980
    %1984 = vmatprep.subr.bf16.mxu0 0
    %1985 = vmatpush1.bf16.xpose.msra.mxu0 0
    %1986 = vmatprep.subr.bf16.mxu0 0
    %1987 = vmatpush1.bf16.xpose.msra.mxu0 0
    %1988 = vmatprep.subr.bf16.mxu0 0
    %1989 = vmatpush1.bf16.xpose.msra.mxu0 0
    %1990 = vmatprep.subr.bf16.mxu0 0
    %1991 = vmatpush1.bf16.xpose.msra.mxu0 0
    %1992 = vmatprep.subr.bf16.mxu0 0
    %1993 = vmatpush1.bf16.xpose.msra.mxu0 0
    %1994 = vmatprep.subr.bf16.mxu0 0
    %1995 = vmatpush1.bf16.xpose.msra.mxu0 0
    %1996 = vmatprep.subr.bf16.mxu0 0
    %1997 = vmatpush1.bf16.xpose.msra.mxu0 0
    %1998 = vmatprep.subr.bf16.mxu0 0
    %1999 = vmatpush1.bf16.xpose.msra.mxu0 0
    %2000 = vmatprep.subr.bf16.mxu0 0
    %2001 = vmatpush1.bf16.xpose.msra.mxu0 0
    %2002 = vmatprep.subr.bf16.mxu0 0
    %2003 = vmatpush1.bf16.xpose.msra.mxu0 0
    %2004 = vmatprep.subr.bf16.mxu0 0
    %2005 = vmatpush1.bf16.xpose.msra.mxu0 0
    %2006 = vmatprep.subr.bf16.mxu0 0
    %2007 = vmatpush1.bf16.xpose.msra.mxu0 0
    %2008 = vmatprep.subr.bf16.mxu0 0
    %2009 = vmatpush1.bf16.xpose.msra.mxu0 0
    %2010 = vmatprep.subr.bf16.mxu0 0
    %2011 = vmatpush1.bf16.xpose.msra.mxu0 0
    %2012 = vmatprep.subr.bf16.mxu0 0
    %2013 = vmatpush1.bf16.xpose.msra.mxu0 0
    %2014 = vmatprep.mubr.bf16.mxu0 0
    %2015 = vmatmul.mubr.bf16.gmra.mrb[0].mxu0 %v1977
    %v2016 = vpop.f32.mrb[0].mxu0
    %v2017 = vadd.f32 0.0, %v2016
    %v2018 = vpop.f32.mrb[0].mxu0
    %v2019 = vpop.f32.mrb[0].mxu0
    %v2020 = vpop.f32.mrb[0].mxu0
    %2021 = vdwg.mxu0
    %v2023 = vsel %vm1883, %v1870, 0
    %v2026 = vsel %vm1883, %v1878, 0
    %2028 = vmatprep.subr.bf16.mxu0 0
    %2029 = vmatpush1.bf16.xpose.msra.mxu0 %v2026
    %2030 = vmatprep.subr.bf16.mxu0 0
    %2031 = vmatpush1.bf16.xpose.msra.mxu0 0
    %2032 = vmatprep.subr.bf16.mxu0 0
    %2033 = vmatpush1.bf16.xpose.msra.mxu0 0
    %2034 = vmatprep.subr.bf16.mxu0 0
    %2035 = vmatpush1.bf16.xpose.msra.mxu0 0
    %2036 = vmatprep.subr.bf16.mxu0 0
    %2037 = vmatpush1.bf16.xpose.msra.mxu0 0
    %2038 = vmatprep.subr.bf16.mxu0 0
    %2039 = vmatpush1.bf16.xpose.msra.mxu0 0
    %2040 = vmatprep.subr.bf16.mxu0 0
    %2041 = vmatpush1.bf16.xpose.msra.mxu0 0
    %2042 = vmatprep.subr.bf16.mxu0 0
    %2043 = vmatpush1.bf16.xpose.msra.mxu0 0
    %2044 = vmatprep.subr.bf16.mxu0 0
    %2045 = vmatpush1.bf16.xpose.msra.mxu0 0
    %2046 = vmatprep.subr.bf16.mxu0 0
    %2047 = vmatpush1.bf16.xpose.msra.mxu0 0
    %2048 = vmatprep.subr.bf16.mxu0 0
    %2049 = vmatpush1.bf16.xpose.msra.mxu0 0
    %2050 = vmatprep.subr.bf16.mxu0 0
    %2051 = vmatpush1.bf16.xpose.msra.mxu0 0
    %2052 = vmatprep.subr.bf16.mxu0 0
    %2053 = vmatpush1.bf16.xpose.msra.mxu0 0
    %2054 = vmatprep.subr.bf16.mxu0 0
    %2055 = vmatpush1.bf16.xpose.msra.mxu0 0
    %2056 = vmatprep.subr.bf16.mxu0 0
    %2057 = vmatpush1.bf16.xpose.msra.mxu0 0
    %2058 = vmatprep.subr.bf16.mxu0 0
    %2059 = vmatpush1.bf16.xpose.msra.mxu0 0
    %2060 = vmatprep.mubr.bf16.mxu0 0
    %2061 = vmatmul.mubr.bf16.gmra.mrb[0].mxu0 %v2023
    %v2062 = vpop.f32.mrb[0].mxu0
    %v2063 = vadd.f32 0.0, %v2062
    %v2064 = vpop.f32.mrb[0].mxu0
    %v2065 = vpop.f32.mrb[0].mxu0
    %v2066 = vpop.f32.mrb[0].mxu0
    %2067 = vdwg.mxu0
    %v2069 = vsel %vm1883, %v1871, 0
    %v2072 = vsel %vm1883, %v1879, 0
    %2074 = vmatprep.subr.bf16.mxu0 0
    %2075 = vmatpush1.bf16.xpose.msra.mxu0 %v2072
    %2076 = vmatprep.subr.bf16.mxu0 0
    %2077 = vmatpush1.bf16.xpose.msra.mxu0 0
    %2078 = vmatprep.subr.bf16.mxu0 0
    %2079 = vmatpush1.bf16.xpose.msra.mxu0 0
    %2080 = vmatprep.subr.bf16.mxu0 0
    %2081 = vmatpush1.bf16.xpose.msra.mxu0 0
    %2082 = vmatprep.subr.bf16.mxu0 0
    %2083 = vmatpush1.bf16.xpose.msra.mxu0 0
    %2084 = vmatprep.subr.bf16.mxu0 0
    %2085 = vmatpush1.bf16.xpose.msra.mxu0 0
    %2086 = vmatprep.subr.bf16.mxu0 0
    %2087 = vmatpush1.bf16.xpose.msra.mxu0 0
    %2088 = vmatprep.subr.bf16.mxu0 0
    %2089 = vmatpush1.bf16.xpose.msra.mxu0 0
    %2090 = vmatprep.subr.bf16.mxu0 0
    %2091 = vmatpush1.bf16.xpose.msra.mxu0 0
    %2092 = vmatprep.subr.bf16.mxu0 0
    %2093 = vmatpush1.bf16.xpose.msra.mxu0 0
    %2094 = vmatprep.subr.bf16.mxu0 0
    %2095 = vmatpush1.bf16.xpose.msra.mxu0 0
    %2096 = vmatprep.subr.bf16.mxu0 0
    %2097 = vmatpush1.bf16.xpose.msra.mxu0 0
    %2098 = vmatprep.subr.bf16.mxu0 0
    %2099 = vmatpush1.bf16.xpose.msra.mxu0 0
    %2100 = vmatprep.subr.bf16.mxu0 0
    %2101 = vmatpush1.bf16.xpose.msra.mxu0 0
    %2102 = vmatprep.subr.bf16.mxu0 0
    %2103 = vmatpush1.bf16.xpose.msra.mxu0 0
    %2104 = vmatprep.subr.bf16.mxu0 0
    %2105 = vmatpush1.bf16.xpose.msra.mxu0 0
    %2106 = vmatprep.mubr.bf16.mxu0 0
    %2107 = vmatmul.mubr.bf16.gmra.mrb[0].mxu0 %v2069
    %v2108 = vpop.f32.mrb[0].mxu0
    %v2109 = vadd.f32 0.0, %v2108
    %v2110 = vpop.f32.mrb[0].mxu0
    %v2111 = vpop.f32.mrb[0].mxu0
    %v2112 = vpop.f32.mrb[0].mxu0
    %2113 = vdwg.mxu0
    %v2115 = vsel %vm1883, %v1872, 0
    %v2118 = vsel %vm1883, %v1880, 0
    %2120 = vmatprep.subr.bf16.mxu0 0
    %2121 = vmatpush1.bf16.xpose.msra.mxu0 %v2118
    %2122 = vmatprep.subr.bf16.mxu0 0
    %2123 = vmatpush1.bf16.xpose.msra.mxu0 0
    %2124 = vmatprep.subr.bf16.mxu0 0
    %2125 = vmatpush1.bf16.xpose.msra.mxu0 0
    %2126 = vmatprep.subr.bf16.mxu0 0
    %2127 = vmatpush1.bf16.xpose.msra.mxu0 0
    %2128 = vmatprep.subr.bf16.mxu0 0
    %2129 = vmatpush1.bf16.xpose.msra.mxu0 0
    %2130 = vmatprep.subr.bf16.mxu0 0
    %2131 = vmatpush1.bf16.xpose.msra.mxu0 0
    %2132 = vmatprep.subr.bf16.mxu0 0
    %2133 = vmatpush1.bf16.xpose.msra.mxu0 0
    %2134 = vmatprep.subr.bf16.mxu0 0
    %2135 = vmatpush1.bf16.xpose.msra.mxu0 0
    %2136 = vmatprep.subr.bf16.mxu0 0
    %2137 = vmatpush1.bf16.xpose.msra.mxu0 0
    %2138 = vmatprep.subr.bf16.mxu0 0
    %2139 = vmatpush1.bf16.xpose.msra.mxu0 0
    %2140 = vmatprep.subr.bf16.mxu0 0
    %2141 = vmatpush1.bf16.xpose.msra.mxu0 0
    %2142 = vmatprep.subr.bf16.mxu0 0
    %2143 = vmatpush1.bf16.xpose.msra.mxu0 0
    %2144 = vmatprep.subr.bf16.mxu0 0
    %2145 = vmatpush1.bf16.xpose.msra.mxu0 0
    %2146 = vmatprep.subr.bf16.mxu0 0
    %2147 = vmatpush1.bf16.xpose.msra.mxu0 0
    %2148 = vmatprep.subr.bf16.mxu0 0
    %2149 = vmatpush1.bf16.xpose.msra.mxu0 0
    %2150 = vmatprep.subr.bf16.mxu0 0
    %2151 = vmatpush1.bf16.xpose.msra.mxu0 0
    %2152 = vmatprep.mubr.bf16.mxu0 0
    %2153 = vmatmul.mubr.bf16.gmra.mrb[0].mxu0 %v2115
    %v2154 = vpop.f32.mrb[0].mxu0
    %v2155 = vadd.f32 0.0, %v2154
    %v2156 = vpop.f32.mrb[0].mxu0
    %v2157 = vpop.f32.mrb[0].mxu0
    %v2158 = vpop.f32.mrb[0].mxu0
    %2159 = vdwg.mxu0
    %v2161 = vsel %vm1883, %v1873, 0
    %v2164 = vsel %vm1883, %v1881, 0
    %2166 = vmatprep.subr.bf16.mxu0 0
    %2167 = vmatpush1.bf16.xpose.msra.mxu0 %v2164
    %2168 = vmatprep.subr.bf16.mxu0 0
    %2169 = vmatpush1.bf16.xpose.msra.mxu0 0
    %2170 = vmatprep.subr.bf16.mxu0 0
    %2171 = vmatpush1.bf16.xpose.msra.mxu0 0
    %2172 = vmatprep.subr.bf16.mxu0 0
    %2173 = vmatpush1.bf16.xpose.msra.mxu0 0
    %2174 = vmatprep.subr.bf16.mxu0 0
    %2175 = vmatpush1.bf16.xpose.msra.mxu0 0
    %2176 = vmatprep.subr.bf16.mxu0 0
    %2177 = vmatpush1.bf16.xpose.msra.mxu0 0
    %2178 = vmatprep.subr.bf16.mxu0 0
    %2179 = vmatpush1.bf16.xpose.msra.mxu0 0
    %2180 = vmatprep.subr.bf16.mxu0 0
    %2181 = vmatpush1.bf16.xpose.msra.mxu0 0
    %2182 = vmatprep.subr.bf16.mxu0 0
    %2183 = vmatpush1.bf16.xpose.msra.mxu0 0
    %2184 = vmatprep.subr.bf16.mxu0 0
    %2185 = vmatpush1.bf16.xpose.msra.mxu0 0
    %2186 = vmatprep.subr.bf16.mxu0 0
    %2187 = vmatpush1.bf16.xpose.msra.mxu0 0
    %2188 = vmatprep.subr.bf16.mxu0 0
    %2189 = vmatpush1.bf16.xpose.msra.mxu0 0
    %2190 = vmatprep.subr.bf16.mxu0 0
    %2191 = vmatpush1.bf16.xpose.msra.mxu0 0
    %2192 = vmatprep.subr.bf16.mxu0 0
    %2193 = vmatpush1.bf16.xpose.msra.mxu0 0
    %2194 = vmatprep.subr.bf16.mxu0 0
    %2195 = vmatpush1.bf16.xpose.msra.mxu0 0
    %2196 = vmatprep.subr.bf16.mxu0 0
    %2197 = vmatpush1.bf16.xpose.msra.mxu0 0
    %2198 = vmatprep.mubr.bf16.mxu0 0
    %2199 = vmatmul.mubr.bf16.gmra.mrb[0].mxu0 %v2161
    %v2200 = vpop.f32.mrb[0].mxu0
    %v2201 = vadd.f32 0.0, %v2200
    %v2202 = vpop.f32.mrb[0].mxu0
    %v2203 = vpop.f32.mrb[0].mxu0
    %v2204 = vpop.f32.mrb[0].mxu0
    %2205 = vdwg.mxu0
    %v2207 = vsel %vm1883, %v1874, 0
    %v2210 = vsel %vm1883, %v1882, 0
    %2212 = vmatprep.subr.bf16.mxu0 0
    %2213 = vmatpush1.bf16.xpose.msra.mxu0 %v2210
    %2214 = vmatprep.subr.bf16.mxu0 0
    %2215 = vmatpush1.bf16.xpose.msra.mxu0 0
    %2216 = vmatprep.subr.bf16.mxu0 0
    %2217 = vmatpush1.bf16.xpose.msra.mxu0 0
    %2218 = vmatprep.subr.bf16.mxu0 0
    %2219 = vmatpush1.bf16.xpose.msra.mxu0 0
    %2220 = vmatprep.subr.bf16.mxu0 0
    %2221 = vmatpush1.bf16.xpose.msra.mxu0 0
    %2222 = vmatprep.subr.bf16.mxu0 0
    %2223 = vmatpush1.bf16.xpose.msra.mxu0 0
    %2224 = vmatprep.subr.bf16.mxu0 0
    %2225 = vmatpush1.bf16.xpose.msra.mxu0 0
    %2226 = vmatprep.subr.bf16.mxu0 0
    %2227 = vmatpush1.bf16.xpose.msra.mxu0 0
    %2228 = vmatprep.subr.bf16.mxu0 0
    %2229 = vmatpush1.bf16.xpose.msra.mxu0 0
    %2230 = vmatprep.subr.bf16.mxu0 0
    %2231 = vmatpush1.bf16.xpose.msra.mxu0 0
    %2232 = vmatprep.subr.bf16.mxu0 0
    %2233 = vmatpush1.bf16.xpose.msra.mxu0 0
    %2234 = vmatprep.subr.bf16.mxu0 0
    %2235 = vmatpush1.bf16.xpose.msra.mxu0 0
    %2236 = vmatprep.subr.bf16.mxu0 0
    %2237 = vmatpush1.bf16.xpose.msra.mxu0 0
    %2238 = vmatprep.subr.bf16.mxu0 0
    %2239 = vmatpush1.bf16.xpose.msra.mxu0 0
    %2240 = vmatprep.subr.bf16.mxu0 0
    %2241 = vmatpush1.bf16.xpose.msra.mxu0 0
    %2242 = vmatprep.subr.bf16.mxu0 0
    %2243 = vmatpush1.bf16.xpose.msra.mxu0 0
    %2244 = vmatprep.mubr.bf16.mxu0 0
    %2245 = vmatmul.mubr.bf16.gmra.mrb[0].mxu0 %v2207
    %v2246 = vpop.f32.mrb[0].mxu0
    %v2247 = vadd.f32 0.0, %v2246
    %v2248 = vpop.f32.mrb[0].mxu0
    %v2249 = vpop.f32.mrb[0].mxu0
    %v2250 = vpop.f32.mrb[0].mxu0
    %2251 = vdwg.mxu0
    %vm2252 = vcmask 130048
    %v2253 = vsel %vm2252, %v1925, 0.0
    %v2254 = vsel %vm2252, %v1971, 0.0
    %v2255 = vadd.f32 %v2253, %v2254
    %v2256 = vsel %vm2252, %v2017, 0.0
    %v2257 = vadd.f32 %v2255, %v2256
    %v2258 = vsel %vm2252, %v2063, 0.0
    %v2259 = vadd.f32 %v2257, %v2258
    %v2260 = vsel %vm2252, %v2109, 0.0
    %v2261 = vadd.f32 %v2259, %v2260
    %v2262 = vsel %vm2252, %v2155, 0.0
    %v2263 = vadd.f32 %v2261, %v2262
    %v2264 = vsel %vm2252, %v2201, 0.0
    %v2265 = vadd.f32 %v2263, %v2264
    %v2266 = vsel %vm2252, %v2247, 0.0
    %v2267 = vadd.f32 %v2265, %v2266
    %v2268 = vmul.f32 %v2267, 0.125
    %2269 = vst.msk [vmem:[#allocation15] sm:$0xff] %vm2252, %v2268
    %v2270 = vsel %vm2252, %v1925, -inf
    %2271 = vmax.xlane.f32.xlu0 %v2270
    %v2272 = vpop.xlane.xlu0 %2271
    %v2273 = vsel %vm2252, %v1971, -inf
    %2274 = vmax.xlane.f32.xlu0 %v2273
    %v2275 = vpop.xlane.xlu0 %2274
    %v2276 = vsel %vm2252, %v2017, -inf
    %2277 = vmax.xlane.f32.xlu0 %v2276
    %v2278 = vpop.xlane.xlu0 %2277
    %v2279 = vsel %vm2252, %v2063, -inf
    %2280 = vmax.xlane.f32.xlu0 %v2279
    %v2281 = vpop.xlane.xlu0 %2280
    %v2282 = vsel %vm2252, %v2109, -inf
    %2283 = vmax.xlane.f32.xlu0 %v2282
    %v2284 = vpop.xlane.xlu0 %2283
    %v2285 = vsel %vm2252, %v2155, -inf
    %2286 = vmax.xlane.f32.xlu0 %v2285
    %v2287 = vpop.xlane.xlu0 %2286
    %v2288 = vsel %vm2252, %v2201, -inf
    %2289 = vmax.xlane.f32.xlu0 %v2288
    %v2290 = vpop.xlane.xlu0 %2289
    %v2291 = vsel %vm2252, %v2247, -inf
    %2292 = vmax.xlane.f32.xlu0 %v2291
    %v2293 = vpop.xlane.xlu0 %2292
    %v2294 = vsub.f32 %v1925, %v2272
    %v2295 = vsub.f32 %v1971, %v2275
    %v2296 = vsub.f32 %v2017, %v2278
    %v2297 = vsub.f32 %v2063, %v2281
    %v2298 = vsub.f32 %v2109, %v2284
    %v2299 = vsub.f32 %v2155, %v2287
    %v2300 = vsub.f32 %v2201, %v2290
    %v2301 = vsub.f32 %v2247, %v2293
    %v2302 = vmul.f32 %v2294, 1.442695
    %v2303 = vpow.pop %v2302
    %v2304 = vmul.f32 %v2295, 1.442695
    %v2305 = vpow.pop %v2304
    %v2306 = vmul.f32 %v2296, 1.442695
    %v2307 = vpow.pop %v2306
    %v2308 = vmul.f32 %v2297, 1.442695
    %v2309 = vpow.pop %v2308
    %v2310 = vmul.f32 %v2298, 1.442695
    %v2311 = vpow.pop %v2310
    %v2312 = vmul.f32 %v2299, 1.442695
    %v2313 = vpow.pop %v2312
    %v2314 = vmul.f32 %v2300, 1.442695
    %v2315 = vpow.pop %v2314
    %v2316 = vmul.f32 %v2301, 1.442695
    %v2317 = vpow.pop %v2316
    %v2318 = vsel %vm2252, %v2303, 0.0
    %2319 = vadd.xlane.f32.xlu0 %v2318
    %v2320 = vpop.xlane.xlu0 %2319
    %v2321 = vsel %vm2252, %v2305, 0.0
    %2322 = vadd.xlane.f32.xlu0 %v2321
    %v2323 = vpop.xlane.xlu0 %2322
    %v2324 = vsel %vm2252, %v2307, 0.0
    %2325 = vadd.xlane.f32.xlu0 %v2324
    %v2326 = vpop.xlane.xlu0 %2325
    %v2327 = vsel %vm2252, %v2309, 0.0
    %2328 = vadd.xlane.f32.xlu0 %v2327
    %v2329 = vpop.xlane.xlu0 %2328
    %v2330 = vsel %vm2252, %v2311, 0.0
    %2331 = vadd.xlane.f32.xlu0 %v2330
    %v2332 = vpop.xlane.xlu0 %2331
    %v2333 = vsel %vm2252, %v2313, 0.0
    %2334 = vadd.xlane.f32.xlu0 %v2333
    %v2335 = vpop.xlane.xlu0 %2334
    %v2336 = vsel %vm2252, %v2315, 0.0
    %2337 = vadd.xlane.f32.xlu0 %v2336
    %v2338 = vpop.xlane.xlu0 %2337
    %v2339 = vsel %vm2252, %v2317, 0.0
    %2340 = vadd.xlane.f32.xlu0 %v2339
    %v2341 = vpop.xlane.xlu0 %2340
    %v2342 = vrcp.pop %v2320
    %v2343 = vrcp.pop %v2323
    %v2344 = vrcp.pop %v2326
    %v2345 = vrcp.pop %v2329
    %v2346 = vrcp.pop %v2332
    %v2347 = vrcp.pop %v2335
    %v2348 = vrcp.pop %v2338
    %v2349 = vrcp.pop %v2341
    %v2350 = vmul.f32 %v2303, %v2342
    %v2351 = vmul.f32 %v2305, %v2343
    %v2352 = vmul.f32 %v2307, %v2344
    %v2353 = vmul.f32 %v2309, %v2345
    %v2354 = vmul.f32 %v2311, %v2346
    %v2355 = vmul.f32 %v2313, %v2347
    %v2356 = vmul.f32 %v2315, %v2348
    %v2357 = vmul.f32 %v2317, %v2349
    %v2358 = vpack.c.bf16 %v2350, %v2350
    %v2359 = vpack.c.bf16 %v2351, %v2351
    %v2360 = vpack.c.bf16 %v2352, %v2352
    %v2361 = vpack.c.bf16 %v2353, %v2353
    %v2362 = vpack.c.bf16 %v2354, %v2354
    %v2363 = vpack.c.bf16 %v2355, %v2355
    %v2364 = vpack.c.bf16 %v2356, %v2356
    %v2365 = vpack.c.bf16 %v2357, %v2357
    %v2366 = vpack.c.bf16 %v1859, %v1723
    %v2367 = vpack.c.bf16 %v1860, %v1724
    %v2368 = vpack.c.bf16 %v1861, %v1725
    %v2369 = vpack.c.bf16 %v1862, %v1726
    %v2370 = vpack.c.bf16 %v1863, %v1727
    %v2371 = vpack.c.bf16 %v1864, %v1728
    %v2372 = vpack.c.bf16 %v1865, %v1729
    %v2373 = vpack.c.bf16 %v1866, %v1730
    %v2375 = vsel %vm2252, %v2358, 0
    %2377 = vmatprep.subr.bf16.mxu0 0
    %2378 = vmatpush1.bf16.msra.mxu0 %v2366
    %2379 = vmatprep.subr.bf16.mxu0 0
    %2380 = vmatpush1.bf16.msra.mxu0 0
    %2381 = vmatprep.subr.bf16.mxu0 0
    %2382 = vmatpush1.bf16.msra.mxu0 0
    %2383 = vmatprep.subr.bf16.mxu0 0
    %2384 = vmatpush1.bf16.msra.mxu0 0
    %2385 = vmatprep.subr.bf16.mxu0 0
    %2386 = vmatpush1.bf16.msra.mxu0 0
    %2387 = vmatprep.subr.bf16.mxu0 0
    %2388 = vmatpush1.bf16.msra.mxu0 0
    %2389 = vmatprep.subr.bf16.mxu0 0
    %2390 = vmatpush1.bf16.msra.mxu0 0
    %2391 = vmatprep.subr.bf16.mxu0 0
    %2392 = vmatpush1.bf16.msra.mxu0 0
    %2393 = vmatprep.subr.bf16.mxu0 0
    %2394 = vmatpush1.bf16.msra.mxu0 0
    %2395 = vmatprep.subr.bf16.mxu0 0
    %2396 = vmatpush1.bf16.msra.mxu0 0
    %2397 = vmatprep.subr.bf16.mxu0 0
    %2398 = vmatpush1.bf16.msra.mxu0 0
    %2399 = vmatprep.subr.bf16.mxu0 0
    %2400 = vmatpush1.bf16.msra.mxu0 0
    %2401 = vmatprep.subr.bf16.mxu0 0
    %2402 = vmatpush1.bf16.msra.mxu0 0
    %2403 = vmatprep.subr.bf16.mxu0 0
    %2404 = vmatpush1.bf16.msra.mxu0 0
    %2405 = vmatprep.subr.bf16.mxu0 0
    %2406 = vmatpush1.bf16.msra.mxu0 0
    %2407 = vmatprep.subr.bf16.mxu0 0
    %2408 = vmatpush1.bf16.msra.mxu0 0
    %2409 = vmatprep.mubr.bf16.mxu0 0
    %2410 = vmatmul.mubr.bf16.gmra.mrb[0].mxu0 %v2375
    %v2411 = vpop.f32.mrb[0].mxu0
    %v2412 = vadd.f32 0.0, %v2411
    %v2413 = vpop.f32.mrb[0].mxu0
    %v2414 = vpop.f32.mrb[0].mxu0
    %v2415 = vpop.f32.mrb[0].mxu0
    %2416 = vdwg.mxu0
    %v2418 = vsel %vm2252, %v2359, 0
    %2420 = vmatprep.subr.bf16.mxu0 0
    %2421 = vmatpush1.bf16.msra.mxu0 %v2367
    %2422 = vmatprep.subr.bf16.mxu0 0
    %2423 = vmatpush1.bf16.msra.mxu0 0
    %2424 = vmatprep.subr.bf16.mxu0 0
    %2425 = vmatpush1.bf16.msra.mxu0 0
    %2426 = vmatprep.subr.bf16.mxu0 0
    %2427 = vmatpush1.bf16.msra.mxu0 0
    %2428 = vmatprep.subr.bf16.mxu0 0
    %2429 = vmatpush1.bf16.msra.mxu0 0
    %2430 = vmatprep.subr.bf16.mxu0 0
    %2431 = vmatpush1.bf16.msra.mxu0 0
    %2432 = vmatprep.subr.bf16.mxu0 0
    %2433 = vmatpush1.bf16.msra.mxu0 0
    %2434 = vmatprep.subr.bf16.mxu0 0
    %2435 = vmatpush1.bf16.msra.mxu0 0
    %2436 = vmatprep.subr.bf16.mxu0 0
    %2437 = vmatpush1.bf16.msra.mxu0 0
    %2438 = vmatprep.subr.bf16.mxu0 0
    %2439 = vmatpush1.bf16.msra.mxu0 0
    %2440 = vmatprep.subr.bf16.mxu0 0
    %2441 = vmatpush1.bf16.msra.mxu0 0
    %2442 = vmatprep.subr.bf16.mxu0 0
    %2443 = vmatpush1.bf16.msra.mxu0 0
    %2444 = vmatprep.subr.bf16.mxu0 0
    %2445 = vmatpush1.bf16.msra.mxu0 0
    %2446 = vmatprep.subr.bf16.mxu0 0
    %2447 = vmatpush1.bf16.msra.mxu0 0
    %2448 = vmatprep.subr.bf16.mxu0 0
    %2449 = vmatpush1.bf16.msra.mxu0 0
    %2450 = vmatprep.subr.bf16.mxu0 0
    %2451 = vmatpush1.bf16.msra.mxu0 0
    %2452 = vmatprep.mubr.bf16.mxu0 0
    %2453 = vmatmul.mubr.bf16.gmra.mrb[0].mxu0 %v2418
    %v2454 = vpop.f32.mrb[0].mxu0
    %v2455 = vadd.f32 0.0, %v2454
    %v2456 = vpop.f32.mrb[0].mxu0
    %v2457 = vpop.f32.mrb[0].mxu0
    %v2458 = vpop.f32.mrb[0].mxu0
    %2459 = vdwg.mxu0
    %v2461 = vsel %vm2252, %v2360, 0
    %2463 = vmatprep.subr.bf16.mxu0 0
    %2464 = vmatpush1.bf16.msra.mxu0 %v2368
    %2465 = vmatprep.subr.bf16.mxu0 0
    %2466 = vmatpush1.bf16.msra.mxu0 0
    %2467 = vmatprep.subr.bf16.mxu0 0
    %2468 = vmatpush1.bf16.msra.mxu0 0
    %2469 = vmatprep.subr.bf16.mxu0 0
    %2470 = vmatpush1.bf16.msra.mxu0 0
    %2471 = vmatprep.subr.bf16.mxu0 0
    %2472 = vmatpush1.bf16.msra.mxu0 0
    %2473 = vmatprep.subr.bf16.mxu0 0
    %2474 = vmatpush1.bf16.msra.mxu0 0
    %2475 = vmatprep.subr.bf16.mxu0 0
    %2476 = vmatpush1.bf16.msra.mxu0 0
    %2477 = vmatprep.subr.bf16.mxu0 0
    %2478 = vmatpush1.bf16.msra.mxu0 0
    %2479 = vmatprep.subr.bf16.mxu0 0
    %2480 = vmatpush1.bf16.msra.mxu0 0
    %2481 = vmatprep.subr.bf16.mxu0 0
    %2482 = vmatpush1.bf16.msra.mxu0 0
    %2483 = vmatprep.subr.bf16.mxu0 0
    %2484 = vmatpush1.bf16.msra.mxu0 0
    %2485 = vmatprep.subr.bf16.mxu0 0
    %2486 = vmatpush1.bf16.msra.mxu0 0
    %2487 = vmatprep.subr.bf16.mxu0 0
    %2488 = vmatpush1.bf16.msra.mxu0 0
    %2489 = vmatprep.subr.bf16.mxu0 0
    %2490 = vmatpush1.bf16.msra.mxu0 0
    %2491 = vmatprep.subr.bf16.mxu0 0
    %2492 = vmatpush1.bf16.msra.mxu0 0
    %2493 = vmatprep.subr.bf16.mxu0 0
    %2494 = vmatpush1.bf16.msra.mxu0 0
    %2495 = vmatprep.mubr.bf16.mxu0 0
    %2496 = vmatmul.mubr.bf16.gmra.mrb[0].mxu0 %v2461
    %v2497 = vpop.f32.mrb[0].mxu0
    %v2498 = vadd.f32 0.0, %v2497
    %v2499 = vpop.f32.mrb[0].mxu0
    %v2500 = vpop.f32.mrb[0].mxu0
    %v2501 = vpop.f32.mrb[0].mxu0
    %2502 = vdwg.mxu0
    %v2504 = vsel %vm2252, %v2361, 0
    %2506 = vmatprep.subr.bf16.mxu0 0
    %2507 = vmatpush1.bf16.msra.mxu0 %v2369
    %2508 = vmatprep.subr.bf16.mxu0 0
    %2509 = vmatpush1.bf16.msra.mxu0 0
    %2510 = vmatprep.subr.bf16.mxu0 0
    %2511 = vmatpush1.bf16.msra.mxu0 0
    %2512 = vmatprep.subr.bf16.mxu0 0
    %2513 = vmatpush1.bf16.msra.mxu0 0
    %2514 = vmatprep.subr.bf16.mxu0 0
    %2515 = vmatpush1.bf16.msra.mxu0 0
    %2516 = vmatprep.subr.bf16.mxu0 0
    %2517 = vmatpush1.bf16.msra.mxu0 0
    %2518 = vmatprep.subr.bf16.mxu0 0
    %2519 = vmatpush1.bf16.msra.mxu0 0
    %2520 = vmatprep.subr.bf16.mxu0 0
    %2521 = vmatpush1.bf16.msra.mxu0 0
    %2522 = vmatprep.subr.bf16.mxu0 0
    %2523 = vmatpush1.bf16.msra.mxu0 0
    %2524 = vmatprep.subr.bf16.mxu0 0
    %2525 = vmatpush1.bf16.msra.mxu0 0
    %2526 = vmatprep.subr.bf16.mxu0 0
    %2527 = vmatpush1.bf16.msra.mxu0 0
    %2528 = vmatprep.subr.bf16.mxu0 0
    %2529 = vmatpush1.bf16.msra.mxu0 0
    %2530 = vmatprep.subr.bf16.mxu0 0
    %2531 = vmatpush1.bf16.msra.mxu0 0
    %2532 = vmatprep.subr.bf16.mxu0 0
    %2533 = vmatpush1.bf16.msra.mxu0 0
    %2534 = vmatprep.subr.bf16.mxu0 0
    %2535 = vmatpush1.bf16.msra.mxu0 0
    %2536 = vmatprep.subr.bf16.mxu0 0
    %2537 = vmatpush1.bf16.msra.mxu0 0
    %2538 = vmatprep.mubr.bf16.mxu0 0
    %2539 = vmatmul.mubr.bf16.gmra.mrb[0].mxu0 %v2504
    %v2540 = vpop.f32.mrb[0].mxu0
    %v2541 = vadd.f32 0.0, %v2540
    %v2542 = vpop.f32.mrb[0].mxu0
    %v2543 = vpop.f32.mrb[0].mxu0
    %v2544 = vpop.f32.mrb[0].mxu0
    %2545 = vdwg.mxu0
    %v2547 = vsel %vm2252, %v2362, 0
    %2549 = vmatprep.subr.bf16.mxu0 0
    %2550 = vmatpush1.bf16.msra.mxu0 %v2370
    %2551 = vmatprep.subr.bf16.mxu0 0
    %2552 = vmatpush1.bf16.msra.mxu0 0
    %2553 = vmatprep.subr.bf16.mxu0 0
    %2554 = vmatpush1.bf16.msra.mxu0 0
    %2555 = vmatprep.subr.bf16.mxu0 0
    %2556 = vmatpush1.bf16.msra.mxu0 0
    %2557 = vmatprep.subr.bf16.mxu0 0
    %2558 = vmatpush1.bf16.msra.mxu0 0
    %2559 = vmatprep.subr.bf16.mxu0 0
    %2560 = vmatpush1.bf16.msra.mxu0 0
    %2561 = vmatprep.subr.bf16.mxu0 0
    %2562 = vmatpush1.bf16.msra.mxu0 0
    %2563 = vmatprep.subr.bf16.mxu0 0
    %2564 = vmatpush1.bf16.msra.mxu0 0
    %2565 = vmatprep.subr.bf16.mxu0 0
    %2566 = vmatpush1.bf16.msra.mxu0 0
    %2567 = vmatprep.subr.bf16.mxu0 0
    %2568 = vmatpush1.bf16.msra.mxu0 0
    %2569 = vmatprep.subr.bf16.mxu0 0
    %2570 = vmatpush1.bf16.msra.mxu0 0
    %2571 = vmatprep.subr.bf16.mxu0 0
    %2572 = vmatpush1.bf16.msra.mxu0 0
    %2573 = vmatprep.subr.bf16.mxu0 0
    %2574 = vmatpush1.bf16.msra.mxu0 0
    %2575 = vmatprep.subr.bf16.mxu0 0
    %2576 = vmatpush1.bf16.msra.mxu0 0
    %2577 = vmatprep.subr.bf16.mxu0 0
    %2578 = vmatpush1.bf16.msra.mxu0 0
    %2579 = vmatprep.subr.bf16.mxu0 0
    %2580 = vmatpush1.bf16.msra.mxu0 0
    %2581 = vmatprep.mubr.bf16.mxu0 0
    %2582 = vmatmul.mubr.bf16.gmra.mrb[0].mxu0 %v2547
    %v2583 = vpop.f32.mrb[0].mxu0
    %v2584 = vadd.f32 0.0, %v2583
    %v2585 = vpop.f32.mrb[0].mxu0
    %v2586 = vpop.f32.mrb[0].mxu0
    %v2587 = vpop.f32.mrb[0].mxu0
    %2588 = vdwg.mxu0
    %v2590 = vsel %vm2252, %v2363, 0
    %2592 = vmatprep.subr.bf16.mxu0 0
    %2593 = vmatpush1.bf16.msra.mxu0 %v2371
    %2594 = vmatprep.subr.bf16.mxu0 0
    %2595 = vmatpush1.bf16.msra.mxu0 0
    %2596 = vmatprep.subr.bf16.mxu0 0
    %2597 = vmatpush1.bf16.msra.mxu0 0
    %2598 = vmatprep.subr.bf16.mxu0 0
    %2599 = vmatpush1.bf16.msra.mxu0 0
    %2600 = vmatprep.subr.bf16.mxu0 0
    %2601 = vmatpush1.bf16.msra.mxu0 0
    %2602 = vmatprep.subr.bf16.mxu0 0
    %2603 = vmatpush1.bf16.msra.mxu0 0
    %2604 = vmatprep.subr.bf16.mxu0 0
    %2605 = vmatpush1.bf16.msra.mxu0 0
    %2606 = vmatprep.subr.bf16.mxu0 0
    %2607 = vmatpush1.bf16.msra.mxu0 0
    %2608 = vmatprep.subr.bf16.mxu0 0
    %2609 = vmatpush1.bf16.msra.mxu0 0
    %2610 = vmatprep.subr.bf16.mxu0 0
    %2611 = vmatpush1.bf16.msra.mxu0 0
    %2612 = vmatprep.subr.bf16.mxu0 0
    %2613 = vmatpush1.bf16.msra.mxu0 0
    %2614 = vmatprep.subr.bf16.mxu0 0
    %2615 = vmatpush1.bf16.msra.mxu0 0
    %2616 = vmatprep.subr.bf16.mxu0 0
    %2617 = vmatpush1.bf16.msra.mxu0 0
    %2618 = vmatprep.subr.bf16.mxu0 0
    %2619 = vmatpush1.bf16.msra.mxu0 0
    %2620 = vmatprep.subr.bf16.mxu0 0
    %2621 = vmatpush1.bf16.msra.mxu0 0
    %2622 = vmatprep.subr.bf16.mxu0 0
    %2623 = vmatpush1.bf16.msra.mxu0 0
    %2624 = vmatprep.mubr.bf16.mxu0 0
    %2625 = vmatmul.mubr.bf16.gmra.mrb[0].mxu0 %v2590
    %v2626 = vpop.f32.mrb[0].mxu0
    %v2627 = vadd.f32 0.0, %v2626
    %v2628 = vpop.f32.mrb[0].mxu0
    %v2629 = vpop.f32.mrb[0].mxu0
    %v2630 = vpop.f32.mrb[0].mxu0
    %2631 = vdwg.mxu0
    %v2633 = vsel %vm2252, %v2364, 0
    %2635 = vmatprep.subr.bf16.mxu0 0
    %2636 = vmatpush1.bf16.msra.mxu0 %v2372
    %2637 = vmatprep.subr.bf16.mxu0 0
    %2638 = vmatpush1.bf16.msra.mxu0 0
    %2639 = vmatprep.subr.bf16.mxu0 0
    %2640 = vmatpush1.bf16.msra.mxu0 0
    %2641 = vmatprep.subr.bf16.mxu0 0
    %2642 = vmatpush1.bf16.msra.mxu0 0
    %2643 = vmatprep.subr.bf16.mxu0 0
    %2644 = vmatpush1.bf16.msra.mxu0 0
    %2645 = vmatprep.subr.bf16.mxu0 0
    %2646 = vmatpush1.bf16.msra.mxu0 0
    %2647 = vmatprep.subr.bf16.mxu0 0
    %2648 = vmatpush1.bf16.msra.mxu0 0
    %2649 = vmatprep.subr.bf16.mxu0 0
    %2650 = vmatpush1.bf16.msra.mxu0 0
    %2651 = vmatprep.subr.bf16.mxu0 0
    %2652 = vmatpush1.bf16.msra.mxu0 0
    %2653 = vmatprep.subr.bf16.mxu0 0
    %2654 = vmatpush1.bf16.msra.mxu0 0
    %2655 = vmatprep.subr.bf16.mxu0 0
    %2656 = vmatpush1.bf16.msra.mxu0 0
    %2657 = vmatprep.subr.bf16.mxu0 0
    %2658 = vmatpush1.bf16.msra.mxu0 0
    %2659 = vmatprep.subr.bf16.mxu0 0
    %2660 = vmatpush1.bf16.msra.mxu0 0
    %2661 = vmatprep.subr.bf16.mxu0 0
    %2662 = vmatpush1.bf16.msra.mxu0 0
    %2663 = vmatprep.subr.bf16.mxu0 0
    %2664 = vmatpush1.bf16.msra.mxu0 0
    %2665 = vmatprep.subr.bf16.mxu0 0
    %2666 = vmatpush1.bf16.msra.mxu0 0
    %2667 = vmatprep.mubr.bf16.mxu0 0
    %2668 = vmatmul.mubr.bf16.gmra.mrb[0].mxu0 %v2633
    %v2669 = vpop.f32.mrb[0].mxu0
    %v2670 = vadd.f32 0.0, %v2669
    %v2671 = vpop.f32.mrb[0].mxu0
    %v2672 = vpop.f32.mrb[0].mxu0
    %v2673 = vpop.f32.mrb[0].mxu0
    %2674 = vdwg.mxu0
    %v2676 = vsel %vm2252, %v2365, 0
    %2678 = vmatprep.subr.bf16.mxu0 0
    %2679 = vmatpush1.bf16.msra.mxu0 %v2373
    %2680 = vmatprep.subr.bf16.mxu0 0
    %2681 = vmatpush1.bf16.msra.mxu0 0
    %2682 = vmatprep.subr.bf16.mxu0 0
    %2683 = vmatpush1.bf16.msra.mxu0 0
    %2684 = vmatprep.subr.bf16.mxu0 0
    %2685 = vmatpush1.bf16.msra.mxu0 0
    %2686 = vmatprep.subr.bf16.mxu0 0
    %2687 = vmatpush1.bf16.msra.mxu0 0
    %2688 = vmatprep.subr.bf16.mxu0 0
    %2689 = vmatpush1.bf16.msra.mxu0 0
    %2690 = vmatprep.subr.bf16.mxu0 0
    %2691 = vmatpush1.bf16.msra.mxu0 0
    %2692 = vmatprep.subr.bf16.mxu0 0
    %2693 = vmatpush1.bf16.msra.mxu0 0
    %2694 = vmatprep.subr.bf16.mxu0 0
    %2695 = vmatpush1.bf16.msra.mxu0 0
    %2696 = vmatprep.subr.bf16.mxu0 0
    %2697 = vmatpush1.bf16.msra.mxu0 0
    %2698 = vmatprep.subr.bf16.mxu0 0
    %2699 = vmatpush1.bf16.msra.mxu0 0
    %2700 = vmatprep.subr.bf16.mxu0 0
    %2701 = vmatpush1.bf16.msra.mxu0 0
    %2702 = vmatprep.subr.bf16.mxu0 0
    %2703 = vmatpush1.bf16.msra.mxu0 0
    %2704 = vmatprep.subr.bf16.mxu0 0
    %2705 = vmatpush1.bf16.msra.mxu0 0
    %2706 = vmatprep.subr.bf16.mxu0 0
    %2707 = vmatpush1.bf16.msra.mxu0 0
    %2708 = vmatprep.subr.bf16.mxu0 0
    %2709 = vmatpush1.bf16.msra.mxu0 0
    %2710 = vmatprep.mubr.bf16.mxu0 0
    %2711 = vmatmul.mubr.bf16.gmra.mrb[0].mxu0 %v2676
    %v2712 = vpop.f32.mrb[0].mxu0
    %v2713 = vadd.f32 0.0, %v2712
    %v2714 = vpop.f32.mrb[0].mxu0
    %v2715 = vpop.f32.mrb[0].mxu0
    %v2716 = vpop.f32.mrb[0].mxu0
    %2717 = vdwg.mxu0
    %v2718 = vcombine.low %v2412, %v2498
    %v2719 = vcombine.high %v2412, %v2498
    %v2721 = vunpack.c.l.s4 1983009808
    %v2722 = vunpack.c.0.s8 %v2721
    %v2723 = vlaneseq
    %v2724 = vshrl.u32 %v2723, 7
    %v2725 = vsub.s32 %v2722, %v2724
    %v2726 = vrot.slane %v2718, %v2725
    %v2728 = vunpack.c.l.s4 1983009808
    %v2729 = vunpack.c.0.s8 %v2728
    %v2730 = vlaneseq
    %v2731 = vshrl.u32 %v2730, 7
    %v2732 = vsub.s32 %v2729, %v2731
    %v2733 = vrot.slane %v2719, %v2732
    %v2734 = vcombine.low %v2455, %v2541
    %v2735 = vcombine.high %v2455, %v2541
    %v2737 = vunpack.c.l.s4 1983009808
    %v2738 = vunpack.c.0.s8 %v2737
    %v2739 = vlaneseq
    %v2740 = vshrl.u32 %v2739, 7
    %v2741 = vsub.s32 %v2738, %v2740
    %v2742 = vrot.slane %v2734, %v2741
    %v2744 = vunpack.c.l.s4 1983009808
    %v2745 = vunpack.c.0.s8 %v2744
    %v2746 = vlaneseq
    %v2747 = vshrl.u32 %v2746, 7
    %v2748 = vsub.s32 %v2745, %v2747
    %v2749 = vrot.slane %v2735, %v2748
    %v2750 = vcombine.low %v2584, %v2670
    %v2751 = vcombine.high %v2584, %v2670
    %v2753 = vunpack.c.l.s4 1983009808
    %v2754 = vunpack.c.0.s8 %v2753
    %v2755 = vlaneseq
    %v2756 = vshrl.u32 %v2755, 7
    %v2757 = vsub.s32 %v2754, %v2756
    %v2758 = vrot.slane %v2750, %v2757
    %v2760 = vunpack.c.l.s4 1983009808
    %v2761 = vunpack.c.0.s8 %v2760
    %v2762 = vlaneseq
    %v2763 = vshrl.u32 %v2762, 7
    %v2764 = vsub.s32 %v2761, %v2763
    %v2765 = vrot.slane %v2751, %v2764
    %v2766 = vcombine.low %v2627, %v2713
    %v2767 = vcombine.high %v2627, %v2713
    %v2769 = vunpack.c.l.s4 1983009808
    %v2770 = vunpack.c.0.s8 %v2769
    %v2771 = vlaneseq
    %v2772 = vshrl.u32 %v2771, 7
    %v2773 = vsub.s32 %v2770, %v2772
    %v2774 = vrot.slane %v2766, %v2773
    %v2776 = vunpack.c.l.s4 1983009808
    %v2777 = vunpack.c.0.s8 %v2776
    %v2778 = vlaneseq
    %v2779 = vshrl.u32 %v2778, 7
    %v2780 = vsub.s32 %v2777, %v2779
    %v2781 = vrot.slane %v2767, %v2780
    %v2782 = vcombine.low %v2726, %v2742
    %v2783 = vcombine.high %v2726, %v2742
    %v2785 = vunpack.c.l.s4 1934713408
    %v2786 = vunpack.c.0.s8 %v2785
    %v2787 = vlaneseq
    %v2788 = vshrl.u32 %v2787, 7
    %v2789 = vsub.s32 %v2786, %v2788
    %v2790 = vrot.slane %v2782, %v2789
    %v2792 = vunpack.c.l.s4 1934713408
    %v2793 = vunpack.c.0.s8 %v2792
    %v2794 = vlaneseq
    %v2795 = vshrl.u32 %v2794, 7
    %v2796 = vsub.s32 %v2793, %v2795
    %v2797 = vrot.slane %v2783, %v2796
    %v2798 = vcombine.low %v2733, %v2749
    %v2799 = vcombine.high %v2733, %v2749
    %v2801 = vunpack.c.l.s4 1934713408
    %v2802 = vunpack.c.0.s8 %v2801
    %v2803 = vlaneseq
    %v2804 = vshrl.u32 %v2803, 7
    %v2805 = vsub.s32 %v2802, %v2804
    %v2806 = vrot.slane %v2798, %v2805
    %v2808 = vunpack.c.l.s4 1934713408
    %v2809 = vunpack.c.0.s8 %v2808
    %v2810 = vlaneseq
    %v2811 = vshrl.u32 %v2810, 7
    %v2812 = vsub.s32 %v2809, %v2811
    %v2813 = vrot.slane %v2799, %v2812
    %v2814 = vcombine.low %v2758, %v2774
    %v2815 = vcombine.high %v2758, %v2774
    %v2817 = vunpack.c.l.s4 1934713408
    %v2818 = vunpack.c.0.s8 %v2817
    %v2819 = vlaneseq
    %v2820 = vshrl.u32 %v2819, 7
    %v2821 = vsub.s32 %v2818, %v2820
    %v2822 = vrot.slane %v2814, %v2821
    %v2824 = vunpack.c.l.s4 1934713408
    %v2825 = vunpack.c.0.s8 %v2824
    %v2826 = vlaneseq
    %v2827 = vshrl.u32 %v2826, 7
    %v2828 = vsub.s32 %v2825, %v2827
    %v2829 = vrot.slane %v2815, %v2828
    %v2830 = vcombine.low %v2765, %v2781
    %v2831 = vcombine.high %v2765, %v2781
    %v2833 = vunpack.c.l.s4 1934713408
    %v2834 = vunpack.c.0.s8 %v2833
    %v2835 = vlaneseq
    %v2836 = vshrl.u32 %v2835, 7
    %v2837 = vsub.s32 %v2834, %v2836
    %v2838 = vrot.slane %v2830, %v2837
    %v2840 = vunpack.c.l.s4 1934713408
    %v2841 = vunpack.c.0.s8 %v2840
    %v2842 = vlaneseq
    %v2843 = vshrl.u32 %v2842, 7
    %v2844 = vsub.s32 %v2841, %v2843
    %v2845 = vrot.slane %v2831, %v2844
    %v2846 = vcombine.low %v2790, %v2822
    %v2847 = vcombine.high %v2790, %v2822
    %v2848 = vcombine.low %v2797, %v2829
    %v2849 = vcombine.high %v2797, %v2829
    %v2850 = vcombine.low %v2806, %v2838
    %v2851 = vcombine.high %v2806, %v2838
    %v2852 = vcombine.low %v2813, %v2845
    %v2853 = vcombine.high %v2813, %v2845
    %v2854 = vcombine.low %v2846, %v2848
    %v2855 = vcombine.high %v2846, %v2848
    %v2857 = vunpack.c.l.s4 1983009808
    %v2858 = vunpack.c.0.s8 %v2857
    %v2859 = vlaneseq
    %v2860 = vshrl.u32 %v2859, 7
    %v2861 = vsub.s32 %v2858, %v2860
    %v2862 = vrot.slane %v2854, %v2861
    %v2864 = vunpack.c.l.s4 1983009808
    %v2865 = vunpack.c.0.s8 %v2864
    %v2866 = vlaneseq
    %v2867 = vshrl.u32 %v2866, 7
    %v2868 = vsub.s32 %v2865, %v2867
    %v2869 = vrot.slane %v2855, %v2868
    %v2870 = vcombine.low %v2847, %v2849
    %v2871 = vcombine.high %v2847, %v2849
    %v2873 = vunpack.c.l.s4 1983009808
    %v2874 = vunpack.c.0.s8 %v2873
    %v2875 = vlaneseq
    %v2876 = vshrl.u32 %v2875, 7
    %v2877 = vsub.s32 %v2874, %v2876
    %v2878 = vrot.slane %v2870, %v2877
    %v2880 = vunpack.c.l.s4 1983009808
    %v2881 = vunpack.c.0.s8 %v2880
    %v2882 = vlaneseq
    %v2883 = vshrl.u32 %v2882, 7
    %v2884 = vsub.s32 %v2881, %v2883
    %v2885 = vrot.slane %v2871, %v2884
    %v2886 = vcombine.low %v2850, %v2852
    %v2887 = vcombine.high %v2850, %v2852
    %v2889 = vunpack.c.l.s4 1983009808
    %v2890 = vunpack.c.0.s8 %v2889
    %v2891 = vlaneseq
    %v2892 = vshrl.u32 %v2891, 7
    %v2893 = vsub.s32 %v2890, %v2892
    %v2894 = vrot.slane %v2886, %v2893
    %v2896 = vunpack.c.l.s4 1983009808
    %v2897 = vunpack.c.0.s8 %v2896
    %v2898 = vlaneseq
    %v2899 = vshrl.u32 %v2898, 7
    %v2900 = vsub.s32 %v2897, %v2899
    %v2901 = vrot.slane %v2887, %v2900
    %v2902 = vcombine.low %v2851, %v2853
    %v2903 = vcombine.high %v2851, %v2853
    %v2905 = vunpack.c.l.s4 1983009808
    %v2906 = vunpack.c.0.s8 %v2905
    %v2907 = vlaneseq
    %v2908 = vshrl.u32 %v2907, 7
    %v2909 = vsub.s32 %v2906, %v2908
    %v2910 = vrot.slane %v2902, %v2909
    %v2912 = vunpack.c.l.s4 1983009808
    %v2913 = vunpack.c.0.s8 %v2912
    %v2914 = vlaneseq
    %v2915 = vshrl.u32 %v2914, 7
    %v2916 = vsub.s32 %v2913, %v2915
    %v2917 = vrot.slane %v2903, %v2916
    %v2918 = vcombine.low %v2862, %v2878
    %v2919 = vcombine.high %v2862, %v2878
    %v2921 = vunpack.c.l.s4 1934713408
    %v2922 = vunpack.c.0.s8 %v2921
    %v2923 = vlaneseq
    %v2924 = vshrl.u32 %v2923, 7
    %v2925 = vsub.s32 %v2922, %v2924
    %v2926 = vrot.slane %v2918, %v2925
    %v2928 = vunpack.c.l.s4 1934713408
    %v2929 = vunpack.c.0.s8 %v2928
    %v2930 = vlaneseq
    %v2931 = vshrl.u32 %v2930, 7
    %v2932 = vsub.s32 %v2929, %v2931
    %v2933 = vrot.slane %v2919, %v2932
    %v2934 = vcombine.low %v2869, %v2885
    %v2935 = vcombine.high %v2869, %v2885
    %v2937 = vunpack.c.l.s4 1934713408
    %v2938 = vunpack.c.0.s8 %v2937
    %v2939 = vlaneseq
    %v2940 = vshrl.u32 %v2939, 7
    %v2941 = vsub.s32 %v2938, %v2940
    %v2942 = vrot.slane %v2934, %v2941
    %v2944 = vunpack.c.l.s4 1934713408
    %v2945 = vunpack.c.0.s8 %v2944
    %v2946 = vlaneseq
    %v2947 = vshrl.u32 %v2946, 7
    %v2948 = vsub.s32 %v2945, %v2947
    %v2949 = vrot.slane %v2935, %v2948
    %v2950 = vcombine.low %v2894, %v2910
    %v2951 = vcombine.high %v2894, %v2910
    %v2953 = vunpack.c.l.s4 1934713408
    %v2954 = vunpack.c.0.s8 %v2953
    %v2955 = vlaneseq
    %v2956 = vshrl.u32 %v2955, 7
    %v2957 = vsub.s32 %v2954, %v2956
    %v2958 = vrot.slane %v2950, %v2957
    %v2960 = vunpack.c.l.s4 1934713408
    %v2961 = vunpack.c.0.s8 %v2960
    %v2962 = vlaneseq
    %v2963 = vshrl.u32 %v2962, 7
    %v2964 = vsub.s32 %v2961, %v2963
    %v2965 = vrot.slane %v2951, %v2964
    %v2966 = vcombine.low %v2901, %v2917
    %v2967 = vcombine.high %v2901, %v2917
    %v2969 = vunpack.c.l.s4 1934713408
    %v2970 = vunpack.c.0.s8 %v2969
    %v2971 = vlaneseq
    %v2972 = vshrl.u32 %v2971, 7
    %v2973 = vsub.s32 %v2970, %v2972
    %v2974 = vrot.slane %v2966, %v2973
    %v2976 = vunpack.c.l.s4 1934713408
    %v2977 = vunpack.c.0.s8 %v2976
    %v2978 = vlaneseq
    %v2979 = vshrl.u32 %v2978, 7
    %v2980 = vsub.s32 %v2977, %v2979
    %v2981 = vrot.slane %v2967, %v2980
    %v2982 = vcombine.low %v2926, %v2958
    %v2983 = vcombine.high %v2926, %v2958
    %v2984 = vcombine.low %v2933, %v2965
    %v2985 = vcombine.high %v2933, %v2965
    %v2986 = vcombine.low %v2942, %v2974
    %v2987 = vcombine.high %v2942, %v2974
    %v2988 = vcombine.low %v2949, %v2981
    %v2989 = vcombine.high %v2949, %v2981
    %2991 = vrot.lane.b32.xlu0 %v2983, 8
    %v2992 = vpop.permute.xlu0 %2991
    %2995 = vrot.lane.b32.xlu0 %v2984, 16
    %v2996 = vpop.permute.xlu0 %2995
    %2999 = vrot.lane.b32.xlu0 %v2985, 24
    %v3000 = vpop.permute.xlu0 %2999
    %3003 = vrot.lane.b32.xlu0 %v2986, 32
    %v3004 = vpop.permute.xlu0 %3003
    %3007 = vrot.lane.b32.xlu0 %v2987, 40
    %v3008 = vpop.permute.xlu0 %3007
    %3011 = vrot.lane.b32.xlu0 %v2988, 48
    %v3012 = vpop.permute.xlu0 %3011
    %3015 = vrot.lane.b32.xlu0 %v2989, 56
    %v3016 = vpop.permute.xlu0 %3015
    %v3018 = vsel %vm1883, %v2982, %v2992
    %v3019 = vsel %vm2252, %v3018, %v2996
    %vm3020 = vcmask 195584
    %v3021 = vsel %vm3020, %v3019, %v3000
    %vm3022 = vcmask 261120
    %v3023 = vsel %vm3022, %v3021, %v3004
    %vm3024 = vcmask 326656
    %v3025 = vsel %vm3024, %v3023, %v3008
    %vm3026 = vcmask 392192
    %v3027 = vsel %vm3026, %v3025, %v3012
    %vm3028 = vcmask 457728
    %v3029 = vsel %vm3028, %v3027, %v3016
    %3031 = vrot.lane.b32.xlu0 %v222, 120
    %v3032 = vpop.permute.xlu0 %3031
    %3034 = vrot.lane.b32.xlu0 %v222, 112
    %v3035 = vpop.permute.xlu0 %3034
    %3037 = vrot.lane.b32.xlu0 %v222, 104
    %v3038 = vpop.permute.xlu0 %3037
    %3040 = vrot.lane.b32.xlu0 %v222, 96
    %v3041 = vpop.permute.xlu0 %3040
    %3043 = vrot.lane.b32.xlu0 %v222, 88
    %v3044 = vpop.permute.xlu0 %3043
    %3046 = vrot.lane.b32.xlu0 %v222, 80
    %v3047 = vpop.permute.xlu0 %3046
    %3049 = vrot.lane.b32.xlu0 %v222, 72
    %v3050 = vpop.permute.xlu0 %3049
    %v3052 = vcombine.low %v222, %v3035
    %v3053 = vcombine.high %v222, %v3035
    %v3055 = vunpack.c.l.s4 1983009808
    %v3056 = vunpack.c.0.s8 %v3055
    %v3057 = vlaneseq
    %v3058 = vshrl.u32 %v3057, 7
    %v3059 = vsub.s32 %v3056, %v3058
    %v3060 = vrot.slane %v3052, %v3059
    %v3062 = vunpack.c.l.s4 1983009808
    %v3063 = vunpack.c.0.s8 %v3062
    %v3064 = vlaneseq
    %v3065 = vshrl.u32 %v3064, 7
    %v3066 = vsub.s32 %v3063, %v3065
    %v3067 = vrot.slane %v3053, %v3066
    %v3068 = vcombine.low %v3032, %v3038
    %v3069 = vcombine.high %v3032, %v3038
    %v3071 = vunpack.c.l.s4 1983009808
    %v3072 = vunpack.c.0.s8 %v3071
    %v3073 = vlaneseq
    %v3074 = vshrl.u32 %v3073, 7
    %v3075 = vsub.s32 %v3072, %v3074
    %v3076 = vrot.slane %v3068, %v3075
    %v3078 = vunpack.c.l.s4 1983009808
    %v3079 = vunpack.c.0.s8 %v3078
    %v3080 = vlaneseq
    %v3081 = vshrl.u32 %v3080, 7
    %v3082 = vsub.s32 %v3079, %v3081
    %v3083 = vrot.slane %v3069, %v3082
    %v3084 = vcombine.low %v3041, %v3047
    %v3085 = vcombine.high %v3041, %v3047
    %v3087 = vunpack.c.l.s4 1983009808
    %v3088 = vunpack.c.0.s8 %v3087
    %v3089 = vlaneseq
    %v3090 = vshrl.u32 %v3089, 7
    %v3091 = vsub.s32 %v3088, %v3090
    %v3092 = vrot.slane %v3084, %v3091
    %v3094 = vunpack.c.l.s4 1983009808
    %v3095 = vunpack.c.0.s8 %v3094
    %v3096 = vlaneseq
    %v3097 = vshrl.u32 %v3096, 7
    %v3098 = vsub.s32 %v3095, %v3097
    %v3099 = vrot.slane %v3085, %v3098
    %v3100 = vcombine.low %v3044, %v3050
    %v3101 = vcombine.high %v3044, %v3050
    %v3103 = vunpack.c.l.s4 1983009808
    %v3104 = vunpack.c.0.s8 %v3103
    %v3105 = vlaneseq
    %v3106 = vshrl.u32 %v3105, 7
    %v3107 = vsub.s32 %v3104, %v3106
    %v3108 = vrot.slane %v3100, %v3107
    %v3110 = vunpack.c.l.s4 1983009808
    %v3111 = vunpack.c.0.s8 %v3110
    %v3112 = vlaneseq
    %v3113 = vshrl.u32 %v3112, 7
    %v3114 = vsub.s32 %v3111, %v3113
    %v3115 = vrot.slane %v3101, %v3114
    %v3116 = vcombine.low %v3060, %v3076
    %v3117 = vcombine.high %v3060, %v3076
    %v3119 = vunpack.c.l.s4 1934713408
    %v3120 = vunpack.c.0.s8 %v3119
    %v3121 = vlaneseq
    %v3122 = vshrl.u32 %v3121, 7
    %v3123 = vsub.s32 %v3120, %v3122
    %v3124 = vrot.slane %v3116, %v3123
    %v3126 = vunpack.c.l.s4 1934713408
    %v3127 = vunpack.c.0.s8 %v3126
    %v3128 = vlaneseq
    %v3129 = vshrl.u32 %v3128, 7
    %v3130 = vsub.s32 %v3127, %v3129
    %v3131 = vrot.slane %v3117, %v3130
    %v3132 = vcombine.low %v3067, %v3083
    %v3133 = vcombine.high %v3067, %v3083
    %v3135 = vunpack.c.l.s4 1934713408
    %v3136 = vunpack.c.0.s8 %v3135
    %v3137 = vlaneseq
    %v3138 = vshrl.u32 %v3137, 7
    %v3139 = vsub.s32 %v3136, %v3138
    %v3140 = vrot.slane %v3132, %v3139
    %v3142 = vunpack.c.l.s4 1934713408
    %v3143 = vunpack.c.0.s8 %v3142
    %v3144 = vlaneseq
    %v3145 = vshrl.u32 %v3144, 7
    %v3146 = vsub.s32 %v3143, %v3145
    %v3147 = vrot.slane %v3133, %v3146
    %v3148 = vcombine.low %v3092, %v3108
    %v3149 = vcombine.high %v3092, %v3108
    %v3151 = vunpack.c.l.s4 1934713408
    %v3152 = vunpack.c.0.s8 %v3151
    %v3153 = vlaneseq
    %v3154 = vshrl.u32 %v3153, 7
    %v3155 = vsub.s32 %v3152, %v3154
    %v3156 = vrot.slane %v3148, %v3155
    %v3158 = vunpack.c.l.s4 1934713408
    %v3159 = vunpack.c.0.s8 %v3158
    %v3160 = vlaneseq
    %v3161 = vshrl.u32 %v3160, 7
    %v3162 = vsub.s32 %v3159, %v3161
    %v3163 = vrot.slane %v3149, %v3162
    %v3164 = vcombine.low %v3099, %v3115
    %v3165 = vcombine.high %v3099, %v3115
    %v3167 = vunpack.c.l.s4 1934713408
    %v3168 = vunpack.c.0.s8 %v3167
    %v3169 = vlaneseq
    %v3170 = vshrl.u32 %v3169, 7
    %v3171 = vsub.s32 %v3168, %v3170
    %v3172 = vrot.slane %v3164, %v3171
    %v3174 = vunpack.c.l.s4 1934713408
    %v3175 = vunpack.c.0.s8 %v3174
    %v3176 = vlaneseq
    %v3177 = vshrl.u32 %v3176, 7
    %v3178 = vsub.s32 %v3175, %v3177
    %v3179 = vrot.slane %v3165, %v3178
    %v3180 = vcombine.low %v3124, %v3156
    %v3181 = vcombine.high %v3124, %v3156
    %v3182 = vcombine.low %v3131, %v3163
    %v3183 = vcombine.high %v3131, %v3163
    %v3184 = vcombine.low %v3140, %v3172
    %v3185 = vcombine.high %v3140, %v3172
    %v3186 = vcombine.low %v3147, %v3179
    %v3187 = vcombine.high %v3147, %v3179
    %v3188 = vcombine.low %v3180, %v3182
    %v3189 = vcombine.high %v3180, %v3182
    %v3191 = vunpack.c.l.s4 1983009808
    %v3192 = vunpack.c.0.s8 %v3191
    %v3193 = vlaneseq
    %v3194 = vshrl.u32 %v3193, 7
    %v3195 = vsub.s32 %v3192, %v3194
    %v3196 = vrot.slane %v3188, %v3195
    %v3198 = vunpack.c.l.s4 1983009808
    %v3199 = vunpack.c.0.s8 %v3198
    %v3200 = vlaneseq
    %v3201 = vshrl.u32 %v3200, 7
    %v3202 = vsub.s32 %v3199, %v3201
    %v3203 = vrot.slane %v3189, %v3202
    %v3204 = vcombine.low %v3181, %v3183
    %v3205 = vcombine.high %v3181, %v3183
    %v3207 = vunpack.c.l.s4 1983009808
    %v3208 = vunpack.c.0.s8 %v3207
    %v3209 = vlaneseq
    %v3210 = vshrl.u32 %v3209, 7
    %v3211 = vsub.s32 %v3208, %v3210
    %v3212 = vrot.slane %v3204, %v3211
    %v3214 = vunpack.c.l.s4 1983009808
    %v3215 = vunpack.c.0.s8 %v3214
    %v3216 = vlaneseq
    %v3217 = vshrl.u32 %v3216, 7
    %v3218 = vsub.s32 %v3215, %v3217
    %v3219 = vrot.slane %v3205, %v3218
    %v3220 = vcombine.low %v3184, %v3186
    %v3221 = vcombine.high %v3184, %v3186
    %v3223 = vunpack.c.l.s4 1983009808
    %v3224 = vunpack.c.0.s8 %v3223
    %v3225 = vlaneseq
    %v3226 = vshrl.u32 %v3225, 7
    %v3227 = vsub.s32 %v3224, %v3226
    %v3228 = vrot.slane %v3220, %v3227
    %v3230 = vunpack.c.l.s4 1983009808
    %v3231 = vunpack.c.0.s8 %v3230
    %v3232 = vlaneseq
    %v3233 = vshrl.u32 %v3232, 7
    %v3234 = vsub.s32 %v3231, %v3233
    %v3235 = vrot.slane %v3221, %v3234
    %v3236 = vcombine.low %v3185, %v3187
    %v3237 = vcombine.high %v3185, %v3187
    %v3239 = vunpack.c.l.s4 1983009808
    %v3240 = vunpack.c.0.s8 %v3239
    %v3241 = vlaneseq
    %v3242 = vshrl.u32 %v3241, 7
    %v3243 = vsub.s32 %v3240, %v3242
    %v3244 = vrot.slane %v3236, %v3243
    %v3246 = vunpack.c.l.s4 1983009808
    %v3247 = vunpack.c.0.s8 %v3246
    %v3248 = vlaneseq
    %v3249 = vshrl.u32 %v3248, 7
    %v3250 = vsub.s32 %v3247, %v3249
    %v3251 = vrot.slane %v3237, %v3250
    %v3252 = vcombine.low %v3196, %v3212
    %v3253 = vcombine.high %v3196, %v3212
    %v3255 = vunpack.c.l.s4 1934713408
    %v3256 = vunpack.c.0.s8 %v3255
    %v3257 = vlaneseq
    %v3258 = vshrl.u32 %v3257, 7
    %v3259 = vsub.s32 %v3256, %v3258
    %v3260 = vrot.slane %v3252, %v3259
    %v3262 = vunpack.c.l.s4 1934713408
    %v3263 = vunpack.c.0.s8 %v3262
    %v3264 = vlaneseq
    %v3265 = vshrl.u32 %v3264, 7
    %v3266 = vsub.s32 %v3263, %v3265
    %v3267 = vrot.slane %v3253, %v3266
    %v3268 = vcombine.low %v3203, %v3219
    %v3269 = vcombine.high %v3203, %v3219
    %v3271 = vunpack.c.l.s4 1934713408
    %v3272 = vunpack.c.0.s8 %v3271
    %v3273 = vlaneseq
    %v3274 = vshrl.u32 %v3273, 7
    %v3275 = vsub.s32 %v3272, %v3274
    %v3276 = vrot.slane %v3268, %v3275
    %v3278 = vunpack.c.l.s4 1934713408
    %v3279 = vunpack.c.0.s8 %v3278
    %v3280 = vlaneseq
    %v3281 = vshrl.u32 %v3280, 7
    %v3282 = vsub.s32 %v3279, %v3281
    %v3283 = vrot.slane %v3269, %v3282
    %v3284 = vcombine.low %v3228, %v3244
    %v3285 = vcombine.high %v3228, %v3244
    %v3287 = vunpack.c.l.s4 1934713408
    %v3288 = vunpack.c.0.s8 %v3287
    %v3289 = vlaneseq
    %v3290 = vshrl.u32 %v3289, 7
    %v3291 = vsub.s32 %v3288, %v3290
    %v3292 = vrot.slane %v3284, %v3291
    %v3294 = vunpack.c.l.s4 1934713408
    %v3295 = vunpack.c.0.s8 %v3294
    %v3296 = vlaneseq
    %v3297 = vshrl.u32 %v3296, 7
    %v3298 = vsub.s32 %v3295, %v3297
    %v3299 = vrot.slane %v3285, %v3298
    %v3300 = vcombine.low %v3235, %v3251
    %v3301 = vcombine.high %v3235, %v3251
    %v3303 = vunpack.c.l.s4 1934713408
    %v3304 = vunpack.c.0.s8 %v3303
    %v3305 = vlaneseq
    %v3306 = vshrl.u32 %v3305, 7
    %v3307 = vsub.s32 %v3304, %v3306
    %v3308 = vrot.slane %v3300, %v3307
    %v3310 = vunpack.c.l.s4 1934713408
    %v3311 = vunpack.c.0.s8 %v3310
    %v3312 = vlaneseq
    %v3313 = vshrl.u32 %v3312, 7
    %v3314 = vsub.s32 %v3311, %v3313
    %v3315 = vrot.slane %v3301, %v3314
    %v3316 = vcombine.low %v3260, %v3292
    %v3317 = vcombine.high %v3260, %v3292
    %v3318 = vcombine.low %v3267, %v3299
    %v3319 = vcombine.high %v3267, %v3299
    %v3320 = vcombine.low %v3276, %v3308
    %v3321 = vcombine.high %v3276, %v3308
    %v3322 = vcombine.low %v3283, %v3315
    %v3323 = vcombine.high %v3283, %v3315
    %3326 = vrot.lane.b32.xlu0 %v304, 120
    %v3327 = vpop.permute.xlu0 %3326
    %3328 = vrot.lane.b32.xlu0 %v307, 120
    %v3329 = vpop.permute.xlu0 %3328
    %3332 = vrot.lane.b32.xlu0 %v304, 112
    %v3333 = vpop.permute.xlu0 %3332
    %3334 = vrot.lane.b32.xlu0 %v307, 112
    %v3335 = vpop.permute.xlu0 %3334
    %3338 = vrot.lane.b32.xlu0 %v304, 104
    %v3339 = vpop.permute.xlu0 %3338
    %3340 = vrot.lane.b32.xlu0 %v307, 104
    %v3341 = vpop.permute.xlu0 %3340
    %3344 = vrot.lane.b32.xlu0 %v304, 96
    %v3345 = vpop.permute.xlu0 %3344
    %3346 = vrot.lane.b32.xlu0 %v307, 96
    %v3347 = vpop.permute.xlu0 %3346
    %3350 = vrot.lane.b32.xlu0 %v304, 88
    %v3351 = vpop.permute.xlu0 %3350
    %3352 = vrot.lane.b32.xlu0 %v307, 88
    %v3353 = vpop.permute.xlu0 %3352
    %3356 = vrot.lane.b32.xlu0 %v304, 80
    %v3357 = vpop.permute.xlu0 %3356
    %3358 = vrot.lane.b32.xlu0 %v307, 80
    %v3359 = vpop.permute.xlu0 %3358
    %3362 = vrot.lane.b32.xlu0 %v304, 72
    %v3363 = vpop.permute.xlu0 %3362
    %3364 = vrot.lane.b32.xlu0 %v307, 72
    %v3365 = vpop.permute.xlu0 %3364
    %v3368 = vcombine.low %v304, %v3333
    %v3369 = vcombine.high %v304, %v3333
    %v3371 = vunpack.c.l.s4 1983009808
    %v3372 = vunpack.c.0.s8 %v3371
    %v3373 = vlaneseq
    %v3374 = vshrl.u32 %v3373, 7
    %v3375 = vsub.s32 %v3372, %v3374
    %v3376 = vrot.slane %v3368, %v3375
    %v3378 = vunpack.c.l.s4 1983009808
    %v3379 = vunpack.c.0.s8 %v3378
    %v3380 = vlaneseq
    %v3381 = vshrl.u32 %v3380, 7
    %v3382 = vsub.s32 %v3379, %v3381
    %v3383 = vrot.slane %v3369, %v3382
    %v3384 = vcombine.low %v3327, %v3339
    %v3385 = vcombine.high %v3327, %v3339
    %v3387 = vunpack.c.l.s4 1983009808
    %v3388 = vunpack.c.0.s8 %v3387
    %v3389 = vlaneseq
    %v3390 = vshrl.u32 %v3389, 7
    %v3391 = vsub.s32 %v3388, %v3390
    %v3392 = vrot.slane %v3384, %v3391
    %v3394 = vunpack.c.l.s4 1983009808
    %v3395 = vunpack.c.0.s8 %v3394
    %v3396 = vlaneseq
    %v3397 = vshrl.u32 %v3396, 7
    %v3398 = vsub.s32 %v3395, %v3397
    %v3399 = vrot.slane %v3385, %v3398
    %v3400 = vcombine.low %v3345, %v3357
    %v3401 = vcombine.high %v3345, %v3357
    %v3403 = vunpack.c.l.s4 1983009808
    %v3404 = vunpack.c.0.s8 %v3403
    %v3405 = vlaneseq
    %v3406 = vshrl.u32 %v3405, 7
    %v3407 = vsub.s32 %v3404, %v3406
    %v3408 = vrot.slane %v3400, %v3407
    %v3410 = vunpack.c.l.s4 1983009808
    %v3411 = vunpack.c.0.s8 %v3410
    %v3412 = vlaneseq
    %v3413 = vshrl.u32 %v3412, 7
    %v3414 = vsub.s32 %v3411, %v3413
    %v3415 = vrot.slane %v3401, %v3414
    %v3416 = vcombine.low %v3351, %v3363
    %v3417 = vcombine.high %v3351, %v3363
    %v3419 = vunpack.c.l.s4 1983009808
    %v3420 = vunpack.c.0.s8 %v3419
    %v3421 = vlaneseq
    %v3422 = vshrl.u32 %v3421, 7
    %v3423 = vsub.s32 %v3420, %v3422
    %v3424 = vrot.slane %v3416, %v3423
    %v3426 = vunpack.c.l.s4 1983009808
    %v3427 = vunpack.c.0.s8 %v3426
    %v3428 = vlaneseq
    %v3429 = vshrl.u32 %v3428, 7
    %v3430 = vsub.s32 %v3427, %v3429
    %v3431 = vrot.slane %v3417, %v3430
    %v3432 = vcombine.low %v3376, %v3392
    %v3433 = vcombine.high %v3376, %v3392
    %v3435 = vunpack.c.l.s4 1934713408
    %v3436 = vunpack.c.0.s8 %v3435
    %v3437 = vlaneseq
    %v3438 = vshrl.u32 %v3437, 7
    %v3439 = vsub.s32 %v3436, %v3438
    %v3440 = vrot.slane %v3432, %v3439
    %v3442 = vunpack.c.l.s4 1934713408
    %v3443 = vunpack.c.0.s8 %v3442
    %v3444 = vlaneseq
    %v3445 = vshrl.u32 %v3444, 7
    %v3446 = vsub.s32 %v3443, %v3445
    %v3447 = vrot.slane %v3433, %v3446
    %v3448 = vcombine.low %v3383, %v3399
    %v3449 = vcombine.high %v3383, %v3399
    %v3451 = vunpack.c.l.s4 1934713408
    %v3452 = vunpack.c.0.s8 %v3451
    %v3453 = vlaneseq
    %v3454 = vshrl.u32 %v3453, 7
    %v3455 = vsub.s32 %v3452, %v3454
    %v3456 = vrot.slane %v3448, %v3455
    %v3458 = vunpack.c.l.s4 1934713408
    %v3459 = vunpack.c.0.s8 %v3458
    %v3460 = vlaneseq
    %v3461 = vshrl.u32 %v3460, 7
    %v3462 = vsub.s32 %v3459, %v3461
    %v3463 = vrot.slane %v3449, %v3462
    %v3464 = vcombine.low %v3408, %v3424
    %v3465 = vcombine.high %v3408, %v3424
    %v3467 = vunpack.c.l.s4 1934713408
    %v3468 = vunpack.c.0.s8 %v3467
    %v3469 = vlaneseq
    %v3470 = vshrl.u32 %v3469, 7
    %v3471 = vsub.s32 %v3468, %v3470
    %v3472 = vrot.slane %v3464, %v3471
    %v3474 = vunpack.c.l.s4 1934713408
    %v3475 = vunpack.c.0.s8 %v3474
    %v3476 = vlaneseq
    %v3477 = vshrl.u32 %v3476, 7
    %v3478 = vsub.s32 %v3475, %v3477
    %v3479 = vrot.slane %v3465, %v3478
    %v3480 = vcombine.low %v3415, %v3431
    %v3481 = vcombine.high %v3415, %v3431
    %v3483 = vunpack.c.l.s4 1934713408
    %v3484 = vunpack.c.0.s8 %v3483
    %v3485 = vlaneseq
    %v3486 = vshrl.u32 %v3485, 7
    %v3487 = vsub.s32 %v3484, %v3486
    %v3488 = vrot.slane %v3480, %v3487
    %v3490 = vunpack.c.l.s4 1934713408
    %v3491 = vunpack.c.0.s8 %v3490
    %v3492 = vlaneseq
    %v3493 = vshrl.u32 %v3492, 7
    %v3494 = vsub.s32 %v3491, %v3493
    %v3495 = vrot.slane %v3481, %v3494
    %v3496 = vcombine.low %v3440, %v3472
    %v3497 = vcombine.high %v3440, %v3472
    %v3498 = vcombine.low %v3447, %v3479
    %v3499 = vcombine.high %v3447, %v3479
    %v3500 = vcombine.low %v3456, %v3488
    %v3501 = vcombine.high %v3456, %v3488
    %v3502 = vcombine.low %v3463, %v3495
    %v3503 = vcombine.high %v3463, %v3495
    %v3504 = vcombine.low %v307, %v3335
    %v3505 = vcombine.high %v307, %v3335
    %v3507 = vunpack.c.l.s4 1983009808
    %v3508 = vunpack.c.0.s8 %v3507
    %v3509 = vlaneseq
    %v3510 = vshrl.u32 %v3509, 7
    %v3511 = vsub.s32 %v3508, %v3510
    %v3512 = vrot.slane %v3504, %v3511
    %v3514 = vunpack.c.l.s4 1983009808
    %v3515 = vunpack.c.0.s8 %v3514
    %v3516 = vlaneseq
    %v3517 = vshrl.u32 %v3516, 7
    %v3518 = vsub.s32 %v3515, %v3517
    %v3519 = vrot.slane %v3505, %v3518
    %v3520 = vcombine.low %v3329, %v3341
    %v3521 = vcombine.high %v3329, %v3341
    %v3523 = vunpack.c.l.s4 1983009808
    %v3524 = vunpack.c.0.s8 %v3523
    %v3525 = vlaneseq
    %v3526 = vshrl.u32 %v3525, 7
    %v3527 = vsub.s32 %v3524, %v3526
    %v3528 = vrot.slane %v3520, %v3527
    %v3530 = vunpack.c.l.s4 1983009808
    %v3531 = vunpack.c.0.s8 %v3530
    %v3532 = vlaneseq
    %v3533 = vshrl.u32 %v3532, 7
    %v3534 = vsub.s32 %v3531, %v3533
    %v3535 = vrot.slane %v3521, %v3534
    %v3536 = vcombine.low %v3347, %v3359
    %v3537 = vcombine.high %v3347, %v3359
    %v3539 = vunpack.c.l.s4 1983009808
    %v3540 = vunpack.c.0.s8 %v3539
    %v3541 = vlaneseq
    %v3542 = vshrl.u32 %v3541, 7
    %v3543 = vsub.s32 %v3540, %v3542
    %v3544 = vrot.slane %v3536, %v3543
    %v3546 = vunpack.c.l.s4 1983009808
    %v3547 = vunpack.c.0.s8 %v3546
    %v3548 = vlaneseq
    %v3549 = vshrl.u32 %v3548, 7
    %v3550 = vsub.s32 %v3547, %v3549
    %v3551 = vrot.slane %v3537, %v3550
    %v3552 = vcombine.low %v3353, %v3365
    %v3553 = vcombine.high %v3353, %v3365
    %v3555 = vunpack.c.l.s4 1983009808
    %v3556 = vunpack.c.0.s8 %v3555
    %v3557 = vlaneseq
    %v3558 = vshrl.u32 %v3557, 7
    %v3559 = vsub.s32 %v3556, %v3558
    %v3560 = vrot.slane %v3552, %v3559
    %v3562 = vunpack.c.l.s4 1983009808
    %v3563 = vunpack.c.0.s8 %v3562
    %v3564 = vlaneseq
    %v3565 = vshrl.u32 %v3564, 7
    %v3566 = vsub.s32 %v3563, %v3565
    %v3567 = vrot.slane %v3553, %v3566
    %v3568 = vcombine.low %v3512, %v3528
    %v3569 = vcombine.high %v3512, %v3528
    %v3571 = vunpack.c.l.s4 1934713408
    %v3572 = vunpack.c.0.s8 %v3571
    %v3573 = vlaneseq
    %v3574 = vshrl.u32 %v3573, 7
    %v3575 = vsub.s32 %v3572, %v3574
    %v3576 = vrot.slane %v3568, %v3575
    %v3578 = vunpack.c.l.s4 1934713408
    %v3579 = vunpack.c.0.s8 %v3578
    %v3580 = vlaneseq
    %v3581 = vshrl.u32 %v3580, 7
    %v3582 = vsub.s32 %v3579, %v3581
    %v3583 = vrot.slane %v3569, %v3582
    %v3584 = vcombine.low %v3519, %v3535
    %v3585 = vcombine.high %v3519, %v3535
    %v3587 = vunpack.c.l.s4 1934713408
    %v3588 = vunpack.c.0.s8 %v3587
    %v3589 = vlaneseq
    %v3590 = vshrl.u32 %v3589, 7
    %v3591 = vsub.s32 %v3588, %v3590
    %v3592 = vrot.slane %v3584, %v3591
    %v3594 = vunpack.c.l.s4 1934713408
    %v3595 = vunpack.c.0.s8 %v3594
    %v3596 = vlaneseq
    %v3597 = vshrl.u32 %v3596, 7
    %v3598 = vsub.s32 %v3595, %v3597
    %v3599 = vrot.slane %v3585, %v3598
    %v3600 = vcombine.low %v3544, %v3560
    %v3601 = vcombine.high %v3544, %v3560
    %v3603 = vunpack.c.l.s4 1934713408
    %v3604 = vunpack.c.0.s8 %v3603
    %v3605 = vlaneseq
    %v3606 = vshrl.u32 %v3605, 7
    %v3607 = vsub.s32 %v3604, %v3606
    %v3608 = vrot.slane %v3600, %v3607
    %v3610 = vunpack.c.l.s4 1934713408
    %v3611 = vunpack.c.0.s8 %v3610
    %v3612 = vlaneseq
    %v3613 = vshrl.u32 %v3612, 7
    %v3614 = vsub.s32 %v3611, %v3613
    %v3615 = vrot.slane %v3601, %v3614
    %v3616 = vcombine.low %v3551, %v3567
    %v3617 = vcombine.high %v3551, %v3567
    %v3619 = vunpack.c.l.s4 1934713408
    %v3620 = vunpack.c.0.s8 %v3619
    %v3621 = vlaneseq
    %v3622 = vshrl.u32 %v3621, 7
    %v3623 = vsub.s32 %v3620, %v3622
    %v3624 = vrot.slane %v3616, %v3623
    %v3626 = vunpack.c.l.s4 1934713408
    %v3627 = vunpack.c.0.s8 %v3626
    %v3628 = vlaneseq
    %v3629 = vshrl.u32 %v3628, 7
    %v3630 = vsub.s32 %v3627, %v3629
    %v3631 = vrot.slane %v3617, %v3630
    %v3632 = vcombine.low %v3576, %v3608
    %v3633 = vcombine.high %v3576, %v3608
    %v3634 = vcombine.low %v3583, %v3615
    %v3635 = vcombine.high %v3583, %v3615
    %v3636 = vcombine.low %v3592, %v3624
    %v3637 = vcombine.high %v3592, %v3624
    %v3638 = vcombine.low %v3599, %v3631
    %v3639 = vcombine.high %v3599, %v3631
    %v3640 = vcombine.low %v3496, %v3498
    %v3641 = vcombine.high %v3496, %v3498
    %v3643 = vunpack.c.l.s4 1983009808
    %v3644 = vunpack.c.0.s8 %v3643
    %v3645 = vlaneseq
    %v3646 = vshrl.u32 %v3645, 7
    %v3647 = vsub.s32 %v3644, %v3646
    %v3648 = vrot.slane %v3640, %v3647
    %v3650 = vunpack.c.l.s4 1983009808
    %v3651 = vunpack.c.0.s8 %v3650
    %v3652 = vlaneseq
    %v3653 = vshrl.u32 %v3652, 7
    %v3654 = vsub.s32 %v3651, %v3653
    %v3655 = vrot.slane %v3641, %v3654
    %v3656 = vcombine.low %v3497, %v3499
    %v3657 = vcombine.high %v3497, %v3499
    %v3659 = vunpack.c.l.s4 1983009808
    %v3660 = vunpack.c.0.s8 %v3659
    %v3661 = vlaneseq
    %v3662 = vshrl.u32 %v3661, 7
    %v3663 = vsub.s32 %v3660, %v3662
    %v3664 = vrot.slane %v3656, %v3663
    %v3666 = vunpack.c.l.s4 1983009808
    %v3667 = vunpack.c.0.s8 %v3666
    %v3668 = vlaneseq
    %v3669 = vshrl.u32 %v3668, 7
    %v3670 = vsub.s32 %v3667, %v3669
    %v3671 = vrot.slane %v3657, %v3670
    %v3672 = vcombine.low %v3500, %v3502
    %v3673 = vcombine.high %v3500, %v3502
    %v3675 = vunpack.c.l.s4 1983009808
    %v3676 = vunpack.c.0.s8 %v3675
    %v3677 = vlaneseq
    %v3678 = vshrl.u32 %v3677, 7
    %v3679 = vsub.s32 %v3676, %v3678
    %v3680 = vrot.slane %v3672, %v3679
    %v3682 = vunpack.c.l.s4 1983009808
    %v3683 = vunpack.c.0.s8 %v3682
    %v3684 = vlaneseq
    %v3685 = vshrl.u32 %v3684, 7
    %v3686 = vsub.s32 %v3683, %v3685
    %v3687 = vrot.slane %v3673, %v3686
    %v3688 = vcombine.low %v3501, %v3503
    %v3689 = vcombine.high %v3501, %v3503
    %v3691 = vunpack.c.l.s4 1983009808
    %v3692 = vunpack.c.0.s8 %v3691
    %v3693 = vlaneseq
    %v3694 = vshrl.u32 %v3693, 7
    %v3695 = vsub.s32 %v3692, %v3694
    %v3696 = vrot.slane %v3688, %v3695
    %v3698 = vunpack.c.l.s4 1983009808
    %v3699 = vunpack.c.0.s8 %v3698
    %v3700 = vlaneseq
    %v3701 = vshrl.u32 %v3700, 7
    %v3702 = vsub.s32 %v3699, %v3701
    %v3703 = vrot.slane %v3689, %v3702
    %v3704 = vcombine.low %v3648, %v3664
    %v3705 = vcombine.high %v3648, %v3664
    %v3707 = vunpack.c.l.s4 1934713408
    %v3708 = vunpack.c.0.s8 %v3707
    %v3709 = vlaneseq
    %v3710 = vshrl.u32 %v3709, 7
    %v3711 = vsub.s32 %v3708, %v3710
    %v3712 = vrot.slane %v3704, %v3711
    %v3714 = vunpack.c.l.s4 1934713408
    %v3715 = vunpack.c.0.s8 %v3714
    %v3716 = vlaneseq
    %v3717 = vshrl.u32 %v3716, 7
    %v3718 = vsub.s32 %v3715, %v3717
    %v3719 = vrot.slane %v3705, %v3718
    %v3720 = vcombine.low %v3655, %v3671
    %v3721 = vcombine.high %v3655, %v3671
    %v3723 = vunpack.c.l.s4 1934713408
    %v3724 = vunpack.c.0.s8 %v3723
    %v3725 = vlaneseq
    %v3726 = vshrl.u32 %v3725, 7
    %v3727 = vsub.s32 %v3724, %v3726
    %v3728 = vrot.slane %v3720, %v3727
    %v3730 = vunpack.c.l.s4 1934713408
    %v3731 = vunpack.c.0.s8 %v3730
    %v3732 = vlaneseq
    %v3733 = vshrl.u32 %v3732, 7
    %v3734 = vsub.s32 %v3731, %v3733
    %v3735 = vrot.slane %v3721, %v3734
    %v3736 = vcombine.low %v3680, %v3696
    %v3737 = vcombine.high %v3680, %v3696
    %v3739 = vunpack.c.l.s4 1934713408
    %v3740 = vunpack.c.0.s8 %v3739
    %v3741 = vlaneseq
    %v3742 = vshrl.u32 %v3741, 7
    %v3743 = vsub.s32 %v3740, %v3742
    %v3744 = vrot.slane %v3736, %v3743
    %v3746 = vunpack.c.l.s4 1934713408
    %v3747 = vunpack.c.0.s8 %v3746
    %v3748 = vlaneseq
    %v3749 = vshrl.u32 %v3748, 7
    %v3750 = vsub.s32 %v3747, %v3749
    %v3751 = vrot.slane %v3737, %v3750
    %v3752 = vcombine.low %v3687, %v3703
    %v3753 = vcombine.high %v3687, %v3703
    %v3755 = vunpack.c.l.s4 1934713408
    %v3756 = vunpack.c.0.s8 %v3755
    %v3757 = vlaneseq
    %v3758 = vshrl.u32 %v3757, 7
    %v3759 = vsub.s32 %v3756, %v3758
    %v3760 = vrot.slane %v3752, %v3759
    %v3762 = vunpack.c.l.s4 1934713408
    %v3763 = vunpack.c.0.s8 %v3762
    %v3764 = vlaneseq
    %v3765 = vshrl.u32 %v3764, 7
    %v3766 = vsub.s32 %v3763, %v3765
    %v3767 = vrot.slane %v3753, %v3766
    %v3768 = vcombine.low %v3712, %v3744
    %v3769 = vcombine.high %v3712, %v3744
    %v3770 = vcombine.low %v3719, %v3751
    %v3771 = vcombine.high %v3719, %v3751
    %v3772 = vcombine.low %v3728, %v3760
    %v3773 = vcombine.high %v3728, %v3760
    %v3774 = vcombine.low %v3735, %v3767
    %v3775 = vcombine.high %v3735, %v3767
    %v3776 = vcombine.low %v3632, %v3634
    %v3777 = vcombine.high %v3632, %v3634
    %v3779 = vunpack.c.l.s4 1983009808
    %v3780 = vunpack.c.0.s8 %v3779
    %v3781 = vlaneseq
    %v3782 = vshrl.u32 %v3781, 7
    %v3783 = vsub.s32 %v3780, %v3782
    %v3784 = vrot.slane %v3776, %v3783
    %v3786 = vunpack.c.l.s4 1983009808
    %v3787 = vunpack.c.0.s8 %v3786
    %v3788 = vlaneseq
    %v3789 = vshrl.u32 %v3788, 7
    %v3790 = vsub.s32 %v3787, %v3789
    %v3791 = vrot.slane %v3777, %v3790
    %v3792 = vcombine.low %v3633, %v3635
    %v3793 = vcombine.high %v3633, %v3635
    %v3795 = vunpack.c.l.s4 1983009808
    %v3796 = vunpack.c.0.s8 %v3795
    %v3797 = vlaneseq
    %v3798 = vshrl.u32 %v3797, 7
    %v3799 = vsub.s32 %v3796, %v3798
    %v3800 = vrot.slane %v3792, %v3799
    %v3802 = vunpack.c.l.s4 1983009808
    %v3803 = vunpack.c.0.s8 %v3802
    %v3804 = vlaneseq
    %v3805 = vshrl.u32 %v3804, 7
    %v3806 = vsub.s32 %v3803, %v3805
    %v3807 = vrot.slane %v3793, %v3806
    %v3808 = vcombine.low %v3636, %v3638
    %v3809 = vcombine.high %v3636, %v3638
    %v3811 = vunpack.c.l.s4 1983009808
    %v3812 = vunpack.c.0.s8 %v3811
    %v3813 = vlaneseq
    %v3814 = vshrl.u32 %v3813, 7
    %v3815 = vsub.s32 %v3812, %v3814
    %v3816 = vrot.slane %v3808, %v3815
    %v3818 = vunpack.c.l.s4 1983009808
    %v3819 = vunpack.c.0.s8 %v3818
    %v3820 = vlaneseq
    %v3821 = vshrl.u32 %v3820, 7
    %v3822 = vsub.s32 %v3819, %v3821
    %v3823 = vrot.slane %v3809, %v3822
    %v3824 = vcombine.low %v3637, %v3639
    %v3825 = vcombine.high %v3637, %v3639
    %v3827 = vunpack.c.l.s4 1983009808
    %v3828 = vunpack.c.0.s8 %v3827
    %v3829 = vlaneseq
    %v3830 = vshrl.u32 %v3829, 7
    %v3831 = vsub.s32 %v3828, %v3830
    %v3832 = vrot.slane %v3824, %v3831
    %v3834 = vunpack.c.l.s4 1983009808
    %v3835 = vunpack.c.0.s8 %v3834
    %v3836 = vlaneseq
    %v3837 = vshrl.u32 %v3836, 7
    %v3838 = vsub.s32 %v3835, %v3837
    %v3839 = vrot.slane %v3825, %v3838
    %v3840 = vcombine.low %v3784, %v3800
    %v3841 = vcombine.high %v3784, %v3800
    %v3843 = vunpack.c.l.s4 1934713408
    %v3844 = vunpack.c.0.s8 %v3843
    %v3845 = vlaneseq
    %v3846 = vshrl.u32 %v3845, 7
    %v3847 = vsub.s32 %v3844, %v3846
    %v3848 = vrot.slane %v3840, %v3847
    %v3850 = vunpack.c.l.s4 1934713408
    %v3851 = vunpack.c.0.s8 %v3850
    %v3852 = vlaneseq
    %v3853 = vshrl.u32 %v3852, 7
    %v3854 = vsub.s32 %v3851, %v3853
    %v3855 = vrot.slane %v3841, %v3854
    %v3856 = vcombine.low %v3791, %v3807
    %v3857 = vcombine.high %v3791, %v3807
    %v3859 = vunpack.c.l.s4 1934713408
    %v3860 = vunpack.c.0.s8 %v3859
    %v3861 = vlaneseq
    %v3862 = vshrl.u32 %v3861, 7
    %v3863 = vsub.s32 %v3860, %v3862
    %v3864 = vrot.slane %v3856, %v3863
    %v3866 = vunpack.c.l.s4 1934713408
    %v3867 = vunpack.c.0.s8 %v3866
    %v3868 = vlaneseq
    %v3869 = vshrl.u32 %v3868, 7
    %v3870 = vsub.s32 %v3867, %v3869
    %v3871 = vrot.slane %v3857, %v3870
    %v3872 = vcombine.low %v3816, %v3832
    %v3873 = vcombine.high %v3816, %v3832
    %v3875 = vunpack.c.l.s4 1934713408
    %v3876 = vunpack.c.0.s8 %v3875
    %v3877 = vlaneseq
    %v3878 = vshrl.u32 %v3877, 7
    %v3879 = vsub.s32 %v3876, %v3878
    %v3880 = vrot.slane %v3872, %v3879
    %v3882 = vunpack.c.l.s4 1934713408
    %v3883 = vunpack.c.0.s8 %v3882
    %v3884 = vlaneseq
    %v3885 = vshrl.u32 %v3884, 7
    %v3886 = vsub.s32 %v3883, %v3885
    %v3887 = vrot.slane %v3873, %v3886
    %v3888 = vcombine.low %v3823, %v3839
    %v3889 = vcombine.high %v3823, %v3839
    %v3891 = vunpack.c.l.s4 1934713408
    %v3892 = vunpack.c.0.s8 %v3891
    %v3893 = vlaneseq
    %v3894 = vshrl.u32 %v3893, 7
    %v3895 = vsub.s32 %v3892, %v3894
    %v3896 = vrot.slane %v3888, %v3895
    %v3898 = vunpack.c.l.s4 1934713408
    %v3899 = vunpack.c.0.s8 %v3898
    %v3900 = vlaneseq
    %v3901 = vshrl.u32 %v3900, 7
    %v3902 = vsub.s32 %v3899, %v3901
    %v3903 = vrot.slane %v3889, %v3902
    %v3904 = vcombine.low %v3848, %v3880
    %v3905 = vcombine.high %v3848, %v3880
    %v3906 = vcombine.low %v3855, %v3887
    %v3907 = vcombine.high %v3855, %v3887
    %v3908 = vcombine.low %v3864, %v3896
    %v3909 = vcombine.high %v3864, %v3896
    %v3910 = vcombine.low %v3871, %v3903
    %v3911 = vcombine.high %v3871, %v3903
    %3914 = vrot.lane.b32.xlu0 %v391, 120
    %v3915 = vpop.permute.xlu0 %3914
    %3916 = vrot.lane.b32.xlu0 %v394, 120
    %v3917 = vpop.permute.xlu0 %3916
    %3920 = vrot.lane.b32.xlu0 %v391, 112
    %v3921 = vpop.permute.xlu0 %3920
    %3922 = vrot.lane.b32.xlu0 %v394, 112
    %v3923 = vpop.permute.xlu0 %3922
    %3926 = vrot.lane.b32.xlu0 %v391, 104
    %v3927 = vpop.permute.xlu0 %3926
    %3928 = vrot.lane.b32.xlu0 %v394, 104
    %v3929 = vpop.permute.xlu0 %3928
    %3932 = vrot.lane.b32.xlu0 %v391, 96
    %v3933 = vpop.permute.xlu0 %3932
    %3934 = vrot.lane.b32.xlu0 %v394, 96
    %v3935 = vpop.permute.xlu0 %3934
    %3938 = vrot.lane.b32.xlu0 %v391, 88
    %v3939 = vpop.permute.xlu0 %3938
    %3940 = vrot.lane.b32.xlu0 %v394, 88
    %v3941 = vpop.permute.xlu0 %3940
    %3944 = vrot.lane.b32.xlu0 %v391, 80
    %v3945 = vpop.permute.xlu0 %3944
    %3946 = vrot.lane.b32.xlu0 %v394, 80
    %v3947 = vpop.permute.xlu0 %3946
    %3950 = vrot.lane.b32.xlu0 %v391, 72
    %v3951 = vpop.permute.xlu0 %3950
    %3952 = vrot.lane.b32.xlu0 %v394, 72
    %v3953 = vpop.permute.xlu0 %3952
    %v3956 = vcombine.low %v391, %v3921
    %v3957 = vcombine.high %v391, %v3921
    %v3959 = vunpack.c.l.s4 1983009808
    %v3960 = vunpack.c.0.s8 %v3959
    %v3961 = vlaneseq
    %v3962 = vshrl.u32 %v3961, 7
    %v3963 = vsub.s32 %v3960, %v3962
    %v3964 = vrot.slane %v3956, %v3963
    %v3966 = vunpack.c.l.s4 1983009808
    %v3967 = vunpack.c.0.s8 %v3966
    %v3968 = vlaneseq
    %v3969 = vshrl.u32 %v3968, 7
    %v3970 = vsub.s32 %v3967, %v3969
    %v3971 = vrot.slane %v3957, %v3970
    %v3972 = vcombine.low %v3915, %v3927
    %v3973 = vcombine.high %v3915, %v3927
    %v3975 = vunpack.c.l.s4 1983009808
    %v3976 = vunpack.c.0.s8 %v3975
    %v3977 = vlaneseq
    %v3978 = vshrl.u32 %v3977, 7
    %v3979 = vsub.s32 %v3976, %v3978
    %v3980 = vrot.slane %v3972, %v3979
    %v3982 = vunpack.c.l.s4 1983009808
    %v3983 = vunpack.c.0.s8 %v3982
    %v3984 = vlaneseq
    %v3985 = vshrl.u32 %v3984, 7
    %v3986 = vsub.s32 %v3983, %v3985
    %v3987 = vrot.slane %v3973, %v3986
    %v3988 = vcombine.low %v3933, %v3945
    %v3989 = vcombine.high %v3933, %v3945
    %v3991 = vunpack.c.l.s4 1983009808
    %v3992 = vunpack.c.0.s8 %v3991
    %v3993 = vlaneseq
    %v3994 = vshrl.u32 %v3993, 7
    %v3995 = vsub.s32 %v3992, %v3994
    %v3996 = vrot.slane %v3988, %v3995
    %v3998 = vunpack.c.l.s4 1983009808
    %v3999 = vunpack.c.0.s8 %v3998
    %v4000 = vlaneseq
    %v4001 = vshrl.u32 %v4000, 7
    %v4002 = vsub.s32 %v3999, %v4001
    %v4003 = vrot.slane %v3989, %v4002
    %v4004 = vcombine.low %v3939, %v3951
    %v4005 = vcombine.high %v3939, %v3951
    %v4007 = vunpack.c.l.s4 1983009808
    %v4008 = vunpack.c.0.s8 %v4007
    %v4009 = vlaneseq
    %v4010 = vshrl.u32 %v4009, 7
    %v4011 = vsub.s32 %v4008, %v4010
    %v4012 = vrot.slane %v4004, %v4011
    %v4014 = vunpack.c.l.s4 1983009808
    %v4015 = vunpack.c.0.s8 %v4014
    %v4016 = vlaneseq
    %v4017 = vshrl.u32 %v4016, 7
    %v4018 = vsub.s32 %v4015, %v4017
    %v4019 = vrot.slane %v4005, %v4018
    %v4020 = vcombine.low %v3964, %v3980
    %v4021 = vcombine.high %v3964, %v3980
    %v4023 = vunpack.c.l.s4 1934713408
    %v4024 = vunpack.c.0.s8 %v4023
    %v4025 = vlaneseq
    %v4026 = vshrl.u32 %v4025, 7
    %v4027 = vsub.s32 %v4024, %v4026
    %v4028 = vrot.slane %v4020, %v4027
    %v4030 = vunpack.c.l.s4 1934713408
    %v4031 = vunpack.c.0.s8 %v4030
    %v4032 = vlaneseq
    %v4033 = vshrl.u32 %v4032, 7
    %v4034 = vsub.s32 %v4031, %v4033
    %v4035 = vrot.slane %v4021, %v4034
    %v4036 = vcombine.low %v3971, %v3987
    %v4037 = vcombine.high %v3971, %v3987
    %v4039 = vunpack.c.l.s4 1934713408
    %v4040 = vunpack.c.0.s8 %v4039
    %v4041 = vlaneseq
    %v4042 = vshrl.u32 %v4041, 7
    %v4043 = vsub.s32 %v4040, %v4042
    %v4044 = vrot.slane %v4036, %v4043
    %v4046 = vunpack.c.l.s4 1934713408
    %v4047 = vunpack.c.0.s8 %v4046
    %v4048 = vlaneseq
    %v4049 = vshrl.u32 %v4048, 7
    %v4050 = vsub.s32 %v4047, %v4049
    %v4051 = vrot.slane %v4037, %v4050
    %v4052 = vcombine.low %v3996, %v4012
    %v4053 = vcombine.high %v3996, %v4012
    %v4055 = vunpack.c.l.s4 1934713408
    %v4056 = vunpack.c.0.s8 %v4055
    %v4057 = vlaneseq
    %v4058 = vshrl.u32 %v4057, 7
    %v4059 = vsub.s32 %v4056, %v4058
    %v4060 = vrot.slane %v4052, %v4059
    %v4062 = vunpack.c.l.s4 1934713408
    %v4063 = vunpack.c.0.s8 %v4062
    %v4064 = vlaneseq
    %v4065 = vshrl.u32 %v4064, 7
    %v4066 = vsub.s32 %v4063, %v4065
    %v4067 = vrot.slane %v4053, %v4066
    %v4068 = vcombine.low %v4003, %v4019
    %v4069 = vcombine.high %v4003, %v4019
    %v4071 = vunpack.c.l.s4 1934713408
    %v4072 = vunpack.c.0.s8 %v4071
    %v4073 = vlaneseq
    %v4074 = vshrl.u32 %v4073, 7
    %v4075 = vsub.s32 %v4072, %v4074
    %v4076 = vrot.slane %v4068, %v4075
    %v4078 = vunpack.c.l.s4 1934713408
    %v4079 = vunpack.c.0.s8 %v4078
    %v4080 = vlaneseq
    %v4081 = vshrl.u32 %v4080, 7
    %v4082 = vsub.s32 %v4079, %v4081
    %v4083 = vrot.slane %v4069, %v4082
    %v4084 = vcombine.low %v4028, %v4060
    %v4085 = vcombine.high %v4028, %v4060
    %v4086 = vcombine.low %v4035, %v4067
    %v4087 = vcombine.high %v4035, %v4067
    %v4088 = vcombine.low %v4044, %v4076
    %v4089 = vcombine.high %v4044, %v4076
    %v4090 = vcombine.low %v4051, %v4083
    %v4091 = vcombine.high %v4051, %v4083
    %v4092 = vcombine.low %v394, %v3923
    %v4093 = vcombine.high %v394, %v3923
    %v4095 = vunpack.c.l.s4 1983009808
    %v4096 = vunpack.c.0.s8 %v4095
    %v4097 = vlaneseq
    %v4098 = vshrl.u32 %v4097, 7
    %v4099 = vsub.s32 %v4096, %v4098
    %v4100 = vrot.slane %v4092, %v4099
    %v4102 = vunpack.c.l.s4 1983009808
    %v4103 = vunpack.c.0.s8 %v4102
    %v4104 = vlaneseq
    %v4105 = vshrl.u32 %v4104, 7
    %v4106 = vsub.s32 %v4103, %v4105
    %v4107 = vrot.slane %v4093, %v4106
    %v4108 = vcombine.low %v3917, %v3929
    %v4109 = vcombine.high %v3917, %v3929
    %v4111 = vunpack.c.l.s4 1983009808
    %v4112 = vunpack.c.0.s8 %v4111
    %v4113 = vlaneseq
    %v4114 = vshrl.u32 %v4113, 7
    %v4115 = vsub.s32 %v4112, %v4114
    %v4116 = vrot.slane %v4108, %v4115
    %v4118 = vunpack.c.l.s4 1983009808
    %v4119 = vunpack.c.0.s8 %v4118
    %v4120 = vlaneseq
    %v4121 = vshrl.u32 %v4120, 7
    %v4122 = vsub.s32 %v4119, %v4121
    %v4123 = vrot.slane %v4109, %v4122
    %v4124 = vcombine.low %v3935, %v3947
    %v4125 = vcombine.high %v3935, %v3947
    %v4127 = vunpack.c.l.s4 1983009808
    %v4128 = vunpack.c.0.s8 %v4127
    %v4129 = vlaneseq
    %v4130 = vshrl.u32 %v4129, 7
    %v4131 = vsub.s32 %v4128, %v4130
    %v4132 = vrot.slane %v4124, %v4131
    %v4134 = vunpack.c.l.s4 1983009808
    %v4135 = vunpack.c.0.s8 %v4134
    %v4136 = vlaneseq
    %v4137 = vshrl.u32 %v4136, 7
    %v4138 = vsub.s32 %v4135, %v4137
    %v4139 = vrot.slane %v4125, %v4138
    %v4140 = vcombine.low %v3941, %v3953
    %v4141 = vcombine.high %v3941, %v3953
    %v4143 = vunpack.c.l.s4 1983009808
    %v4144 = vunpack.c.0.s8 %v4143
    %v4145 = vlaneseq
    %v4146 = vshrl.u32 %v4145, 7
    %v4147 = vsub.s32 %v4144, %v4146
    %v4148 = vrot.slane %v4140, %v4147
    %v4150 = vunpack.c.l.s4 1983009808
    %v4151 = vunpack.c.0.s8 %v4150
    %v4152 = vlaneseq
    %v4153 = vshrl.u32 %v4152, 7
    %v4154 = vsub.s32 %v4151, %v4153
    %v4155 = vrot.slane %v4141, %v4154
    %v4156 = vcombine.low %v4100, %v4116
    %v4157 = vcombine.high %v4100, %v4116
    %v4159 = vunpack.c.l.s4 1934713408
    %v4160 = vunpack.c.0.s8 %v4159
    %v4161 = vlaneseq
    %v4162 = vshrl.u32 %v4161, 7
    %v4163 = vsub.s32 %v4160, %v4162
    %v4164 = vrot.slane %v4156, %v4163
    %v4166 = vunpack.c.l.s4 1934713408
    %v4167 = vunpack.c.0.s8 %v4166
    %v4168 = vlaneseq
    %v4169 = vshrl.u32 %v4168, 7
    %v4170 = vsub.s32 %v4167, %v4169
    %v4171 = vrot.slane %v4157, %v4170
    %v4172 = vcombine.low %v4107, %v4123
    %v4173 = vcombine.high %v4107, %v4123
    %v4175 = vunpack.c.l.s4 1934713408
    %v4176 = vunpack.c.0.s8 %v4175
    %v4177 = vlaneseq
    %v4178 = vshrl.u32 %v4177, 7
    %v4179 = vsub.s32 %v4176, %v4178
    %v4180 = vrot.slane %v4172, %v4179
    %v4182 = vunpack.c.l.s4 1934713408
    %v4183 = vunpack.c.0.s8 %v4182
    %v4184 = vlaneseq
    %v4185 = vshrl.u32 %v4184, 7
    %v4186 = vsub.s32 %v4183, %v4185
    %v4187 = vrot.slane %v4173, %v4186
    %v4188 = vcombine.low %v4132, %v4148
    %v4189 = vcombine.high %v4132, %v4148
    %v4191 = vunpack.c.l.s4 1934713408
    %v4192 = vunpack.c.0.s8 %v4191
    %v4193 = vlaneseq
    %v4194 = vshrl.u32 %v4193, 7
    %v4195 = vsub.s32 %v4192, %v4194
    %v4196 = vrot.slane %v4188, %v4195
    %v4198 = vunpack.c.l.s4 1934713408
    %v4199 = vunpack.c.0.s8 %v4198
    %v4200 = vlaneseq
    %v4201 = vshrl.u32 %v4200, 7
    %v4202 = vsub.s32 %v4199, %v4201
    %v4203 = vrot.slane %v4189, %v4202
    %v4204 = vcombine.low %v4139, %v4155
    %v4205 = vcombine.high %v4139, %v4155
    %v4207 = vunpack.c.l.s4 1934713408
    %v4208 = vunpack.c.0.s8 %v4207
    %v4209 = vlaneseq
    %v4210 = vshrl.u32 %v4209, 7
    %v4211 = vsub.s32 %v4208, %v4210
    %v4212 = vrot.slane %v4204, %v4211
    %v4214 = vunpack.c.l.s4 1934713408
    %v4215 = vunpack.c.0.s8 %v4214
    %v4216 = vlaneseq
    %v4217 = vshrl.u32 %v4216, 7
    %v4218 = vsub.s32 %v4215, %v4217
    %v4219 = vrot.slane %v4205, %v4218
    %v4220 = vcombine.low %v4164, %v4196
    %v4221 = vcombine.high %v4164, %v4196
    %v4222 = vcombine.low %v4171, %v4203
    %v4223 = vcombine.high %v4171, %v4203
    %v4224 = vcombine.low %v4180, %v4212
    %v4225 = vcombine.high %v4180, %v4212
    %v4226 = vcombine.low %v4187, %v4219
    %v4227 = vcombine.high %v4187, %v4219
    %v4228 = vcombine.low %v4084, %v4086
    %v4229 = vcombine.high %v4084, %v4086
    %v4231 = vunpack.c.l.s4 1983009808
    %v4232 = vunpack.c.0.s8 %v4231
    %v4233 = vlaneseq
    %v4234 = vshrl.u32 %v4233, 7
    %v4235 = vsub.s32 %v4232, %v4234
    %v4236 = vrot.slane %v4228, %v4235
    %v4238 = vunpack.c.l.s4 1983009808
    %v4239 = vunpack.c.0.s8 %v4238
    %v4240 = vlaneseq
    %v4241 = vshrl.u32 %v4240, 7
    %v4242 = vsub.s32 %v4239, %v4241
    %v4243 = vrot.slane %v4229, %v4242
    %v4244 = vcombine.low %v4085, %v4087
    %v4245 = vcombine.high %v4085, %v4087
    %v4247 = vunpack.c.l.s4 1983009808
    %v4248 = vunpack.c.0.s8 %v4247
    %v4249 = vlaneseq
    %v4250 = vshrl.u32 %v4249, 7
    %v4251 = vsub.s32 %v4248, %v4250
    %v4252 = vrot.slane %v4244, %v4251
    %v4254 = vunpack.c.l.s4 1983009808
    %v4255 = vunpack.c.0.s8 %v4254
    %v4256 = vlaneseq
    %v4257 = vshrl.u32 %v4256, 7
    %v4258 = vsub.s32 %v4255, %v4257
    %v4259 = vrot.slane %v4245, %v4258
    %v4260 = vcombine.low %v4088, %v4090
    %v4261 = vcombine.high %v4088, %v4090
    %v4263 = vunpack.c.l.s4 1983009808
    %v4264 = vunpack.c.0.s8 %v4263
    %v4265 = vlaneseq
    %v4266 = vshrl.u32 %v4265, 7
    %v4267 = vsub.s32 %v4264, %v4266
    %v4268 = vrot.slane %v4260, %v4267
    %v4270 = vunpack.c.l.s4 1983009808
    %v4271 = vunpack.c.0.s8 %v4270
    %v4272 = vlaneseq
    %v4273 = vshrl.u32 %v4272, 7
    %v4274 = vsub.s32 %v4271, %v4273
    %v4275 = vrot.slane %v4261, %v4274
    %v4276 = vcombine.low %v4089, %v4091
    %v4277 = vcombine.high %v4089, %v4091
    %v4279 = vunpack.c.l.s4 1983009808
    %v4280 = vunpack.c.0.s8 %v4279
    %v4281 = vlaneseq
    %v4282 = vshrl.u32 %v4281, 7
    %v4283 = vsub.s32 %v4280, %v4282
    %v4284 = vrot.slane %v4276, %v4283
    %v4286 = vunpack.c.l.s4 1983009808
    %v4287 = vunpack.c.0.s8 %v4286
    %v4288 = vlaneseq
    %v4289 = vshrl.u32 %v4288, 7
    %v4290 = vsub.s32 %v4287, %v4289
    %v4291 = vrot.slane %v4277, %v4290
    %v4292 = vcombine.low %v4236, %v4252
    %v4293 = vcombine.high %v4236, %v4252
    %v4295 = vunpack.c.l.s4 1934713408
    %v4296 = vunpack.c.0.s8 %v4295
    %v4297 = vlaneseq
    %v4298 = vshrl.u32 %v4297, 7
    %v4299 = vsub.s32 %v4296, %v4298
    %v4300 = vrot.slane %v4292, %v4299
    %v4302 = vunpack.c.l.s4 1934713408
    %v4303 = vunpack.c.0.s8 %v4302
    %v4304 = vlaneseq
    %v4305 = vshrl.u32 %v4304, 7
    %v4306 = vsub.s32 %v4303, %v4305
    %v4307 = vrot.slane %v4293, %v4306
    %v4308 = vcombine.low %v4243, %v4259
    %v4309 = vcombine.high %v4243, %v4259
    %v4311 = vunpack.c.l.s4 1934713408
    %v4312 = vunpack.c.0.s8 %v4311
    %v4313 = vlaneseq
    %v4314 = vshrl.u32 %v4313, 7
    %v4315 = vsub.s32 %v4312, %v4314
    %v4316 = vrot.slane %v4308, %v4315
    %v4318 = vunpack.c.l.s4 1934713408
    %v4319 = vunpack.c.0.s8 %v4318
    %v4320 = vlaneseq
    %v4321 = vshrl.u32 %v4320, 7
    %v4322 = vsub.s32 %v4319, %v4321
    %v4323 = vrot.slane %v4309, %v4322
    %v4324 = vcombine.low %v4268, %v4284
    %v4325 = vcombine.high %v4268, %v4284
    %v4327 = vunpack.c.l.s4 1934713408
    %v4328 = vunpack.c.0.s8 %v4327
    %v4329 = vlaneseq
    %v4330 = vshrl.u32 %v4329, 7
    %v4331 = vsub.s32 %v4328, %v4330
    %v4332 = vrot.slane %v4324, %v4331
    %v4334 = vunpack.c.l.s4 1934713408
    %v4335 = vunpack.c.0.s8 %v4334
    %v4336 = vlaneseq
    %v4337 = vshrl.u32 %v4336, 7
    %v4338 = vsub.s32 %v4335, %v4337
    %v4339 = vrot.slane %v4325, %v4338
    %v4340 = vcombine.low %v4275, %v4291
    %v4341 = vcombine.high %v4275, %v4291
    %v4343 = vunpack.c.l.s4 1934713408
    %v4344 = vunpack.c.0.s8 %v4343
    %v4345 = vlaneseq
    %v4346 = vshrl.u32 %v4345, 7
    %v4347 = vsub.s32 %v4344, %v4346
    %v4348 = vrot.slane %v4340, %v4347
    %v4350 = vunpack.c.l.s4 1934713408
    %v4351 = vunpack.c.0.s8 %v4350
    %v4352 = vlaneseq
    %v4353 = vshrl.u32 %v4352, 7
    %v4354 = vsub.s32 %v4351, %v4353
    %v4355 = vrot.slane %v4341, %v4354
    %v4356 = vcombine.low %v4300, %v4332
    %v4357 = vcombine.high %v4300, %v4332
    %v4358 = vcombine.low %v4307, %v4339
    %v4359 = vcombine.high %v4307, %v4339
    %v4360 = vcombine.low %v4316, %v4348
    %v4361 = vcombine.high %v4316, %v4348
    %v4362 = vcombine.low %v4323, %v4355
    %v4363 = vcombine.high %v4323, %v4355
    %v4364 = vcombine.low %v4220, %v4222
    %v4365 = vcombine.high %v4220, %v4222
    %v4367 = vunpack.c.l.s4 1983009808
    %v4368 = vunpack.c.0.s8 %v4367
    %v4369 = vlaneseq
    %v4370 = vshrl.u32 %v4369, 7
    %v4371 = vsub.s32 %v4368, %v4370
    %v4372 = vrot.slane %v4364, %v4371
    %v4374 = vunpack.c.l.s4 1983009808
    %v4375 = vunpack.c.0.s8 %v4374
    %v4376 = vlaneseq
    %v4377 = vshrl.u32 %v4376, 7
    %v4378 = vsub.s32 %v4375, %v4377
    %v4379 = vrot.slane %v4365, %v4378
    %v4380 = vcombine.low %v4221, %v4223
    %v4381 = vcombine.high %v4221, %v4223
    %v4383 = vunpack.c.l.s4 1983009808
    %v4384 = vunpack.c.0.s8 %v4383
    %v4385 = vlaneseq
    %v4386 = vshrl.u32 %v4385, 7
    %v4387 = vsub.s32 %v4384, %v4386
    %v4388 = vrot.slane %v4380, %v4387
    %v4390 = vunpack.c.l.s4 1983009808
    %v4391 = vunpack.c.0.s8 %v4390
    %v4392 = vlaneseq
    %v4393 = vshrl.u32 %v4392, 7
    %v4394 = vsub.s32 %v4391, %v4393
    %v4395 = vrot.slane %v4381, %v4394
    %v4396 = vcombine.low %v4224, %v4226
    %v4397 = vcombine.high %v4224, %v4226
    %v4399 = vunpack.c.l.s4 1983009808
    %v4400 = vunpack.c.0.s8 %v4399
    %v4401 = vlaneseq
    %v4402 = vshrl.u32 %v4401, 7
    %v4403 = vsub.s32 %v4400, %v4402
    %v4404 = vrot.slane %v4396, %v4403
    %v4406 = vunpack.c.l.s4 1983009808
    %v4407 = vunpack.c.0.s8 %v4406
    %v4408 = vlaneseq
    %v4409 = vshrl.u32 %v4408, 7
    %v4410 = vsub.s32 %v4407, %v4409
    %v4411 = vrot.slane %v4397, %v4410
    %v4412 = vcombine.low %v4225, %v4227
    %v4413 = vcombine.high %v4225, %v4227
    %v4415 = vunpack.c.l.s4 1983009808
    %v4416 = vunpack.c.0.s8 %v4415
    %v4417 = vlaneseq
    %v4418 = vshrl.u32 %v4417, 7
    %v4419 = vsub.s32 %v4416, %v4418
    %v4420 = vrot.slane %v4412, %v4419
    %v4422 = vunpack.c.l.s4 1983009808
    %v4423 = vunpack.c.0.s8 %v4422
    %v4424 = vlaneseq
    %v4425 = vshrl.u32 %v4424, 7
    %v4426 = vsub.s32 %v4423, %v4425
    %v4427 = vrot.slane %v4413, %v4426
    %v4428 = vcombine.low %v4372, %v4388
    %v4429 = vcombine.high %v4372, %v4388
    %v4431 = vunpack.c.l.s4 1934713408
    %v4432 = vunpack.c.0.s8 %v4431
    %v4433 = vlaneseq
    %v4434 = vshrl.u32 %v4433, 7
    %v4435 = vsub.s32 %v4432, %v4434
    %v4436 = vrot.slane %v4428, %v4435
    %v4438 = vunpack.c.l.s4 1934713408
    %v4439 = vunpack.c.0.s8 %v4438
    %v4440 = vlaneseq
    %v4441 = vshrl.u32 %v4440, 7
    %v4442 = vsub.s32 %v4439, %v4441
    %v4443 = vrot.slane %v4429, %v4442
    %v4444 = vcombine.low %v4379, %v4395
    %v4445 = vcombine.high %v4379, %v4395
    %v4447 = vunpack.c.l.s4 1934713408
    %v4448 = vunpack.c.0.s8 %v4447
    %v4449 = vlaneseq
    %v4450 = vshrl.u32 %v4449, 7
    %v4451 = vsub.s32 %v4448, %v4450
    %v4452 = vrot.slane %v4444, %v4451
    %v4454 = vunpack.c.l.s4 1934713408
    %v4455 = vunpack.c.0.s8 %v4454
    %v4456 = vlaneseq
    %v4457 = vshrl.u32 %v4456, 7
    %v4458 = vsub.s32 %v4455, %v4457
    %v4459 = vrot.slane %v4445, %v4458
    %v4460 = vcombine.low %v4404, %v4420
    %v4461 = vcombine.high %v4404, %v4420
    %v4463 = vunpack.c.l.s4 1934713408
    %v4464 = vunpack.c.0.s8 %v4463
    %v4465 = vlaneseq
    %v4466 = vshrl.u32 %v4465, 7
    %v4467 = vsub.s32 %v4464, %v4466
    %v4468 = vrot.slane %v4460, %v4467
    %v4470 = vunpack.c.l.s4 1934713408
    %v4471 = vunpack.c.0.s8 %v4470
    %v4472 = vlaneseq
    %v4473 = vshrl.u32 %v4472, 7
    %v4474 = vsub.s32 %v4471, %v4473
    %v4475 = vrot.slane %v4461, %v4474
    %v4476 = vcombine.low %v4411, %v4427
    %v4477 = vcombine.high %v4411, %v4427
    %v4479 = vunpack.c.l.s4 1934713408
    %v4480 = vunpack.c.0.s8 %v4479
    %v4481 = vlaneseq
    %v4482 = vshrl.u32 %v4481, 7
    %v4483 = vsub.s32 %v4480, %v4482
    %v4484 = vrot.slane %v4476, %v4483
    %v4486 = vunpack.c.l.s4 1934713408
    %v4487 = vunpack.c.0.s8 %v4486
    %v4488 = vlaneseq
    %v4489 = vshrl.u32 %v4488, 7
    %v4490 = vsub.s32 %v4487, %v4489
    %v4491 = vrot.slane %v4477, %v4490
    %v4492 = vcombine.low %v4436, %v4468
    %v4493 = vcombine.high %v4436, %v4468
    %v4494 = vcombine.low %v4443, %v4475
    %v4495 = vcombine.high %v4443, %v4475
    %v4496 = vcombine.low %v4452, %v4484
    %v4497 = vcombine.high %v4452, %v4484
    %v4498 = vcombine.low %v4459, %v4491
    %v4499 = vcombine.high %v4459, %v4491
    %v4500 = vpack.c.bf16 %v3316, %v3316
    %v4501 = vpack.c.bf16 %v3317, %v3317
    %v4502 = vpack.c.bf16 %v3318, %v3318
    %v4503 = vpack.c.bf16 %v3319, %v3319
    %v4504 = vpack.c.bf16 %v3320, %v3320
    %v4505 = vpack.c.bf16 %v3321, %v3321
    %v4506 = vpack.c.bf16 %v3322, %v3322
    %v4507 = vpack.c.bf16 %v3323, %v3323
    %v4508 = vpack.c.bf16 %v3904, %v3768
    %v4509 = vpack.c.bf16 %v3905, %v3769
    %v4510 = vpack.c.bf16 %v3906, %v3770
    %v4511 = vpack.c.bf16 %v3907, %v3771
    %v4512 = vpack.c.bf16 %v3908, %v3772
    %v4513 = vpack.c.bf16 %v3909, %v3773
    %v4514 = vpack.c.bf16 %v3910, %v3774
    %v4515 = vpack.c.bf16 %v3911, %v3775
    %v4517 = vsel %vm1883, %v4500, 0
    %v4520 = vsel %vm1883, %v4508, 0
    %4522 = vmatprep.subr.bf16.mxu0 0
    %4523 = vmatpush1.bf16.xpose.msra.mxu0 %v4520
    %4524 = vmatprep.subr.bf16.mxu0 0
    %4525 = vmatpush1.bf16.xpose.msra.mxu0 0
    %4526 = vmatprep.subr.bf16.mxu0 0
    %4527 = vmatpush1.bf16.xpose.msra.mxu0 0
    %4528 = vmatprep.subr.bf16.mxu0 0
    %4529 = vmatpush1.bf16.xpose.msra.mxu0 0
    %4530 = vmatprep.subr.bf16.mxu0 0
    %4531 = vmatpush1.bf16.xpose.msra.mxu0 0
    %4532 = vmatprep.subr.bf16.mxu0 0
    %4533 = vmatpush1.bf16.xpose.msra.mxu0 0
    %4534 = vmatprep.subr.bf16.mxu0 0
    %4535 = vmatpush1.bf16.xpose.msra.mxu0 0
    %4536 = vmatprep.subr.bf16.mxu0 0
    %4537 = vmatpush1.bf16.xpose.msra.mxu0 0
    %4538 = vmatprep.subr.bf16.mxu0 0
    %4539 = vmatpush1.bf16.xpose.msra.mxu0 0
    %4540 = vmatprep.subr.bf16.mxu0 0
    %4541 = vmatpush1.bf16.xpose.msra.mxu0 0
    %4542 = vmatprep.subr.bf16.mxu0 0
    %4543 = vmatpush1.bf16.xpose.msra.mxu0 0
    %4544 = vmatprep.subr.bf16.mxu0 0
    %4545 = vmatpush1.bf16.xpose.msra.mxu0 0
    %4546 = vmatprep.subr.bf16.mxu0 0
    %4547 = vmatpush1.bf16.xpose.msra.mxu0 0
    %4548 = vmatprep.subr.bf16.mxu0 0
    %4549 = vmatpush1.bf16.xpose.msra.mxu0 0
    %4550 = vmatprep.subr.bf16.mxu0 0
    %4551 = vmatpush1.bf16.xpose.msra.mxu0 0
    %4552 = vmatprep.subr.bf16.mxu0 0
    %4553 = vmatpush1.bf16.xpose.msra.mxu0 0
    %4554 = vmatprep.mubr.bf16.mxu0 0
    %4555 = vmatmul.mubr.bf16.gmra.mrb[0].mxu0 %v4517
    %v4556 = vpop.f32.mrb[0].mxu0
    %v4557 = vadd.f32 0.0, %v4556
    %v4558 = vpop.f32.mrb[0].mxu0
    %v4559 = vpop.f32.mrb[0].mxu0
    %v4560 = vpop.f32.mrb[0].mxu0
    %4561 = vdwg.mxu0
    %v4563 = vsel %vm1883, %v4501, 0
    %v4566 = vsel %vm1883, %v4509, 0
    %4568 = vmatprep.subr.bf16.mxu0 0
    %4569 = vmatpush1.bf16.xpose.msra.mxu0 %v4566
    %4570 = vmatprep.subr.bf16.mxu0 0
    %4571 = vmatpush1.bf16.xpose.msra.mxu0 0
    %4572 = vmatprep.subr.bf16.mxu0 0
    %4573 = vmatpush1.bf16.xpose.msra.mxu0 0
    %4574 = vmatprep.subr.bf16.mxu0 0
    %4575 = vmatpush1.bf16.xpose.msra.mxu0 0
    %4576 = vmatprep.subr.bf16.mxu0 0
    %4577 = vmatpush1.bf16.xpose.msra.mxu0 0
    %4578 = vmatprep.subr.bf16.mxu0 0
    %4579 = vmatpush1.bf16.xpose.msra.mxu0 0
    %4580 = vmatprep.subr.bf16.mxu0 0
    %4581 = vmatpush1.bf16.xpose.msra.mxu0 0
    %4582 = vmatprep.subr.bf16.mxu0 0
    %4583 = vmatpush1.bf16.xpose.msra.mxu0 0
    %4584 = vmatprep.subr.bf16.mxu0 0
    %4585 = vmatpush1.bf16.xpose.msra.mxu0 0
    %4586 = vmatprep.subr.bf16.mxu0 0
    %4587 = vmatpush1.bf16.xpose.msra.mxu0 0
    %4588 = vmatprep.subr.bf16.mxu0 0
    %4589 = vmatpush1.bf16.xpose.msra.mxu0 0
    %4590 = vmatprep.subr.bf16.mxu0 0
    %4591 = vmatpush1.bf16.xpose.msra.mxu0 0
    %4592 = vmatprep.subr.bf16.mxu0 0
    %4593 = vmatpush1.bf16.xpose.msra.mxu0 0
    %4594 = vmatprep.subr.bf16.mxu0 0
    %4595 = vmatpush1.bf16.xpose.msra.mxu0 0
    %4596 = vmatprep.subr.bf16.mxu0 0
    %4597 = vmatpush1.bf16.xpose.msra.mxu0 0
    %4598 = vmatprep.subr.bf16.mxu0 0
    %4599 = vmatpush1.bf16.xpose.msra.mxu0 0
    %4600 = vmatprep.mubr.bf16.mxu0 0
    %4601 = vmatmul.mubr.bf16.gmra.mrb[0].mxu0 %v4563
    %v4602 = vpop.f32.mrb[0].mxu0
    %v4603 = vadd.f32 0.0, %v4602
    %v4604 = vpop.f32.mrb[0].mxu0
    %v4605 = vpop.f32.mrb[0].mxu0
    %v4606 = vpop.f32.mrb[0].mxu0
    %4607 = vdwg.mxu0
    %v4609 = vsel %vm1883, %v4502, 0
    %v4612 = vsel %vm1883, %v4510, 0
    %4614 = vmatprep.subr.bf16.mxu0 0
    %4615 = vmatpush1.bf16.xpose.msra.mxu0 %v4612
    %4616 = vmatprep.subr.bf16.mxu0 0
    %4617 = vmatpush1.bf16.xpose.msra.mxu0 0
    %4618 = vmatprep.subr.bf16.mxu0 0
    %4619 = vmatpush1.bf16.xpose.msra.mxu0 0
    %4620 = vmatprep.subr.bf16.mxu0 0
    %4621 = vmatpush1.bf16.xpose.msra.mxu0 0
    %4622 = vmatprep.subr.bf16.mxu0 0
    %4623 = vmatpush1.bf16.xpose.msra.mxu0 0
    %4624 = vmatprep.subr.bf16.mxu0 0
    %4625 = vmatpush1.bf16.xpose.msra.mxu0 0
    %4626 = vmatprep.subr.bf16.mxu0 0
    %4627 = vmatpush1.bf16.xpose.msra.mxu0 0
    %4628 = vmatprep.subr.bf16.mxu0 0
    %4629 = vmatpush1.bf16.xpose.msra.mxu0 0
    %4630 = vmatprep.subr.bf16.mxu0 0
    %4631 = vmatpush1.bf16.xpose.msra.mxu0 0
    %4632 = vmatprep.subr.bf16.mxu0 0
    %4633 = vmatpush1.bf16.xpose.msra.mxu0 0
    %4634 = vmatprep.subr.bf16.mxu0 0
    %4635 = vmatpush1.bf16.xpose.msra.mxu0 0
    %4636 = vmatprep.subr.bf16.mxu0 0
    %4637 = vmatpush1.bf16.xpose.msra.mxu0 0
    %4638 = vmatprep.subr.bf16.mxu0 0
    %4639 = vmatpush1.bf16.xpose.msra.mxu0 0
    %4640 = vmatprep.subr.bf16.mxu0 0
    %4641 = vmatpush1.bf16.xpose.msra.mxu0 0
    %4642 = vmatprep.subr.bf16.mxu0 0
    %4643 = vmatpush1.bf16.xpose.msra.mxu0 0
    %4644 = vmatprep.subr.bf16.mxu0 0
    %4645 = vmatpush1.bf16.xpose.msra.mxu0 0
    %4646 = vmatprep.mubr.bf16.mxu0 0
    %4647 = vmatmul.mubr.bf16.gmra.mrb[0].mxu0 %v4609
    %v4648 = vpop.f32.mrb[0].mxu0
    %v4649 = vadd.f32 0.0, %v4648
    %v4650 = vpop.f32.mrb[0].mxu0
    %v4651 = vpop.f32.mrb[0].mxu0
    %v4652 = vpop.f32.mrb[0].mxu0
    %4653 = vdwg.mxu0
    %v4655 = vsel %vm1883, %v4503, 0
    %v4658 = vsel %vm1883, %v4511, 0
    %4660 = vmatprep.subr.bf16.mxu0 0
    %4661 = vmatpush1.bf16.xpose.msra.mxu0 %v4658
    %4662 = vmatprep.subr.bf16.mxu0 0
    %4663 = vmatpush1.bf16.xpose.msra.mxu0 0
    %4664 = vmatprep.subr.bf16.mxu0 0
    %4665 = vmatpush1.bf16.xpose.msra.mxu0 0
    %4666 = vmatprep.subr.bf16.mxu0 0
    %4667 = vmatpush1.bf16.xpose.msra.mxu0 0
    %4668 = vmatprep.subr.bf16.mxu0 0
    %4669 = vmatpush1.bf16.xpose.msra.mxu0 0
    %4670 = vmatprep.subr.bf16.mxu0 0
    %4671 = vmatpush1.bf16.xpose.msra.mxu0 0
    %4672 = vmatprep.subr.bf16.mxu0 0
    %4673 = vmatpush1.bf16.xpose.msra.mxu0 0
    %4674 = vmatprep.subr.bf16.mxu0 0
    %4675 = vmatpush1.bf16.xpose.msra.mxu0 0
    %4676 = vmatprep.subr.bf16.mxu0 0
    %4677 = vmatpush1.bf16.xpose.msra.mxu0 0
    %4678 = vmatprep.subr.bf16.mxu0 0
    %4679 = vmatpush1.bf16.xpose.msra.mxu0 0
    %4680 = vmatprep.subr.bf16.mxu0 0
    %4681 = vmatpush1.bf16.xpose.msra.mxu0 0
    %4682 = vmatprep.subr.bf16.mxu0 0
    %4683 = vmatpush1.bf16.xpose.msra.mxu0 0
    %4684 = vmatprep.subr.bf16.mxu0 0
    %4685 = vmatpush1.bf16.xpose.msra.mxu0 0
    %4686 = vmatprep.subr.bf16.mxu0 0
    %4687 = vmatpush1.bf16.xpose.msra.mxu0 0
    %4688 = vmatprep.subr.bf16.mxu0 0
    %4689 = vmatpush1.bf16.xpose.msra.mxu0 0
    %4690 = vmatprep.subr.bf16.mxu0 0
    %4691 = vmatpush1.bf16.xpose.msra.mxu0 0
    %4692 = vmatprep.mubr.bf16.mxu0 0
    %4693 = vmatmul.mubr.bf16.gmra.mrb[0].mxu0 %v4655
    %v4694 = vpop.f32.mrb[0].mxu0
    %v4695 = vadd.f32 0.0, %v4694
    %v4696 = vpop.f32.mrb[0].mxu0
    %v4697 = vpop.f32.mrb[0].mxu0
    %v4698 = vpop.f32.mrb[0].mxu0
    %4699 = vdwg.mxu0
    %v4701 = vsel %vm1883, %v4504, 0
    %v4704 = vsel %vm1883, %v4512, 0
    %4706 = vmatprep.subr.bf16.mxu0 0
    %4707 = vmatpush1.bf16.xpose.msra.mxu0 %v4704
    %4708 = vmatprep.subr.bf16.mxu0 0
    %4709 = vmatpush1.bf16.xpose.msra.mxu0 0
    %4710 = vmatprep.subr.bf16.mxu0 0
    %4711 = vmatpush1.bf16.xpose.msra.mxu0 0
    %4712 = vmatprep.subr.bf16.mxu0 0
    %4713 = vmatpush1.bf16.xpose.msra.mxu0 0
    %4714 = vmatprep.subr.bf16.mxu0 0
    %4715 = vmatpush1.bf16.xpose.msra.mxu0 0
    %4716 = vmatprep.subr.bf16.mxu0 0
    %4717 = vmatpush1.bf16.xpose.msra.mxu0 0
    %4718 = vmatprep.subr.bf16.mxu0 0
    %4719 = vmatpush1.bf16.xpose.msra.mxu0 0
    %4720 = vmatprep.subr.bf16.mxu0 0
    %4721 = vmatpush1.bf16.xpose.msra.mxu0 0
    %4722 = vmatprep.subr.bf16.mxu0 0
    %4723 = vmatpush1.bf16.xpose.msra.mxu0 0
    %4724 = vmatprep.subr.bf16.mxu0 0
    %4725 = vmatpush1.bf16.xpose.msra.mxu0 0
    %4726 = vmatprep.subr.bf16.mxu0 0
    %4727 = vmatpush1.bf16.xpose.msra.mxu0 0
    %4728 = vmatprep.subr.bf16.mxu0 0
    %4729 = vmatpush1.bf16.xpose.msra.mxu0 0
    %4730 = vmatprep.subr.bf16.mxu0 0
    %4731 = vmatpush1.bf16.xpose.msra.mxu0 0
    %4732 = vmatprep.subr.bf16.mxu0 0
    %4733 = vmatpush1.bf16.xpose.msra.mxu0 0
    %4734 = vmatprep.subr.bf16.mxu0 0
    %4735 = vmatpush1.bf16.xpose.msra.mxu0 0
    %4736 = vmatprep.subr.bf16.mxu0 0
    %4737 = vmatpush1.bf16.xpose.msra.mxu0 0
    %4738 = vmatprep.mubr.bf16.mxu0 0
    %4739 = vmatmul.mubr.bf16.gmra.mrb[0].mxu0 %v4701
    %v4740 = vpop.f32.mrb[0].mxu0
    %v4741 = vadd.f32 0.0, %v4740
    %v4742 = vpop.f32.mrb[0].mxu0
    %v4743 = vpop.f32.mrb[0].mxu0
    %v4744 = vpop.f32.mrb[0].mxu0
    %4745 = vdwg.mxu0
    %v4747 = vsel %vm1883, %v4505, 0
    %v4750 = vsel %vm1883, %v4513, 0
    %4752 = vmatprep.subr.bf16.mxu0 0
    %4753 = vmatpush1.bf16.xpose.msra.mxu0 %v4750
    %4754 = vmatprep.subr.bf16.mxu0 0
    %4755 = vmatpush1.bf16.xpose.msra.mxu0 0
    %4756 = vmatprep.subr.bf16.mxu0 0
    %4757 = vmatpush1.bf16.xpose.msra.mxu0 0
    %4758 = vmatprep.subr.bf16.mxu0 0
    %4759 = vmatpush1.bf16.xpose.msra.mxu0 0
    %4760 = vmatprep.subr.bf16.mxu0 0
    %4761 = vmatpush1.bf16.xpose.msra.mxu0 0
    %4762 = vmatprep.subr.bf16.mxu0 0
    %4763 = vmatpush1.bf16.xpose.msra.mxu0 0
    %4764 = vmatprep.subr.bf16.mxu0 0
    %4765 = vmatpush1.bf16.xpose.msra.mxu0 0
    %4766 = vmatprep.subr.bf16.mxu0 0
    %4767 = vmatpush1.bf16.xpose.msra.mxu0 0
    %4768 = vmatprep.subr.bf16.mxu0 0
    %4769 = vmatpush1.bf16.xpose.msra.mxu0 0
    %4770 = vmatprep.subr.bf16.mxu0 0
    %4771 = vmatpush1.bf16.xpose.msra.mxu0 0
    %4772 = vmatprep.subr.bf16.mxu0 0
    %4773 = vmatpush1.bf16.xpose.msra.mxu0 0
    %4774 = vmatprep.subr.bf16.mxu0 0
    %4775 = vmatpush1.bf16.xpose.msra.mxu0 0
    %4776 = vmatprep.subr.bf16.mxu0 0
    %4777 = vmatpush1.bf16.xpose.msra.mxu0 0
    %4778 = vmatprep.subr.bf16.mxu0 0
    %4779 = vmatpush1.bf16.xpose.msra.mxu0 0
    %4780 = vmatprep.subr.bf16.mxu0 0
    %4781 = vmatpush1.bf16.xpose.msra.mxu0 0
    %4782 = vmatprep.subr.bf16.mxu0 0
    %4783 = vmatpush1.bf16.xpose.msra.mxu0 0
    %4784 = vmatprep.mubr.bf16.mxu0 0
    %4785 = vmatmul.mubr.bf16.gmra.mrb[0].mxu0 %v4747
    %v4786 = vpop.f32.mrb[0].mxu0
    %v4787 = vadd.f32 0.0, %v4786
    %v4788 = vpop.f32.mrb[0].mxu0
    %v4789 = vpop.f32.mrb[0].mxu0
    %v4790 = vpop.f32.mrb[0].mxu0
    %4791 = vdwg.mxu0
    %v4793 = vsel %vm1883, %v4506, 0
    %v4796 = vsel %vm1883, %v4514, 0
    %4798 = vmatprep.subr.bf16.mxu0 0
    %4799 = vmatpush1.bf16.xpose.msra.mxu0 %v4796
    %4800 = vmatprep.subr.bf16.mxu0 0
    %4801 = vmatpush1.bf16.xpose.msra.mxu0 0
    %4802 = vmatprep.subr.bf16.mxu0 0
    %4803 = vmatpush1.bf16.xpose.msra.mxu0 0
    %4804 = vmatprep.subr.bf16.mxu0 0
    %4805 = vmatpush1.bf16.xpose.msra.mxu0 0
    %4806 = vmatprep.subr.bf16.mxu0 0
    %4807 = vmatpush1.bf16.xpose.msra.mxu0 0
    %4808 = vmatprep.subr.bf16.mxu0 0
    %4809 = vmatpush1.bf16.xpose.msra.mxu0 0
    %4810 = vmatprep.subr.bf16.mxu0 0
    %4811 = vmatpush1.bf16.xpose.msra.mxu0 0
    %4812 = vmatprep.subr.bf16.mxu0 0
    %4813 = vmatpush1.bf16.xpose.msra.mxu0 0
    %4814 = vmatprep.subr.bf16.mxu0 0
    %4815 = vmatpush1.bf16.xpose.msra.mxu0 0
    %4816 = vmatprep.subr.bf16.mxu0 0
    %4817 = vmatpush1.bf16.xpose.msra.mxu0 0
    %4818 = vmatprep.subr.bf16.mxu0 0
    %4819 = vmatpush1.bf16.xpose.msra.mxu0 0
    %4820 = vmatprep.subr.bf16.mxu0 0
    %4821 = vmatpush1.bf16.xpose.msra.mxu0 0
    %4822 = vmatprep.subr.bf16.mxu0 0
    %4823 = vmatpush1.bf16.xpose.msra.mxu0 0
    %4824 = vmatprep.subr.bf16.mxu0 0
    %4825 = vmatpush1.bf16.xpose.msra.mxu0 0
    %4826 = vmatprep.subr.bf16.mxu0 0
    %4827 = vmatpush1.bf16.xpose.msra.mxu0 0
    %4828 = vmatprep.subr.bf16.mxu0 0
    %4829 = vmatpush1.bf16.xpose.msra.mxu0 0
    %4830 = vmatprep.mubr.bf16.mxu0 0
    %4831 = vmatmul.mubr.bf16.gmra.mrb[0].mxu0 %v4793
    %v4832 = vpop.f32.mrb[0].mxu0
    %v4833 = vadd.f32 0.0, %v4832
    %v4834 = vpop.f32.mrb[0].mxu0
    %v4835 = vpop.f32.mrb[0].mxu0
    %v4836 = vpop.f32.mrb[0].mxu0
    %4837 = vdwg.mxu0
    %v4839 = vsel %vm1883, %v4507, 0
    %v4842 = vsel %vm1883, %v4515, 0
    %4844 = vmatprep.subr.bf16.mxu0 0
    %4845 = vmatpush1.bf16.xpose.msra.mxu0 %v4842
    %4846 = vmatprep.subr.bf16.mxu0 0
    %4847 = vmatpush1.bf16.xpose.msra.mxu0 0
    %4848 = vmatprep.subr.bf16.mxu0 0
    %4849 = vmatpush1.bf16.xpose.msra.mxu0 0
    %4850 = vmatprep.subr.bf16.mxu0 0
    %4851 = vmatpush1.bf16.xpose.msra.mxu0 0
    %4852 = vmatprep.subr.bf16.mxu0 0
    %4853 = vmatpush1.bf16.xpose.msra.mxu0 0
    %4854 = vmatprep.subr.bf16.mxu0 0
    %4855 = vmatpush1.bf16.xpose.msra.mxu0 0
    %4856 = vmatprep.subr.bf16.mxu0 0
    %4857 = vmatpush1.bf16.xpose.msra.mxu0 0
    %4858 = vmatprep.subr.bf16.mxu0 0
    %4859 = vmatpush1.bf16.xpose.msra.mxu0 0
    %4860 = vmatprep.subr.bf16.mxu0 0
    %4861 = vmatpush1.bf16.xpose.msra.mxu0 0
    %4862 = vmatprep.subr.bf16.mxu0 0
    %4863 = vmatpush1.bf16.xpose.msra.mxu0 0
    %4864 = vmatprep.subr.bf16.mxu0 0
    %4865 = vmatpush1.bf16.xpose.msra.mxu0 0
    %4866 = vmatprep.subr.bf16.mxu0 0
    %4867 = vmatpush1.bf16.xpose.msra.mxu0 0
    %4868 = vmatprep.subr.bf16.mxu0 0
    %4869 = vmatpush1.bf16.xpose.msra.mxu0 0
    %4870 = vmatprep.subr.bf16.mxu0 0
    %4871 = vmatpush1.bf16.xpose.msra.mxu0 0
    %4872 = vmatprep.subr.bf16.mxu0 0
    %4873 = vmatpush1.bf16.xpose.msra.mxu0 0
    %4874 = vmatprep.subr.bf16.mxu0 0
    %4875 = vmatpush1.bf16.xpose.msra.mxu0 0
    %4876 = vmatprep.mubr.bf16.mxu0 0
    %4877 = vmatmul.mubr.bf16.gmra.mrb[0].mxu0 %v4839
    %v4878 = vpop.f32.mrb[0].mxu0
    %v4879 = vadd.f32 0.0, %v4878
    %v4880 = vpop.f32.mrb[0].mxu0
    %v4881 = vpop.f32.mrb[0].mxu0
    %v4882 = vpop.f32.mrb[0].mxu0
    %4883 = vdwg.mxu0
    %v4884 = vsel %vm2252, %v4557, 0.0
    %v4885 = vsel %vm2252, %v4603, 0.0
    %v4886 = vadd.f32 %v4884, %v4885
    %v4887 = vsel %vm2252, %v4649, 0.0
    %v4888 = vadd.f32 %v4886, %v4887
    %v4889 = vsel %vm2252, %v4695, 0.0
    %v4890 = vadd.f32 %v4888, %v4889
    %v4891 = vsel %vm2252, %v4741, 0.0
    %v4892 = vadd.f32 %v4890, %v4891
    %v4893 = vsel %vm2252, %v4787, 0.0
    %v4894 = vadd.f32 %v4892, %v4893
    %v4895 = vsel %vm2252, %v4833, 0.0
    %v4896 = vadd.f32 %v4894, %v4895
    %v4897 = vsel %vm2252, %v4879, 0.0
    %v4898 = vadd.f32 %v4896, %v4897
    %v4899 = vmul.f32 %v4898, 0.125
    %s4900 = scalar_lea.vmem [#allocation15], 8
    %4901 = vst.msk [vmem:[%s4900] sm:$0xff] %vm2252, %v4899
    %v4902 = vsel %vm2252, %v4557, -inf
    %4903 = vmax.xlane.f32.xlu0 %v4902
    %v4904 = vpop.xlane.xlu0 %4903
    %v4905 = vsel %vm2252, %v4603, -inf
    %4906 = vmax.xlane.f32.xlu0 %v4905
    %v4907 = vpop.xlane.xlu0 %4906
    %v4908 = vsel %vm2252, %v4649, -inf
    %4909 = vmax.xlane.f32.xlu0 %v4908
    %v4910 = vpop.xlane.xlu0 %4909
    %v4911 = vsel %vm2252, %v4695, -inf
    %4912 = vmax.xlane.f32.xlu0 %v4911
    %v4913 = vpop.xlane.xlu0 %4912
    %v4914 = vsel %vm2252, %v4741, -inf
    %4915 = vmax.xlane.f32.xlu0 %v4914
    %v4916 = vpop.xlane.xlu0 %4915
    %v4917 = vsel %vm2252, %v4787, -inf
    %4918 = vmax.xlane.f32.xlu0 %v4917
    %v4919 = vpop.xlane.xlu0 %4918
    %v4920 = vsel %vm2252, %v4833, -inf
    %4921 = vmax.xlane.f32.xlu0 %v4920
    %v4922 = vpop.xlane.xlu0 %4921
    %v4923 = vsel %vm2252, %v4879, -inf
    %4924 = vmax.xlane.f32.xlu0 %v4923
    %v4925 = vpop.xlane.xlu0 %4924
    %v4926 = vsub.f32 %v4557, %v4904
    %v4927 = vsub.f32 %v4603, %v4907
    %v4928 = vsub.f32 %v4649, %v4910
    %v4929 = vsub.f32 %v4695, %v4913
    %v4930 = vsub.f32 %v4741, %v4916
    %v4931 = vsub.f32 %v4787, %v4919
    %v4932 = vsub.f32 %v4833, %v4922
    %v4933 = vsub.f32 %v4879, %v4925
    %v4934 = vmul.f32 %v4926, 1.442695
    %v4935 = vpow.pop %v4934
    %v4936 = vmul.f32 %v4927, 1.442695
    %v4937 = vpow.pop %v4936
    %v4938 = vmul.f32 %v4928, 1.442695
    %v4939 = vpow.pop %v4938
    %v4940 = vmul.f32 %v4929, 1.442695
    %v4941 = vpow.pop %v4940
    %v4942 = vmul.f32 %v4930, 1.442695
    %v4943 = vpow.pop %v4942
    %v4944 = vmul.f32 %v4931, 1.442695
    %v4945 = vpow.pop %v4944
    %v4946 = vmul.f32 %v4932, 1.442695
    %v4947 = vpow.pop %v4946
    %v4948 = vmul.f32 %v4933, 1.442695
    %v4949 = vpow.pop %v4948
    %v4950 = vsel %vm2252, %v4935, 0.0
    %4951 = vadd.xlane.f32.xlu0 %v4950
    %v4952 = vpop.xlane.xlu0 %4951
    %v4953 = vsel %vm2252, %v4937, 0.0
    %4954 = vadd.xlane.f32.xlu0 %v4953
    %v4955 = vpop.xlane.xlu0 %4954
    %v4956 = vsel %vm2252, %v4939, 0.0
    %4957 = vadd.xlane.f32.xlu0 %v4956
    %v4958 = vpop.xlane.xlu0 %4957
    %v4959 = vsel %vm2252, %v4941, 0.0
    %4960 = vadd.xlane.f32.xlu0 %v4959
    %v4961 = vpop.xlane.xlu0 %4960
    %v4962 = vsel %vm2252, %v4943, 0.0
    %4963 = vadd.xlane.f32.xlu0 %v4962
    %v4964 = vpop.xlane.xlu0 %4963
    %v4965 = vsel %vm2252, %v4945, 0.0
    %4966 = vadd.xlane.f32.xlu0 %v4965
    %v4967 = vpop.xlane.xlu0 %4966
    %v4968 = vsel %vm2252, %v4947, 0.0
    %4969 = vadd.xlane.f32.xlu0 %v4968
    %v4970 = vpop.xlane.xlu0 %4969
    %v4971 = vsel %vm2252, %v4949, 0.0
    %4972 = vadd.xlane.f32.xlu0 %v4971
    %v4973 = vpop.xlane.xlu0 %4972
    %v4974 = vrcp.pop %v4952
    %v4975 = vrcp.pop %v4955
    %v4976 = vrcp.pop %v4958
    %v4977 = vrcp.pop %v4961
    %v4978 = vrcp.pop %v4964
    %v4979 = vrcp.pop %v4967
    %v4980 = vrcp.pop %v4970
    %v4981 = vrcp.pop %v4973
    %v4982 = vmul.f32 %v4935, %v4974
    %v4983 = vmul.f32 %v4937, %v4975
    %v4984 = vmul.f32 %v4939, %v4976
    %v4985 = vmul.f32 %v4941, %v4977
    %v4986 = vmul.f32 %v4943, %v4978
    %v4987 = vmul.f32 %v4945, %v4979
    %v4988 = vmul.f32 %v4947, %v4980
    %v4989 = vmul.f32 %v4949, %v4981
    %v4990 = vpack.c.bf16 %v4982, %v4982
    %v4991 = vpack.c.bf16 %v4983, %v4983
    %v4992 = vpack.c.bf16 %v4984, %v4984
    %v4993 = vpack.c.bf16 %v4985, %v4985
    %v4994 = vpack.c.bf16 %v4986, %v4986
    %v4995 = vpack.c.bf16 %v4987, %v4987
    %v4996 = vpack.c.bf16 %v4988, %v4988
    %v4997 = vpack.c.bf16 %v4989, %v4989
    %v4998 = vpack.c.bf16 %v4492, %v4356
    %v4999 = vpack.c.bf16 %v4493, %v4357
    %v5000 = vpack.c.bf16 %v4494, %v4358
    %v5001 = vpack.c.bf16 %v4495, %v4359
    %v5002 = vpack.c.bf16 %v4496, %v4360
    %v5003 = vpack.c.bf16 %v4497, %v4361
    %v5004 = vpack.c.bf16 %v4498, %v4362
    %v5005 = vpack.c.bf16 %v4499, %v4363
    %v5007 = vsel %vm2252, %v4990, 0
    %5009 = vmatprep.subr.bf16.mxu0 0
    %5010 = vmatpush1.bf16.msra.mxu0 %v4998
    %5011 = vmatprep.subr.bf16.mxu0 0
    %5012 = vmatpush1.bf16.msra.mxu0 0
    %5013 = vmatprep.subr.bf16.mxu0 0
    %5014 = vmatpush1.bf16.msra.mxu0 0
    %5015 = vmatprep.subr.bf16.mxu0 0
    %5016 = vmatpush1.bf16.msra.mxu0 0
    %5017 = vmatprep.subr.bf16.mxu0 0
    %5018 = vmatpush1.bf16.msra.mxu0 0
    %5019 = vmatprep.subr.bf16.mxu0 0
    %5020 = vmatpush1.bf16.msra.mxu0 0
    %5021 = vmatprep.subr.bf16.mxu0 0
    %5022 = vmatpush1.bf16.msra.mxu0 0
    %5023 = vmatprep.subr.bf16.mxu0 0
    %5024 = vmatpush1.bf16.msra.mxu0 0
    %5025 = vmatprep.subr.bf16.mxu0 0
    %5026 = vmatpush1.bf16.msra.mxu0 0
    %5027 = vmatprep.subr.bf16.mxu0 0
    %5028 = vmatpush1.bf16.msra.mxu0 0
    %5029 = vmatprep.subr.bf16.mxu0 0
    %5030 = vmatpush1.bf16.msra.mxu0 0
    %5031 = vmatprep.subr.bf16.mxu0 0
    %5032 = vmatpush1.bf16.msra.mxu0 0
    %5033 = vmatprep.subr.bf16.mxu0 0
    %5034 = vmatpush1.bf16.msra.mxu0 0
    %5035 = vmatprep.subr.bf16.mxu0 0
    %5036 = vmatpush1.bf16.msra.mxu0 0
    %5037 = vmatprep.subr.bf16.mxu0 0
    %5038 = vmatpush1.bf16.msra.mxu0 0
    %5039 = vmatprep.subr.bf16.mxu0 0
    %5040 = vmatpush1.bf16.msra.mxu0 0
    %5041 = vmatprep.mubr.bf16.mxu0 0
    %5042 = vmatmul.mubr.bf16.gmra.mrb[0].mxu0 %v5007
    %v5043 = vpop.f32.mrb[0].mxu0
    %v5044 = vadd.f32 0.0, %v5043
    %v5045 = vpop.f32.mrb[0].mxu0
    %v5046 = vpop.f32.mrb[0].mxu0
    %v5047 = vpop.f32.mrb[0].mxu0
    %5048 = vdwg.mxu0
    %v5050 = vsel %vm2252, %v4991, 0
    %5052 = vmatprep.subr.bf16.mxu0 0
    %5053 = vmatpush1.bf16.msra.mxu0 %v4999
    %5054 = vmatprep.subr.bf16.mxu0 0
    %5055 = vmatpush1.bf16.msra.mxu0 0
    %5056 = vmatprep.subr.bf16.mxu0 0
    %5057 = vmatpush1.bf16.msra.mxu0 0
    %5058 = vmatprep.subr.bf16.mxu0 0
    %5059 = vmatpush1.bf16.msra.mxu0 0
    %5060 = vmatprep.subr.bf16.mxu0 0
    %5061 = vmatpush1.bf16.msra.mxu0 0
    %5062 = vmatprep.subr.bf16.mxu0 0
    %5063 = vmatpush1.bf16.msra.mxu0 0
    %5064 = vmatprep.subr.bf16.mxu0 0
    %5065 = vmatpush1.bf16.msra.mxu0 0
    %5066 = vmatprep.subr.bf16.mxu0 0
    %5067 = vmatpush1.bf16.msra.mxu0 0
    %5068 = vmatprep.subr.bf16.mxu0 0
    %5069 = vmatpush1.bf16.msra.mxu0 0
    %5070 = vmatprep.subr.bf16.mxu0 0
    %5071 = vmatpush1.bf16.msra.mxu0 0
    %5072 = vmatprep.subr.bf16.mxu0 0
    %5073 = vmatpush1.bf16.msra.mxu0 0
    %5074 = vmatprep.subr.bf16.mxu0 0
    %5075 = vmatpush1.bf16.msra.mxu0 0
    %5076 = vmatprep.subr.bf16.mxu0 0
    %5077 = vmatpush1.bf16.msra.mxu0 0
    %5078 = vmatprep.subr.bf16.mxu0 0
    %5079 = vmatpush1.bf16.msra.mxu0 0
    %5080 = vmatprep.subr.bf16.mxu0 0
    %5081 = vmatpush1.bf16.msra.mxu0 0
    %5082 = vmatprep.subr.bf16.mxu0 0
    %5083 = vmatpush1.bf16.msra.mxu0 0
    %5084 = vmatprep.mubr.bf16.mxu0 0
    %5085 = vmatmul.mubr.bf16.gmra.mrb[0].mxu0 %v5050
    %v5086 = vpop.f32.mrb[0].mxu0
    %v5087 = vadd.f32 0.0, %v5086
    %v5088 = vpop.f32.mrb[0].mxu0
    %v5089 = vpop.f32.mrb[0].mxu0
    %v5090 = vpop.f32.mrb[0].mxu0
    %5091 = vdwg.mxu0
    %v5093 = vsel %vm2252, %v4992, 0
    %5095 = vmatprep.subr.bf16.mxu0 0
    %5096 = vmatpush1.bf16.msra.mxu0 %v5000
    %5097 = vmatprep.subr.bf16.mxu0 0
    %5098 = vmatpush1.bf16.msra.mxu0 0
    %5099 = vmatprep.subr.bf16.mxu0 0
    %5100 = vmatpush1.bf16.msra.mxu0 0
    %5101 = vmatprep.subr.bf16.mxu0 0
    %5102 = vmatpush1.bf16.msra.mxu0 0
    %5103 = vmatprep.subr.bf16.mxu0 0
    %5104 = vmatpush1.bf16.msra.mxu0 0
    %5105 = vmatprep.subr.bf16.mxu0 0
    %5106 = vmatpush1.bf16.msra.mxu0 0
    %5107 = vmatprep.subr.bf16.mxu0 0
    %5108 = vmatpush1.bf16.msra.mxu0 0
    %5109 = vmatprep.subr.bf16.mxu0 0
    %5110 = vmatpush1.bf16.msra.mxu0 0
    %5111 = vmatprep.subr.bf16.mxu0 0
    %5112 = vmatpush1.bf16.msra.mxu0 0
    %5113 = vmatprep.subr.bf16.mxu0 0
    %5114 = vmatpush1.bf16.msra.mxu0 0
    %5115 = vmatprep.subr.bf16.mxu0 0
    %5116 = vmatpush1.bf16.msra.mxu0 0
    %5117 = vmatprep.subr.bf16.mxu0 0
    %5118 = vmatpush1.bf16.msra.mxu0 0
    %5119 = vmatprep.subr.bf16.mxu0 0
    %5120 = vmatpush1.bf16.msra.mxu0 0
    %5121 = vmatprep.subr.bf16.mxu0 0
    %5122 = vmatpush1.bf16.msra.mxu0 0
    %5123 = vmatprep.subr.bf16.mxu0 0
    %5124 = vmatpush1.bf16.msra.mxu0 0
    %5125 = vmatprep.subr.bf16.mxu0 0
    %5126 = vmatpush1.bf16.msra.mxu0 0
    %5127 = vmatprep.mubr.bf16.mxu0 0
    %5128 = vmatmul.mubr.bf16.gmra.mrb[0].mxu0 %v5093
    %v5129 = vpop.f32.mrb[0].mxu0
    %v5130 = vadd.f32 0.0, %v5129
    %v5131 = vpop.f32.mrb[0].mxu0
    %v5132 = vpop.f32.mrb[0].mxu0
    %v5133 = vpop.f32.mrb[0].mxu0
    %5134 = vdwg.mxu0
    %v5136 = vsel %vm2252, %v4993, 0
    %5138 = vmatprep.subr.bf16.mxu0 0
    %5139 = vmatpush1.bf16.msra.mxu0 %v5001
    %5140 = vmatprep.subr.bf16.mxu0 0
    %5141 = vmatpush1.bf16.msra.mxu0 0
    %5142 = vmatprep.subr.bf16.mxu0 0
    %5143 = vmatpush1.bf16.msra.mxu0 0
    %5144 = vmatprep.subr.bf16.mxu0 0
    %5145 = vmatpush1.bf16.msra.mxu0 0
    %5146 = vmatprep.subr.bf16.mxu0 0
    %5147 = vmatpush1.bf16.msra.mxu0 0
    %5148 = vmatprep.subr.bf16.mxu0 0
    %5149 = vmatpush1.bf16.msra.mxu0 0
    %5150 = vmatprep.subr.bf16.mxu0 0
    %5151 = vmatpush1.bf16.msra.mxu0 0
    %5152 = vmatprep.subr.bf16.mxu0 0
    %5153 = vmatpush1.bf16.msra.mxu0 0
    %5154 = vmatprep.subr.bf16.mxu0 0
    %5155 = vmatpush1.bf16.msra.mxu0 0
    %5156 = vmatprep.subr.bf16.mxu0 0
    %5157 = vmatpush1.bf16.msra.mxu0 0
    %5158 = vmatprep.subr.bf16.mxu0 0
    %5159 = vmatpush1.bf16.msra.mxu0 0
    %5160 = vmatprep.subr.bf16.mxu0 0
    %5161 = vmatpush1.bf16.msra.mxu0 0
    %5162 = vmatprep.subr.bf16.mxu0 0
    %5163 = vmatpush1.bf16.msra.mxu0 0
    %5164 = vmatprep.subr.bf16.mxu0 0
    %5165 = vmatpush1.bf16.msra.mxu0 0
    %5166 = vmatprep.subr.bf16.mxu0 0
    %5167 = vmatpush1.bf16.msra.mxu0 0
    %5168 = vmatprep.subr.bf16.mxu0 0
    %5169 = vmatpush1.bf16.msra.mxu0 0
    %5170 = vmatprep.mubr.bf16.mxu0 0
    %5171 = vmatmul.mubr.bf16.gmra.mrb[0].mxu0 %v5136
    %v5172 = vpop.f32.mrb[0].mxu0
    %v5173 = vadd.f32 0.0, %v5172
    %v5174 = vpop.f32.mrb[0].mxu0
    %v5175 = vpop.f32.mrb[0].mxu0
    %v5176 = vpop.f32.mrb[0].mxu0
    %5177 = vdwg.mxu0
    %v5179 = vsel %vm2252, %v4994, 0
    %5181 = vmatprep.subr.bf16.mxu0 0
    %5182 = vmatpush1.bf16.msra.mxu0 %v5002
    %5183 = vmatprep.subr.bf16.mxu0 0
    %5184 = vmatpush1.bf16.msra.mxu0 0
    %5185 = vmatprep.subr.bf16.mxu0 0
    %5186 = vmatpush1.bf16.msra.mxu0 0
    %5187 = vmatprep.subr.bf16.mxu0 0
    %5188 = vmatpush1.bf16.msra.mxu0 0
    %5189 = vmatprep.subr.bf16.mxu0 0
    %5190 = vmatpush1.bf16.msra.mxu0 0
    %5191 = vmatprep.subr.bf16.mxu0 0
    %5192 = vmatpush1.bf16.msra.mxu0 0
    %5193 = vmatprep.subr.bf16.mxu0 0
    %5194 = vmatpush1.bf16.msra.mxu0 0
    %5195 = vmatprep.subr.bf16.mxu0 0
    %5196 = vmatpush1.bf16.msra.mxu0 0
    %5197 = vmatprep.subr.bf16.mxu0 0
    %5198 = vmatpush1.bf16.msra.mxu0 0
    %5199 = vmatprep.subr.bf16.mxu0 0
    %5200 = vmatpush1.bf16.msra.mxu0 0
    %5201 = vmatprep.subr.bf16.mxu0 0
    %5202 = vmatpush1.bf16.msra.mxu0 0
    %5203 = vmatprep.subr.bf16.mxu0 0
    %5204 = vmatpush1.bf16.msra.mxu0 0
    %5205 = vmatprep.subr.bf16.mxu0 0
    %5206 = vmatpush1.bf16.msra.mxu0 0
    %5207 = vmatprep.subr.bf16.mxu0 0
    %5208 = vmatpush1.bf16.msra.mxu0 0
    %5209 = vmatprep.subr.bf16.mxu0 0
    %5210 = vmatpush1.bf16.msra.mxu0 0
    %5211 = vmatprep.subr.bf16.mxu0 0
    %5212 = vmatpush1.bf16.msra.mxu0 0
    %5213 = vmatprep.mubr.bf16.mxu0 0
    %5214 = vmatmul.mubr.bf16.gmra.mrb[0].mxu0 %v5179
    %v5215 = vpop.f32.mrb[0].mxu0
    %v5216 = vadd.f32 0.0, %v5215
    %v5217 = vpop.f32.mrb[0].mxu0
    %v5218 = vpop.f32.mrb[0].mxu0
    %v5219 = vpop.f32.mrb[0].mxu0
    %5220 = vdwg.mxu0
    %v5222 = vsel %vm2252, %v4995, 0
    %5224 = vmatprep.subr.bf16.mxu0 0
    %5225 = vmatpush1.bf16.msra.mxu0 %v5003
    %5226 = vmatprep.subr.bf16.mxu0 0
    %5227 = vmatpush1.bf16.msra.mxu0 0
    %5228 = vmatprep.subr.bf16.mxu0 0
    %5229 = vmatpush1.bf16.msra.mxu0 0
    %5230 = vmatprep.subr.bf16.mxu0 0
    %5231 = vmatpush1.bf16.msra.mxu0 0
    %5232 = vmatprep.subr.bf16.mxu0 0
    %5233 = vmatpush1.bf16.msra.mxu0 0
    %5234 = vmatprep.subr.bf16.mxu0 0
    %5235 = vmatpush1.bf16.msra.mxu0 0
    %5236 = vmatprep.subr.bf16.mxu0 0
    %5237 = vmatpush1.bf16.msra.mxu0 0
    %5238 = vmatprep.subr.bf16.mxu0 0
    %5239 = vmatpush1.bf16.msra.mxu0 0
    %5240 = vmatprep.subr.bf16.mxu0 0
    %5241 = vmatpush1.bf16.msra.mxu0 0
    %5242 = vmatprep.subr.bf16.mxu0 0
    %5243 = vmatpush1.bf16.msra.mxu0 0
    %5244 = vmatprep.subr.bf16.mxu0 0
    %5245 = vmatpush1.bf16.msra.mxu0 0
    %5246 = vmatprep.subr.bf16.mxu0 0
    %5247 = vmatpush1.bf16.msra.mxu0 0
    %5248 = vmatprep.subr.bf16.mxu0 0
    %5249 = vmatpush1.bf16.msra.mxu0 0
    %5250 = vmatprep.subr.bf16.mxu0 0
    %5251 = vmatpush1.bf16.msra.mxu0 0
    %5252 = vmatprep.subr.bf16.mxu0 0
    %5253 = vmatpush1.bf16.msra.mxu0 0
    %5254 = vmatprep.subr.bf16.mxu0 0
    %5255 = vmatpush1.bf16.msra.mxu0 0
    %5256 = vmatprep.mubr.bf16.mxu0 0
    %5257 = vmatmul.mubr.bf16.gmra.mrb[0].mxu0 %v5222
    %v5258 = vpop.f32.mrb[0].mxu0
    %v5259 = vadd.f32 0.0, %v5258
    %v5260 = vpop.f32.mrb[0].mxu0
    %v5261 = vpop.f32.mrb[0].mxu0
    %v5262 = vpop.f32.mrb[0].mxu0
    %5263 = vdwg.mxu0
    %v5265 = vsel %vm2252, %v4996, 0
    %5267 = vmatprep.subr.bf16.mxu0 0
    %5268 = vmatpush1.bf16.msra.mxu0 %v5004
    %5269 = vmatprep.subr.bf16.mxu0 0
    %5270 = vmatpush1.bf16.msra.mxu0 0
    %5271 = vmatprep.subr.bf16.mxu0 0
    %5272 = vmatpush1.bf16.msra.mxu0 0
    %5273 = vmatprep.subr.bf16.mxu0 0
    %5274 = vmatpush1.bf16.msra.mxu0 0
    %5275 = vmatprep.subr.bf16.mxu0 0
    %5276 = vmatpush1.bf16.msra.mxu0 0
    %5277 = vmatprep.subr.bf16.mxu0 0
    %5278 = vmatpush1.bf16.msra.mxu0 0
    %5279 = vmatprep.subr.bf16.mxu0 0
    %5280 = vmatpush1.bf16.msra.mxu0 0
    %5281 = vmatprep.subr.bf16.mxu0 0
    %5282 = vmatpush1.bf16.msra.mxu0 0
    %5283 = vmatprep.subr.bf16.mxu0 0
    %5284 = vmatpush1.bf16.msra.mxu0 0
    %5285 = vmatprep.subr.bf16.mxu0 0
    %5286 = vmatpush1.bf16.msra.mxu0 0
    %5287 = vmatprep.subr.bf16.mxu0 0
    %5288 = vmatpush1.bf16.msra.mxu0 0
    %5289 = vmatprep.subr.bf16.mxu0 0
    %5290 = vmatpush1.bf16.msra.mxu0 0
    %5291 = vmatprep.subr.bf16.mxu0 0
    %5292 = vmatpush1.bf16.msra.mxu0 0
    %5293 = vmatprep.subr.bf16.mxu0 0
    %5294 = vmatpush1.bf16.msra.mxu0 0
    %5295 = vmatprep.subr.bf16.mxu0 0
    %5296 = vmatpush1.bf16.msra.mxu0 0
    %5297 = vmatprep.subr.bf16.mxu0 0
    %5298 = vmatpush1.bf16.msra.mxu0 0
    %5299 = vmatprep.mubr.bf16.mxu0 0
    %5300 = vmatmul.mubr.bf16.gmra.mrb[0].mxu0 %v5265
    %v5301 = vpop.f32.mrb[0].mxu0
    %v5302 = vadd.f32 0.0, %v5301
    %v5303 = vpop.f32.mrb[0].mxu0
    %v5304 = vpop.f32.mrb[0].mxu0
    %v5305 = vpop.f32.mrb[0].mxu0
    %5306 = vdwg.mxu0
    %v5308 = vsel %vm2252, %v4997, 0
    %5310 = vmatprep.subr.bf16.mxu0 0
    %5311 = vmatpush1.bf16.msra.mxu0 %v5005
    %5312 = vmatprep.subr.bf16.mxu0 0
    %5313 = vmatpush1.bf16.msra.mxu0 0
    %5314 = vmatprep.subr.bf16.mxu0 0
    %5315 = vmatpush1.bf16.msra.mxu0 0
    %5316 = vmatprep.subr.bf16.mxu0 0
    %5317 = vmatpush1.bf16.msra.mxu0 0
    %5318 = vmatprep.subr.bf16.mxu0 0
    %5319 = vmatpush1.bf16.msra.mxu0 0
    %5320 = vmatprep.subr.bf16.mxu0 0
    %5321 = vmatpush1.bf16.msra.mxu0 0
    %5322 = vmatprep.subr.bf16.mxu0 0
    %5323 = vmatpush1.bf16.msra.mxu0 0
    %5324 = vmatprep.subr.bf16.mxu0 0
    %5325 = vmatpush1.bf16.msra.mxu0 0
    %5326 = vmatprep.subr.bf16.mxu0 0
    %5327 = vmatpush1.bf16.msra.mxu0 0
    %5328 = vmatprep.subr.bf16.mxu0 0
    %5329 = vmatpush1.bf16.msra.mxu0 0
    %5330 = vmatprep.subr.bf16.mxu0 0
    %5331 = vmatpush1.bf16.msra.mxu0 0
    %5332 = vmatprep.subr.bf16.mxu0 0
    %5333 = vmatpush1.bf16.msra.mxu0 0
    %5334 = vmatprep.subr.bf16.mxu0 0
    %5335 = vmatpush1.bf16.msra.mxu0 0
    %5336 = vmatprep.subr.bf16.mxu0 0
    %5337 = vmatpush1.bf16.msra.mxu0 0
    %5338 = vmatprep.subr.bf16.mxu0 0
    %5339 = vmatpush1.bf16.msra.mxu0 0
    %5340 = vmatprep.subr.bf16.mxu0 0
    %5341 = vmatpush1.bf16.msra.mxu0 0
    %5342 = vmatprep.mubr.bf16.mxu0 0
    %5343 = vmatmul.mubr.bf16.gmra.mrb[0].mxu0 %v5308
    %v5344 = vpop.f32.mrb[0].mxu0
    %v5345 = vadd.f32 0.0, %v5344
    %v5346 = vpop.f32.mrb[0].mxu0
    %v5347 = vpop.f32.mrb[0].mxu0
    %v5348 = vpop.f32.mrb[0].mxu0
    %5349 = vdwg.mxu0
    %v5350 = vcombine.low %v5044, %v5130
    %v5351 = vcombine.high %v5044, %v5130
    %v5353 = vunpack.c.l.s4 1983009808
    %v5354 = vunpack.c.0.s8 %v5353
    %v5355 = vlaneseq
    %v5356 = vshrl.u32 %v5355, 7
    %v5357 = vsub.s32 %v5354, %v5356
    %v5358 = vrot.slane %v5350, %v5357
    %v5360 = vunpack.c.l.s4 1983009808
    %v5361 = vunpack.c.0.s8 %v5360
    %v5362 = vlaneseq
    %v5363 = vshrl.u32 %v5362, 7
    %v5364 = vsub.s32 %v5361, %v5363
    %v5365 = vrot.slane %v5351, %v5364
    %v5366 = vcombine.low %v5087, %v5173
    %v5367 = vcombine.high %v5087, %v5173
    %v5369 = vunpack.c.l.s4 1983009808
    %v5370 = vunpack.c.0.s8 %v5369
    %v5371 = vlaneseq
    %v5372 = vshrl.u32 %v5371, 7
    %v5373 = vsub.s32 %v5370, %v5372
    %v5374 = vrot.slane %v5366, %v5373
    %v5376 = vunpack.c.l.s4 1983009808
    %v5377 = vunpack.c.0.s8 %v5376
    %v5378 = vlaneseq
    %v5379 = vshrl.u32 %v5378, 7
    %v5380 = vsub.s32 %v5377, %v5379
    %v5381 = vrot.slane %v5367, %v5380
    %v5382 = vcombine.low %v5216, %v5302
    %v5383 = vcombine.high %v5216, %v5302
    %v5385 = vunpack.c.l.s4 1983009808
    %v5386 = vunpack.c.0.s8 %v5385
    %v5387 = vlaneseq
    %v5388 = vshrl.u32 %v5387, 7
    %v5389 = vsub.s32 %v5386, %v5388
    %v5390 = vrot.slane %v5382, %v5389
    %v5392 = vunpack.c.l.s4 1983009808
    %v5393 = vunpack.c.0.s8 %v5392
    %v5394 = vlaneseq
    %v5395 = vshrl.u32 %v5394, 7
    %v5396 = vsub.s32 %v5393, %v5395
    %v5397 = vrot.slane %v5383, %v5396
    %v5398 = vcombine.low %v5259, %v5345
    %v5399 = vcombine.high %v5259, %v5345
    %v5401 = vunpack.c.l.s4 1983009808
    %v5402 = vunpack.c.0.s8 %v5401
    %v5403 = vlaneseq
    %v5404 = vshrl.u32 %v5403, 7
    %v5405 = vsub.s32 %v5402, %v5404
    %v5406 = vrot.slane %v5398, %v5405
    %v5408 = vunpack.c.l.s4 1983009808
    %v5409 = vunpack.c.0.s8 %v5408
    %v5410 = vlaneseq
    %v5411 = vshrl.u32 %v5410, 7
    %v5412 = vsub.s32 %v5409, %v5411
    %v5413 = vrot.slane %v5399, %v5412
    %v5414 = vcombine.low %v5358, %v5374
    %v5415 = vcombine.high %v5358, %v5374
    %v5417 = vunpack.c.l.s4 1934713408
    %v5418 = vunpack.c.0.s8 %v5417
    %v5419 = vlaneseq
    %v5420 = vshrl.u32 %v5419, 7
    %v5421 = vsub.s32 %v5418, %v5420
    %v5422 = vrot.slane %v5414, %v5421
    %v5424 = vunpack.c.l.s4 1934713408
    %v5425 = vunpack.c.0.s8 %v5424
    %v5426 = vlaneseq
    %v5427 = vshrl.u32 %v5426, 7
    %v5428 = vsub.s32 %v5425, %v5427
    %v5429 = vrot.slane %v5415, %v5428
    %v5430 = vcombine.low %v5365, %v5381
    %v5431 = vcombine.high %v5365, %v5381
    %v5433 = vunpack.c.l.s4 1934713408
    %v5434 = vunpack.c.0.s8 %v5433
    %v5435 = vlaneseq
    %v5436 = vshrl.u32 %v5435, 7
    %v5437 = vsub.s32 %v5434, %v5436
    %v5438 = vrot.slane %v5430, %v5437
    %v5440 = vunpack.c.l.s4 1934713408
    %v5441 = vunpack.c.0.s8 %v5440
    %v5442 = vlaneseq
    %v5443 = vshrl.u32 %v5442, 7
    %v5444 = vsub.s32 %v5441, %v5443
    %v5445 = vrot.slane %v5431, %v5444
    %v5446 = vcombine.low %v5390, %v5406
    %v5447 = vcombine.high %v5390, %v5406
    %v5449 = vunpack.c.l.s4 1934713408
    %v5450 = vunpack.c.0.s8 %v5449
    %v5451 = vlaneseq
    %v5452 = vshrl.u32 %v5451, 7
    %v5453 = vsub.s32 %v5450, %v5452
    %v5454 = vrot.slane %v5446, %v5453
    %v5456 = vunpack.c.l.s4 1934713408
    %v5457 = vunpack.c.0.s8 %v5456
    %v5458 = vlaneseq
    %v5459 = vshrl.u32 %v5458, 7
    %v5460 = vsub.s32 %v5457, %v5459
    %v5461 = vrot.slane %v5447, %v5460
    %v5462 = vcombine.low %v5397, %v5413
    %v5463 = vcombine.high %v5397, %v5413
    %v5465 = vunpack.c.l.s4 1934713408
    %v5466 = vunpack.c.0.s8 %v5465
    %v5467 = vlaneseq
    %v5468 = vshrl.u32 %v5467, 7
    %v5469 = vsub.s32 %v5466, %v5468
    %v5470 = vrot.slane %v5462, %v5469
    %v5472 = vunpack.c.l.s4 1934713408
    %v5473 = vunpack.c.0.s8 %v5472
    %v5474 = vlaneseq
    %v5475 = vshrl.u32 %v5474, 7
    %v5476 = vsub.s32 %v5473, %v5475
    %v5477 = vrot.slane %v5463, %v5476
    %v5478 = vcombine.low %v5422, %v5454
    %v5479 = vcombine.high %v5422, %v5454
    %v5480 = vcombine.low %v5429, %v5461
    %v5481 = vcombine.high %v5429, %v5461
    %v5482 = vcombine.low %v5438, %v5470
    %v5483 = vcombine.high %v5438, %v5470
    %v5484 = vcombine.low %v5445, %v5477
    %v5485 = vcombine.high %v5445, %v5477
    %v5486 = vcombine.low %v5478, %v5480
    %v5487 = vcombine.high %v5478, %v5480
    %v5489 = vunpack.c.l.s4 1983009808
    %v5490 = vunpack.c.0.s8 %v5489
    %v5491 = vlaneseq
    %v5492 = vshrl.u32 %v5491, 7
    %v5493 = vsub.s32 %v5490, %v5492
    %v5494 = vrot.slane %v5486, %v5493
    %v5496 = vunpack.c.l.s4 1983009808
    %v5497 = vunpack.c.0.s8 %v5496
    %v5498 = vlaneseq
    %v5499 = vshrl.u32 %v5498, 7
    %v5500 = vsub.s32 %v5497, %v5499
    %v5501 = vrot.slane %v5487, %v5500
    %v5502 = vcombine.low %v5479, %v5481
    %v5503 = vcombine.high %v5479, %v5481
    %v5505 = vunpack.c.l.s4 1983009808
    %v5506 = vunpack.c.0.s8 %v5505
    %v5507 = vlaneseq
    %v5508 = vshrl.u32 %v5507, 7
    %v5509 = vsub.s32 %v5506, %v5508
    %v5510 = vrot.slane %v5502, %v5509
    %v5512 = vunpack.c.l.s4 1983009808
    %v5513 = vunpack.c.0.s8 %v5512
    %v5514 = vlaneseq
    %v5515 = vshrl.u32 %v5514, 7
    %v5516 = vsub.s32 %v5513, %v5515
    %v5517 = vrot.slane %v5503, %v5516
    %v5518 = vcombine.low %v5482, %v5484
    %v5519 = vcombine.high %v5482, %v5484
    %v5521 = vunpack.c.l.s4 1983009808
    %v5522 = vunpack.c.0.s8 %v5521
    %v5523 = vlaneseq
    %v5524 = vshrl.u32 %v5523, 7
    %v5525 = vsub.s32 %v5522, %v5524
    %v5526 = vrot.slane %v5518, %v5525
    %v5528 = vunpack.c.l.s4 1983009808
    %v5529 = vunpack.c.0.s8 %v5528
    %v5530 = vlaneseq
    %v5531 = vshrl.u32 %v5530, 7
    %v5532 = vsub.s32 %v5529, %v5531
    %v5533 = vrot.slane %v5519, %v5532
    %v5534 = vcombine.low %v5483, %v5485
    %v5535 = vcombine.high %v5483, %v5485
    %v5537 = vunpack.c.l.s4 1983009808
    %v5538 = vunpack.c.0.s8 %v5537
    %v5539 = vlaneseq
    %v5540 = vshrl.u32 %v5539, 7
    %v5541 = vsub.s32 %v5538, %v5540
    %v5542 = vrot.slane %v5534, %v5541
    %v5544 = vunpack.c.l.s4 1983009808
    %v5545 = vunpack.c.0.s8 %v5544
    %v5546 = vlaneseq
    %v5547 = vshrl.u32 %v5546, 7
    %v5548 = vsub.s32 %v5545, %v5547
    %v5549 = vrot.slane %v5535, %v5548
    %v5550 = vcombine.low %v5494, %v5510
    %v5551 = vcombine.high %v5494, %v5510
    %v5553 = vunpack.c.l.s4 1934713408
    %v5554 = vunpack.c.0.s8 %v5553
    %v5555 = vlaneseq
    %v5556 = vshrl.u32 %v5555, 7
    %v5557 = vsub.s32 %v5554, %v5556
    %v5558 = vrot.slane %v5550, %v5557
    %v5560 = vunpack.c.l.s4 1934713408
    %v5561 = vunpack.c.0.s8 %v5560
    %v5562 = vlaneseq
    %v5563 = vshrl.u32 %v5562, 7
    %v5564 = vsub.s32 %v5561, %v5563
    %v5565 = vrot.slane %v5551, %v5564
    %v5566 = vcombine.low %v5501, %v5517
    %v5567 = vcombine.high %v5501, %v5517
    %v5569 = vunpack.c.l.s4 1934713408
    %v5570 = vunpack.c.0.s8 %v5569
    %v5571 = vlaneseq
    %v5572 = vshrl.u32 %v5571, 7
    %v5573 = vsub.s32 %v5570, %v5572
    %v5574 = vrot.slane %v5566, %v5573
    %v5576 = vunpack.c.l.s4 1934713408
    %v5577 = vunpack.c.0.s8 %v5576
    %v5578 = vlaneseq
    %v5579 = vshrl.u32 %v5578, 7
    %v5580 = vsub.s32 %v5577, %v5579
    %v5581 = vrot.slane %v5567, %v5580
    %v5582 = vcombine.low %v5526, %v5542
    %v5583 = vcombine.high %v5526, %v5542
    %v5585 = vunpack.c.l.s4 1934713408
    %v5586 = vunpack.c.0.s8 %v5585
    %v5587 = vlaneseq
    %v5588 = vshrl.u32 %v5587, 7
    %v5589 = vsub.s32 %v5586, %v5588
    %v5590 = vrot.slane %v5582, %v5589
    %v5592 = vunpack.c.l.s4 1934713408
    %v5593 = vunpack.c.0.s8 %v5592
    %v5594 = vlaneseq
    %v5595 = vshrl.u32 %v5594, 7
    %v5596 = vsub.s32 %v5593, %v5595
    %v5597 = vrot.slane %v5583, %v5596
    %v5598 = vcombine.low %v5533, %v5549
    %v5599 = vcombine.high %v5533, %v5549
    %v5601 = vunpack.c.l.s4 1934713408
    %v5602 = vunpack.c.0.s8 %v5601
    %v5603 = vlaneseq
    %v5604 = vshrl.u32 %v5603, 7
    %v5605 = vsub.s32 %v5602, %v5604
    %v5606 = vrot.slane %v5598, %v5605
    %v5608 = vunpack.c.l.s4 1934713408
    %v5609 = vunpack.c.0.s8 %v5608
    %v5610 = vlaneseq
    %v5611 = vshrl.u32 %v5610, 7
    %v5612 = vsub.s32 %v5609, %v5611
    %v5613 = vrot.slane %v5599, %v5612
    %v5614 = vcombine.low %v5558, %v5590
    %v5615 = vcombine.high %v5558, %v5590
    %v5616 = vcombine.low %v5565, %v5597
    %v5617 = vcombine.high %v5565, %v5597
    %v5618 = vcombine.low %v5574, %v5606
    %v5619 = vcombine.high %v5574, %v5606
    %v5620 = vcombine.low %v5581, %v5613
    %v5621 = vcombine.high %v5581, %v5613
    %5623 = vrot.lane.b32.xlu0 %v5615, 8
    %v5624 = vpop.permute.xlu0 %5623
    %5627 = vrot.lane.b32.xlu0 %v5616, 16
    %v5628 = vpop.permute.xlu0 %5627
    %5631 = vrot.lane.b32.xlu0 %v5617, 24
    %v5632 = vpop.permute.xlu0 %5631
    %5635 = vrot.lane.b32.xlu0 %v5618, 32
    %v5636 = vpop.permute.xlu0 %5635
    %5639 = vrot.lane.b32.xlu0 %v5619, 40
    %v5640 = vpop.permute.xlu0 %5639
    %5643 = vrot.lane.b32.xlu0 %v5620, 48
    %v5644 = vpop.permute.xlu0 %5643
    %5647 = vrot.lane.b32.xlu0 %v5621, 56
    %v5648 = vpop.permute.xlu0 %5647
    %v5650 = vsel %vm1883, %v5614, %v5624
    %v5651 = vsel %vm2252, %v5650, %v5628
    %v5652 = vsel %vm3020, %v5651, %v5632
    %v5653 = vsel %vm3022, %v5652, %v5636
    %v5654 = vsel %vm3024, %v5653, %v5640
    %v5655 = vsel %vm3026, %v5654, %v5644
    %v5656 = vsel %vm3028, %v5655, %v5648
    %v5657 = vpack.c.bf16 %v5656, %v3029
    %v5658 = vld [vmem:[#allocation13] sm:$0xf]
    %v5659 = vld [vmem:[#allocation13 + $0x4] sm:$0xf]
    %v5660 = vld [vmem:[#allocation13 + $0x8] sm:$0xf]
    %v5661 = vld [vmem:[#allocation13 + $0xc] sm:$0xf]
    %v5662 = vld [vmem:[#allocation13 + $0x10] sm:$0xf]
    %v5663 = vld [vmem:[#allocation13 + $0x14] sm:$0xf]
    %v5664 = vld [vmem:[#allocation13 + $0x18] sm:$0xf]
    %v5665 = vld [vmem:[#allocation13 + $0x1c] sm:$0xf]
    %v5666 = vld [vmem:[%s7] sm:$0x1]
    %v5668 = vlaneseq
    %v5669 = vshrl.u32 %v5668, 7
    %v5670 = vsub.s32 0, %v5669
    %v5671 = vrot.slane %v5666, %v5670
    %v5681 = vunpack.c.l.b16 %v5658
    %v5682 = vunpack.c.l.b16 %v5659
    %v5683 = vunpack.c.l.b16 %v5660
    %v5684 = vunpack.c.l.b16 %v5661
    %v5685 = vunpack.c.l.b16 %v5662
    %v5686 = vunpack.c.l.b16 %v5663
    %v5687 = vunpack.c.l.b16 %v5664
    %v5688 = vunpack.c.l.b16 %v5665
    %v5689 = vpack.c.b16 %v5682, %v5681
    %v5690 = vpack.c.b16 %v5684, %v5683
    %v5691 = vpack.c.b16 %v5686, %v5685
    %v5692 = vpack.c.b16 %v5688, %v5687
    %v5698 = vsel %vm176, %v5657, 0
    %5700 = vmatprep.subr.bf16.mxu0 0
    %5701 = vmatpush1.bf16.msra.mxu0 %v5689
    %5702 = vmatprep.subr.bf16.mxu0 0
    %5703 = vmatpush1.bf16.msra.mxu0 %v5690
    %5704 = vmatprep.subr.bf16.mxu0 0
    %5705 = vmatpush1.bf16.msra.mxu0 %v5691
    %5706 = vmatprep.subr.bf16.mxu0 0
    %5707 = vmatpush1.bf16.msra.mxu0 %v5692
    %5708 = vmatprep.subr.bf16.mxu0 0
    %5709 = vmatpush1.bf16.msra.mxu0 0
    %5710 = vmatprep.subr.bf16.mxu0 0
    %5711 = vmatpush1.bf16.msra.mxu0 0
    %5712 = vmatprep.subr.bf16.mxu0 0
    %5713 = vmatpush1.bf16.msra.mxu0 0
    %5714 = vmatprep.subr.bf16.mxu0 0
    %5715 = vmatpush1.bf16.msra.mxu0 0
    %5716 = vmatprep.subr.bf16.mxu0 0
    %5717 = vmatpush1.bf16.msra.mxu0 0
    %5718 = vmatprep.subr.bf16.mxu0 0
    %5719 = vmatpush1.bf16.msra.mxu0 0
    %5720 = vmatprep.subr.bf16.mxu0 0
    %5721 = vmatpush1.bf16.msra.mxu0 0
    %5722 = vmatprep.subr.bf16.mxu0 0
    %5723 = vmatpush1.bf16.msra.mxu0 0
    %5724 = vmatprep.subr.bf16.mxu0 0
    %5725 = vmatpush1.bf16.msra.mxu0 0
    %5726 = vmatprep.subr.bf16.mxu0 0
    %5727 = vmatpush1.bf16.msra.mxu0 0
    %5728 = vmatprep.subr.bf16.mxu0 0
    %5729 = vmatpush1.bf16.msra.mxu0 0
    %5730 = vmatprep.subr.bf16.mxu0 0
    %5731 = vmatpush1.bf16.msra.mxu0 0
    %5732 = vmatprep.mubr.bf16.mxu0 0
    %5733 = vmatmul.mubr.bf16.gmra.mrb[0].mxu0 %v5698
    %v5734 = vpop.f32.mrb[0].mxu0
    %v5735 = vadd.f32 %v5671, %v5734
    %v5736 = vpop.f32.mrb[0].mxu0
    %v5737 = vpop.f32.mrb[0].mxu0
    %v5738 = vadd.f32 %v5671, %v5737
    %v5739 = vpop.f32.mrb[0].mxu0
    %5740 = vdwg.mxu0
    %5741 = vst.msk [vmem:[#allocation14] sm:$0xff] %vm176, %v5735
    %5742 = vst.msk [vmem:[#allocation14 + $0x8] sm:$0xff] %vm176, %v5738
    // Predicated region
    $region62: #{tpu_custom_call.1} parent=1 // pred_check
      _
    $region63: #{tpu_custom_call.1} parent=1 // pred_check_branch
      %5744 = sbr.rel (0) target = $region65
    $region64: #{tpu_custom_call.1} parent=1 // pred_region
      %s5746 = ssub.s32 256, 256
      %5747 = vsyncadd [#allocation4], %s5746
      %s5748 = sshll.u32 [#allocation14], 4
      %s5749 = int_to_ptr.vmem [resolvable:$true] %s5748
      %5754 = dma.vmem_to_hbm [thread:$0]  %s5749, 256, %s8, [#allocation4], 128, 128, 8
    $region65: #{tpu_custom_call.1} parent=1 // pred_fallthru
      _
    // Predicated region
    $region66: #{tpu_custom_call.1} parent=1 // pred_check
      _
    $region67: #{tpu_custom_call.1} parent=1 // pred_check_branch
      %5756 = sbr.rel (0) target = $region69
    $region68: #{tpu_custom_call.1} parent=1 // pred_region
      %s5758 = ssub.s32 256, 256
      %5759 = vsyncadd [#allocation16], %s5758
      %s5760 = sshll.u32 [#allocation15], 4
      %s5761 = int_to_ptr.vmem [resolvable:$true] %s5760
      %5766 = dma.vmem_to_hbm [thread:$0]  %s5761, 256, %s9, [#allocation16], 128, 128, 8
    $region69: #{tpu_custom_call.1} parent=1 // pred_fallthru
      _
    // Predicated region
    $region70: #{tpu_custom_call.1} parent=1 // pred_check
      _
    $region71: #{tpu_custom_call.1} parent=1 // pred_check_branch
      %5768 = sbr.rel (0) target = $region73
    $region72: #{tpu_custom_call.1} parent=1 // pred_region
      %5769 = dma.done [#allocation4], 256
    $region73: #{tpu_custom_call.1} parent=1 // pred_fallthru
      _
    // Predicated region
    $region74: #{tpu_custom_call.1} parent=1 // pred_check
      _
    $region75: #{tpu_custom_call.1} parent=1 // pred_check_branch
      %5771 = sbr.rel (0) target = $region77
    $region76: #{tpu_custom_call.1} parent=1 // pred_region
      %5772 = dma.done [#allocation16], 256
    $region77: #{tpu_custom_call.1} parent=1 // pred_fallthru
      _
    %5773 = vsyncpa [#allocation3], 1
    %5774 = vsyncpa [#allocation6], 1
    %5775 = vsyncpa [#allocation9], 1
    %5776 = vsyncpa [#allocation12], 1
    %5777 = vsyncpa [#allocation4], 1
    %5778 = vsyncpa [#allocation16], 1

</llo_original>
